<compile_context>
chip_gen: v6e
topology: v6e:2x2x1
jax: 0.10.0
libtpu: 0.0.40
codegen_flags: <defaults>
</compile_context>

<pallas_src>
import jax
import jax.numpy as jnp
from jax import lax
from jax.experimental import pallas as pl
from jax.experimental.pallas import tpu as pltpu


# ----------------------------- fused Pallas kernel --------------------------------


def fused_forward_kernel(xp_ref, w1_ref, t1_ref, w2_ref, t2_ref,
                         fw1_ref, fb1_ref, fw2_ref, fb2_ref, fw3_ref, fb3_ref,
                         alpha_ref, out_ref, p1_ref, act2_ref):
    """Whole Network_enhanced forward for ONE sample (one grid step = one batch element).

    xp_ref : (48, 40)      conv1 matmul LHS rows; row = 16*pool_phase + pool_row.
    w1_ref : (40, 192)     conv1 weights (W-taps + BN1 scale folded), bf16.
    t1_ref : (1, 192)      conv1 bias*BN1 scale + BN1 shift, tiled over w, f32.
    w2_ref : (5, 192, 256) conv2 weights per H-tap (W-taps + BN2 scale folded), bf16.
    t2_ref : (1, 256)      conv2 bias/BN2 shift, tiled over w, f32.
    fw1_ref: (4, 256, 512) fc1 weights, NCHW-flatten permutation folded into rows, bf16.
    fw2_ref: (512, 128)  fw3_ref: (128, C)   fc2 / fc3 weights, bf16.
    fb*_ref: f32 biases.   alpha_ref: (1,1) SMEM shared PReLU slope.
    p1_ref : (16, 192) VMEM scratch (pool1 output); act2_ref: (12, 256) VMEM scratch.
    out_ref: (1, C) softmax probabilities.
    """
    alpha = alpha_ref[0, 0]

    def prelu(v):
        return jnp.where(v >= 0, v, alpha * v)

    def mm(a, b):   # bf16 MXU matmul, f32 accumulation
        return jnp.dot(a.astype(jnp.bfloat16), b, preferred_element_type=jnp.float32)

    # conv1 + BN1 + PReLU for all 3 pool phases in ONE matmul; MaxPool2d((3,1)) is an
    # elementwise max of the three 16-row slabs (sublane-aligned static slices).
    a1 = prelu(mm(xp_ref[...], w1_ref[...]) + t1_ref[...])           # (48, 192), cols=(w, c)
    p1_ref[...] = jnp.maximum(jnp.maximum(a1[0:16], a1[16:32]), a1[32:48])

    # conv2 + BN2 + PReLU: 5 row-shifted matmuls over the H-taps.
    # TODO(synk): Dropout2d is identity here (eval-mode forward); training-mode random
    # channel dropout is not implemented.
    a2 = mm(p1_ref[pl.ds(0, 12), :], w2_ref[0])
    for i in range(1, 5):
        a2 = a2 + mm(p1_ref[pl.ds(i, 12), :], w2_ref[i])
    act2_ref[...] = prelu(a2 + t2_ref[...])                          # (12, 256), cols=(w, c)

    # MaxPool2d((3,1)) + flatten + fc1 fused: pooled row g (1,256) @ fc1 row-block g.
    h = fb1_ref[...]                                                 # (1, 512)
    for g in range(4):
        row = jnp.maximum(
            jnp.maximum(act2_ref[pl.ds(3 * g, 1), :],
                        act2_ref[pl.ds(3 * g + 1, 1), :]),
            act2_ref[pl.ds(3 * g + 2, 1), :])
        h = h + mm(row, fw1_ref[g])
    h = prelu(h)
    h = prelu(mm(h, fw2_ref[...]) + fb2_ref[...])
    h = prelu(mm(h, fw3_ref[...]) + fb3_ref[...])                    # (1, C)

    # numerically stable softmax over classes (dim=1)
    h = h - jnp.max(h, axis=1, keepdims=True)
    e = jnp.exp(h)
    out_ref[...] = e / jnp.sum(e, axis=1, keepdims=True)


# ----------------------------- pallas_call wrapper ---------------------------------


def _fixed_spec(arr):
    """Whole-array VMEM block with a constant index map (resident across grid steps)."""
    zeros = (0,) * arr.ndim
    return pl.BlockSpec(arr.shape, lambda n, _z=zeros: _z)


def forward(x_nchw, params):
    N = x_nchw.shape[0]
    C = params["fb3"].shape[1]
    x = x_nchw[:, 0, :, :].astype(jnp.float32)            # (N, 52, 8); conv1 has cin=1

    # Tiny host-side gather (~7.5 KB/sample) of the raw input only: conv1's matmul LHS,
    # grouped by MaxPool phase:  xp[n, 16*r + g, i*8 + w] = x[n, 3*g + r + i, w].
    xp = jnp.concatenate(
        [jnp.concatenate([x[:, r + i::3, :][:, :16, :] for i in range(5)], axis=-1)
         for r in range(3)], axis=1)                        # (N, 48, 40)

    in_specs = [
        pl.BlockSpec((None, 48, 40), lambda n: (n, 0, 0)),
        _fixed_spec(params["w1"]), _fixed_spec(params["t1"]),
        _fixed_spec(params["w2"]), _fixed_spec(params["t2"]),
        _fixed_spec(params["fw1"]), _fixed_spec(params["fb1"]),
        _fixed_spec(params["fw2"]), _fixed_spec(params["fb2"]),
        _fixed_spec(params["fw3"]), _fixed_spec(params["fb3"]),
        pl.BlockSpec((1, 1), lambda n: (0, 0), memory_space=pltpu.MemorySpace.SMEM),
    ]

    out = pl.pallas_call(
        fused_forward_kernel,
        out_shape=jax.ShapeDtypeStruct((N, 1, C), jnp.float32),
        grid_spec=pltpu.PrefetchScalarGridSpec(
            num_scalar_prefetch=0,
            grid=(N,),
            in_specs=in_specs,
            out_specs=pl.BlockSpec((None, 1, C), lambda n: (n, 0, 0)),
            scratch_shapes=[pltpu.VMEM((16, 192), jnp.float32),
                            pltpu.VMEM((12, 256), jnp.float32)]),
        compiler_params=pltpu.CompilerParams(dimension_semantics=("parallel",)),
    )(xp, params["w1"], params["t1"], params["w2"], params["t2"],
      params["fw1"], params["fb1"], params["fw2"], params["fb2"],
      params["fw3"], params["fb3"], params["alpha"])
    return out.reshape(N, C)


# ----------------------------- parameter construction ------------------------------


def init_torch_params(key, num_classes):
    """Random parameters in the PyTorch module's native layout."""
    ks = jax.random.split(key, 20)

    def rnd(k, shape, scale=0.1):
        return scale * jax.random.normal(k, shape, dtype=jnp.float32)

    return dict(
        K1=rnd(ks[0], (32, 1, 5, 3)),  b1=rnd(ks[1], (32,)),
        K2=rnd(ks[2], (64, 32, 5, 3)), b2=rnd(ks[3], (64,)),
        g1=1.0 + rnd(ks[4], (32,)), be1=rnd(ks[5], (32,)), m1=rnd(ks[6], (32,)),
        v1=1.0 + 0.1 * jnp.abs(jax.random.normal(ks[7], (32,), dtype=jnp.float32)),
        g2=1.0 + rnd(ks[8], (64,)), be2=rnd(ks[9], (64,)), m2=rnd(ks[10], (64,)),
        v2=1.0 + 0.1 * jnp.abs(jax.random.normal(ks[11], (64,), dtype=jnp.float32)),
        Wfc1=rnd(ks[12], (512, 1024), 0.05), bfc1=rnd(ks[13], (512,)),
        Wfc2=rnd(ks[14], (128, 512), 0.05),  bfc2=rnd(ks[15], (128,)),
        Wfc3=rnd(ks[16], (num_classes, 128), 0.05), bfc3=rnd(ks[17], (num_classes,)),
        alpha=jnp.float32(0.25),   # PReLU default init, shared by all activation sites
        eps=1e-5,
    )


def pack_params(raw):
    """Fold BN, the W-direction conv taps, and the flatten permutation into the weights."""
    eps = raw["eps"]
    s1 = raw["g1"] / jnp.sqrt(raw["v1"] + eps); sh1 = raw["be1"] - raw["m1"] * s1
    s2 = raw["g2"] / jnp.sqrt(raw["v2"] + eps); sh2 = raw["be2"] - raw["m2"] * s2

    # conv1 as matmul: LHS row = [x[h+0, :8] | ... | x[h+4, :8]]; out col = w*32 + c.
    K1 = raw["K1"]                                   # (cout=32, 1, kh=5, kw=3)
    w1 = jnp.zeros((5, 8, 6, 32), jnp.float32)       # (i, ww, w, c)
    for j in range(3):
        for w in range(6):
            w1 = w1.at[:, w + j, w, :].set(jnp.transpose(K1[:, 0, :, j]))      # (5, 32)
    w1 = (w1 * s1).reshape(40, 192)                  # BN1 scale folded; rows (i*8+ww)
    t1 = jnp.tile(raw["b1"] * s1 + sh1, 6).reshape(1, 192)

    # conv2 as 5 row-shifted matmuls: in col = wj*32 + c, out col = w2*64 + d.
    K2 = raw["K2"]                                   # (cout=64, cin=32, 5, 3)
    w2 = jnp.zeros((5, 6, 32, 4, 64), jnp.float32)   # (i, wj, c, w2, d)
    for j in range(3):
        for w in range(4):
            w2 = w2.at[:, w + j, :, w, :].set(jnp.transpose(K2[:, :, :, j], (2, 1, 0)))
    w2 = (w2 * s2).reshape(5, 192, 256)              # BN2 scale folded
    t2 = jnp.tile(raw["b2"] * s2 + sh2, 4).reshape(1, 256)

    # fc1: fold the PyTorch NCHW flatten order (d, g2, w2) and our (w2, d) column order
    # into the weight rows: fw1[g2, w2*64 + d, o] = Wfc1[o, d*16 + g2*4 + w2].
    fw1 = jnp.transpose(raw["Wfc1"].reshape(512, 64, 4, 4), (2, 3, 1, 0)).reshape(4, 256, 512)

    bf16 = jnp.bfloat16
    return dict(
        w1=w1.astype(bf16), t1=t1,
        w2=w2.astype(bf16), t2=t2,
        fw1=fw1.astype(bf16), fb1=raw["bfc1"].reshape(1, 512),
        fw2=jnp.transpose(raw["Wfc2"]).astype(bf16), fb2=raw["bfc2"].reshape(1, 128),
        fw3=jnp.transpose(raw["Wfc3"]).astype(bf16), fb3=raw["bfc3"].reshape(1, -1),
        alpha=jnp.full((1, 1), raw["alpha"], jnp.float32),
    )


# ----------------------------- pure-JAX reference ----------------------------------


def reference_forward(x, raw):
    """f32 XLA reference of the PyTorch eval-mode forward (independent of the kernel)."""
    alpha, eps = raw["alpha"], raw["eps"]

    def prelu(v):
        return jnp.where(v >= 0, v, alpha * v)

    def bn(v, g, b, m, var):
        inv = g / jnp.sqrt(var + eps)
        return v * inv[None, :, None, None] + (b - m * inv)[None, :, None, None]

    dn = ("NCHW", "OIHW", "NCHW")
    y = lax.conv_general_dilated(x, raw["K1"], (1, 1), "VALID", dimension_numbers=dn)
    y = prelu(bn(y + raw["b1"][None, :, None, None], raw["g1"], raw["be1"], raw["m1"], raw["v1"]))
    y = lax.reduce_window(y, -jnp.inf, lax.max, (1, 1, 3, 1), (1, 1, 3, 1), "VALID")
    y = lax.conv_general_dilated(y, raw["K2"], (1, 1), "VALID", dimension_numbers=dn)
    y = prelu(bn(y + raw["b2"][None, :, None, None], raw["g2"], raw["be2"], raw["m2"], raw["v2"]))
    y = lax.reduce_window(y, -jnp.inf, lax.max, (1, 1, 3, 1), (1, 1, 3, 1), "VALID")
    f = y.reshape(y.shape[0], -1)                    # torch.flatten(x, 1): (N, 64*4*4)
    h = prelu(f @ raw["Wfc1"].T + raw["bfc1"])
    h = prelu(h @ raw["Wfc2"].T + raw["bfc2"])
    h = prelu(h @ raw["Wfc3"].T + raw["bfc3"])
    return jax.nn.softmax(h, axis=1)


if __name__ == "__main__":
    num_classes = 7
    key = jax.random.PRNGKey(0)
    pkey, xkey = jax.random.split(key)
    raw = init_torch_params(pkey, num_classes)
    params = pack_params(raw)

    # PyTorch-style NCHW input: batch=2, 1 channel, 52 samples x 8 EMG electrodes
    # (52x8 is what makes flatten() = 64*4*4 = 1024 = fc1 input).
    x = jax.random.normal(xkey, (2, 1, 52, 8), dtype=jnp.float32)

    fwd = jax.jit(forward)
    out = jax.block_until_ready(fwd(x, params))
    ref = reference_forward(x, raw)

    assert out.shape == (2, num_classes), out.shape
    assert bool(jnp.allclose(jnp.sum(out, axis=1), 1.0, atol=1e-5)), jnp.sum(out, axis=1)
    # bf16 matmul weights (f32 accumulation) vs f32 XLA reference -> loose tolerance.
    assert bool(jnp.allclose(out, ref, atol=2e-2)), float(jnp.max(jnp.abs(out - ref)))
    print("KERNEL_OK")
</pallas_src>

<mosaic_0001>
module attributes {stable_mosaic.version = 11 : i64} {
  func.func @fused_forward_kernel(%arg0: i32, %arg1: memref<1x48x40xf32, #tpu.memory_space<vmem>>, %arg2: memref<40x192xbf16, #tpu.memory_space<vmem>>, %arg3: memref<1x192xf32, #tpu.memory_space<vmem>>, %arg4: memref<5x192x256xbf16, #tpu.memory_space<vmem>>, %arg5: memref<1x256xf32, #tpu.memory_space<vmem>>, %arg6: memref<4x256x512xbf16, #tpu.memory_space<vmem>>, %arg7: memref<1x512xf32, #tpu.memory_space<vmem>>, %arg8: memref<512x128xbf16, #tpu.memory_space<vmem>>, %arg9: memref<1x128xf32, #tpu.memory_space<vmem>>, %arg10: memref<128x7xbf16, #tpu.memory_space<vmem>>, %arg11: memref<1x7xf32, #tpu.memory_space<vmem>>, %arg12: memref<1x1xf32, #tpu.memory_space<smem>>, %arg13: memref<1x1x7xf32, #tpu.memory_space<vmem>>, %arg14: memref<16x192xf32, #tpu.memory_space<vmem>>, %arg15: memref<12x256xf32, #tpu.memory_space<vmem>>) attributes {dimension_semantics = [#tpu.dimension_semantics<parallel>], iteration_bounds = array<i64: 2>, scalar_prefetch = 0 : i64, scratch_operands = 2 : i64, tpu.core_type = #tpu.core_type<tc>, window_params = [{transform_indices = @transform_0, window_bounds = array<i64: 1, 48, 40>}, {pipeline_mode = #tpu.pipeline_mode<synchronous>, transform_indices = @transform_1, window_bounds = array<i64: 40, 192>}, {pipeline_mode = #tpu.pipeline_mode<synchronous>, transform_indices = @transform_2, window_bounds = array<i64: 1, 192>}, {pipeline_mode = #tpu.pipeline_mode<synchronous>, transform_indices = @transform_3, window_bounds = array<i64: 5, 192, 256>}, {pipeline_mode = #tpu.pipeline_mode<synchronous>, transform_indices = @transform_4, window_bounds = array<i64: 1, 256>}, {pipeline_mode = #tpu.pipeline_mode<synchronous>, transform_indices = @transform_5, window_bounds = array<i64: 4, 256, 512>}, {pipeline_mode = #tpu.pipeline_mode<synchronous>, transform_indices = @transform_6, window_bounds = array<i64: 1, 512>}, {pipeline_mode = #tpu.pipeline_mode<synchronous>, transform_indices = @transform_7, window_bounds = array<i64: 512, 128>}, {pipeline_mode = #tpu.pipeline_mode<synchronous>, transform_indices = @transform_8, window_bounds = array<i64: 1, 128>}, {pipeline_mode = #tpu.pipeline_mode<synchronous>, transform_indices = @transform_9, window_bounds = array<i64: 128, 7>}, {pipeline_mode = #tpu.pipeline_mode<synchronous>, transform_indices = @transform_10, window_bounds = array<i64: 1, 7>}, {transform_indices = @transform_11, window_bounds = array<i64: 1, 1>}, {transform_indices = @transform_12, window_bounds = array<i64: 1, 1, 7>}]} {
    %c0 = arith.constant 0 : index
    %c0_0 = arith.constant 0 : index
    %0 = memref.load %arg12[%c0, %c0_0] : memref<1x1xf32, #tpu.memory_space<smem>>
    %c0_1 = arith.constant 0 : index
    %c0_2 = arith.constant 0 : index
    %c0_3 = arith.constant 0 : index
    %1 = vector.load %arg1[%c0_1, %c0_2, %c0_3] : memref<1x48x40xf32, #tpu.memory_space<vmem>>, vector<1x48x40xf32>
    %2 = vector.shape_cast %1 : vector<1x48x40xf32> to vector<48x40xf32>
    %c0_4 = arith.constant 0 : index
    %c0_5 = arith.constant 0 : index
    %3 = vector.load %arg2[%c0_4, %c0_5] : memref<40x192xbf16, #tpu.memory_space<vmem>>, vector<40x192xbf16>
    %4 = arith.truncf %2 : vector<48x40xf32> to vector<48x40xbf16>
    %cst = arith.constant dense<0.000000e+00> : vector<48x192xf32>
    %5 = tpu.matmul %4, %3, %cst {dimension_numbers = #tpu.dot_dimension_numbers<[1], [0], [0], [1], [0, 0, 1, 1], [], []>} : vector<48x40xbf16>, vector<40x192xbf16>, vector<48x192xf32> -> vector<48x192xf32>
    %c0_6 = arith.constant 0 : index
    %c0_7 = arith.constant 0 : index
    %6 = vector.load %arg3[%c0_6, %c0_7] : memref<1x192xf32, #tpu.memory_space<vmem>>, vector<1x192xf32>
    %7 = vector.broadcast %6 : vector<1x192xf32> to vector<48x192xf32>
    %8 = arith.addf %5, %7 : vector<48x192xf32>
    %cst_8 = arith.constant 0.000000e+00 : f32
    %9 = vector.broadcast %cst_8 : f32 to vector<48x192xf32>
    %10 = arith.cmpf oge, %8, %9 : vector<48x192xf32>
    %11 = vector.broadcast %0 : f32 to vector<48x192xf32>
    %12 = arith.mulf %11, %8 : vector<48x192xf32>
    %13 = arith.select %10, %8, %12 : vector<48x192xi1>, vector<48x192xf32>
    %14 = vector.extract_strided_slice %13 {offsets = [0, 0], sizes = [16, 192], strides = [1, 1]} : vector<48x192xf32> to vector<16x192xf32>
    %15 = vector.extract_strided_slice %13 {offsets = [16, 0], sizes = [16, 192], strides = [1, 1]} : vector<48x192xf32> to vector<16x192xf32>
    %16 = arith.maximumf %14, %15 : vector<16x192xf32>
    %17 = vector.extract_strided_slice %13 {offsets = [32, 0], sizes = [16, 192], strides = [1, 1]} : vector<48x192xf32> to vector<16x192xf32>
    %18 = arith.maximumf %16, %17 : vector<16x192xf32>
    %c0_9 = arith.constant 0 : index
    %c0_10 = arith.constant 0 : index
    %19 = vector.load %arg14[%c0_9, %c0_10] : memref<16x192xf32, #tpu.memory_space<vmem>>, vector<16x192xf32>
    tpu.vector_store %arg14[%c0_9, %c0_10], %18 {strides = array<i32>} : memref<16x192xf32, #tpu.memory_space<vmem>>, vector<16x192xf32>,
    %c0_11 = arith.constant 0 : index
    %c0_12 = arith.constant 0 : index
    %20 = vector.load %arg14[%c0_11, %c0_12] : memref<16x192xf32, #tpu.memory_space<vmem>>, vector<12x192xf32>
    %c0_13 = arith.constant 0 : index
    %c0_14 = arith.constant 0 : index
    %c0_15 = arith.constant 0 : index
    %21 = vector.load %arg4[%c0_13, %c0_14, %c0_15] : memref<5x192x256xbf16, #tpu.memory_space<vmem>>, vector<1x192x256xbf16>
    %22 = vector.shape_cast %21 : vector<1x192x256xbf16> to vector<192x256xbf16>
    %23 = arith.truncf %20 : vector<12x192xf32> to vector<12x192xbf16>
    %cst_16 = arith.constant dense<0.000000e+00> : vector<12x256xf32>
    %24 = tpu.matmul %23, %22, %cst_16 {dimension_numbers = #tpu.dot_dimension_numbers<[1], [0], [0], [1], [0, 0, 1, 1], [], []>} : vector<12x192xbf16>, vector<192x256xbf16>, vector<12x256xf32> -> vector<12x256xf32>
    %c1 = arith.constant 1 : index
    %c0_17 = arith.constant 0 : index
    %25 = vector.load %arg14[%c1, %c0_17] : memref<16x192xf32, #tpu.memory_space<vmem>>, vector<12x192xf32>
    %c1_18 = arith.constant 1 : index
    %c0_19 = arith.constant 0 : index
    %c0_20 = arith.constant 0 : index
    %26 = vector.load %arg4[%c1_18, %c0_19, %c0_20] : memref<5x192x256xbf16, #tpu.memory_space<vmem>>, vector<1x192x256xbf16>
    %27 = vector.shape_cast %26 : vector<1x192x256xbf16> to vector<192x256xbf16>
    %28 = arith.truncf %25 : vector<12x192xf32> to vector<12x192xbf16>
    %cst_21 = arith.constant dense<0.000000e+00> : vector<12x256xf32>
    %29 = tpu.matmul %28, %27, %cst_21 {dimension_numbers = #tpu.dot_dimension_numbers<[1], [0], [0], [1], [0, 0, 1, 1], [], []>} : vector<12x192xbf16>, vector<192x256xbf16>, vector<12x256xf32> -> vector<12x256xf32>
    %30 = arith.addf %24, %29 : vector<12x256xf32>
    %c2 = arith.constant 2 : index
    %c0_22 = arith.constant 0 : index
    %31 = vector.load %arg14[%c2, %c0_22] : memref<16x192xf32, #tpu.memory_space<vmem>>, vector<12x192xf32>
    %c2_23 = arith.constant 2 : index
    %c0_24 = arith.constant 0 : index
    %c0_25 = arith.constant 0 : index
    %32 = vector.load %arg4[%c2_23, %c0_24, %c0_25] : memref<5x192x256xbf16, #tpu.memory_space<vmem>>, vector<1x192x256xbf16>
    %33 = vector.shape_cast %32 : vector<1x192x256xbf16> to vector<192x256xbf16>
    %34 = arith.truncf %31 : vector<12x192xf32> to vector<12x192xbf16>
    %cst_26 = arith.constant dense<0.000000e+00> : vector<12x256xf32>
    %35 = tpu.matmul %34, %33, %cst_26 {dimension_numbers = #tpu.dot_dimension_numbers<[1], [0], [0], [1], [0, 0, 1, 1], [], []>} : vector<12x192xbf16>, vector<192x256xbf16>, vector<12x256xf32> -> vector<12x256xf32>
    %36 = arith.addf %30, %35 : vector<12x256xf32>
    %c3 = arith.constant 3 : index
    %c0_27 = arith.constant 0 : index
    %37 = vector.load %arg14[%c3, %c0_27] : memref<16x192xf32, #tpu.memory_space<vmem>>, vector<12x192xf32>
    %c3_28 = arith.constant 3 : index
    %c0_29 = arith.constant 0 : index
    %c0_30 = arith.constant 0 : index
    %38 = vector.load %arg4[%c3_28, %c0_29, %c0_30] : memref<5x192x256xbf16, #tpu.memory_space<vmem>>, vector<1x192x256xbf16>
    %39 = vector.shape_cast %38 : vector<1x192x256xbf16> to vector<192x256xbf16>
    %40 = arith.truncf %37 : vector<12x192xf32> to vector<12x192xbf16>
    %cst_31 = arith.constant dense<0.000000e+00> : vector<12x256xf32>
    %41 = tpu.matmul %40, %39, %cst_31 {dimension_numbers = #tpu.dot_dimension_numbers<[1], [0], [0], [1], [0, 0, 1, 1], [], []>} : vector<12x192xbf16>, vector<192x256xbf16>, vector<12x256xf32> -> vector<12x256xf32>
    %42 = arith.addf %36, %41 : vector<12x256xf32>
    %c4 = arith.constant 4 : index
    %c0_32 = arith.constant 0 : index
    %43 = vector.load %arg14[%c4, %c0_32] : memref<16x192xf32, #tpu.memory_space<vmem>>, vector<12x192xf32>
    %c4_33 = arith.constant 4 : index
    %c0_34 = arith.constant 0 : index
    %c0_35 = arith.constant 0 : index
    %44 = vector.load %arg4[%c4_33, %c0_34, %c0_35] : memref<5x192x256xbf16, #tpu.memory_space<vmem>>, vector<1x192x256xbf16>
    %45 = vector.shape_cast %44 : vector<1x192x256xbf16> to vector<192x256xbf16>
    %46 = arith.truncf %43 : vector<12x192xf32> to vector<12x192xbf16>
    %cst_36 = arith.constant dense<0.000000e+00> : vector<12x256xf32>
    %47 = tpu.matmul %46, %45, %cst_36 {dimension_numbers = #tpu.dot_dimension_numbers<[1], [0], [0], [1], [0, 0, 1, 1], [], []>} : vector<12x192xbf16>, vector<192x256xbf16>, vector<12x256xf32> -> vector<12x256xf32>
    %48 = arith.addf %42, %47 : vector<12x256xf32>
    %c0_37 = arith.constant 0 : index
    %c0_38 = arith.constant 0 : index
    %49 = vector.load %arg5[%c0_37, %c0_38] : memref<1x256xf32, #tpu.memory_space<vmem>>, vector<1x256xf32>
    %50 = vector.broadcast %49 : vector<1x256xf32> to vector<12x256xf32>
    %51 = arith.addf %48, %50 : vector<12x256xf32>
    %cst_39 = arith.constant 0.000000e+00 : f32
    %52 = vector.broadcast %cst_39 : f32 to vector<12x256xf32>
    %53 = arith.cmpf oge, %51, %52 : vector<12x256xf32>
    %54 = vector.broadcast %0 : f32 to vector<12x256xf32>
    %55 = arith.mulf %54, %51 : vector<12x256xf32>
    %56 = arith.select %53, %51, %55 : vector<12x256xi1>, vector<12x256xf32>
    %c0_40 = arith.constant 0 : index
    %c0_41 = arith.constant 0 : index
    %57 = vector.load %arg15[%c0_40, %c0_41] : memref<12x256xf32, #tpu.memory_space<vmem>>, vector<12x256xf32>
    tpu.vector_store %arg15[%c0_40, %c0_41], %56 {strides = array<i32>} : memref<12x256xf32, #tpu.memory_space<vmem>>, vector<12x256xf32>,
    %c0_42 = arith.constant 0 : index
    %c0_43 = arith.constant 0 : index
    %58 = vector.load %arg7[%c0_42, %c0_43] : memref<1x512xf32, #tpu.memory_space<vmem>>, vector<1x512xf32>
    %c0_44 = arith.constant 0 : index
    %c0_45 = arith.constant 0 : index
    %59 = vector.load %arg15[%c0_44, %c0_45] : memref<12x256xf32, #tpu.memory_space<vmem>>, vector<1x256xf32>
    %c1_46 = arith.constant 1 : index
    %c0_47 = arith.constant 0 : index
    %60 = vector.load %arg15[%c1_46, %c0_47] : memref<12x256xf32, #tpu.memory_space<vmem>>, vector<1x256xf32>
    %61 = arith.maximumf %59, %60 : vector<1x256xf32>
    %c2_48 = arith.constant 2 : index
    %c0_49 = arith.constant 0 : index
    %62 = vector.load %arg15[%c2_48, %c0_49] : memref<12x256xf32, #tpu.memory_space<vmem>>, vector<1x256xf32>
    %63 = arith.maximumf %61, %62 : vector<1x256xf32>
    %c0_50 = arith.constant 0 : index
    %c0_51 = arith.constant 0 : index
    %c0_52 = arith.constant 0 : index
    %64 = vector.load %arg6[%c0_50, %c0_51, %c0_52] : memref<4x256x512xbf16, #tpu.memory_space<vmem>>, vector<1x256x512xbf16>
    %65 = vector.shape_cast %64 : vector<1x256x512xbf16> to vector<256x512xbf16>
    %66 = arith.truncf %63 : vector<1x256xf32> to vector<1x256xbf16>
    %cst_53 = arith.constant dense<0.000000e+00> : vector<1x512xf32>
    %67 = tpu.matmul %66, %65, %cst_53 {dimension_numbers = #tpu.dot_dimension_numbers<[1], [0], [0], [1], [0, 0, 1, 1], [], []>} : vector<1x256xbf16>, vector<256x512xbf16>, vector<1x512xf32> -> vector<1x512xf32>
    %68 = arith.addf %58, %67 : vector<1x512xf32>
    %c3_54 = arith.constant 3 : index
    %c0_55 = arith.constant 0 : index
    %69 = vector.load %arg15[%c3_54, %c0_55] : memref<12x256xf32, #tpu.memory_space<vmem>>, vector<1x256xf32>
    %c4_56 = arith.constant 4 : index
    %c0_57 = arith.constant 0 : index
    %70 = vector.load %arg15[%c4_56, %c0_57] : memref<12x256xf32, #tpu.memory_space<vmem>>, vector<1x256xf32>
    %71 = arith.maximumf %69, %70 : vector<1x256xf32>
    %c5 = arith.constant 5 : index
    %c0_58 = arith.constant 0 : index
    %72 = vector.load %arg15[%c5, %c0_58] : memref<12x256xf32, #tpu.memory_space<vmem>>, vector<1x256xf32>
    %73 = arith.maximumf %71, %72 : vector<1x256xf32>
    %c1_59 = arith.constant 1 : index
    %c0_60 = arith.constant 0 : index
    %c0_61 = arith.constant 0 : index
    %74 = vector.load %arg6[%c1_59, %c0_60, %c0_61] : memref<4x256x512xbf16, #tpu.memory_space<vmem>>, vector<1x256x512xbf16>
    %75 = vector.shape_cast %74 : vector<1x256x512xbf16> to vector<256x512xbf16>
    %76 = arith.truncf %73 : vector<1x256xf32> to vector<1x256xbf16>
    %cst_62 = arith.constant dense<0.000000e+00> : vector<1x512xf32>
    %77 = tpu.matmul %76, %75, %cst_62 {dimension_numbers = #tpu.dot_dimension_numbers<[1], [0], [0], [1], [0, 0, 1, 1], [], []>} : vector<1x256xbf16>, vector<256x512xbf16>, vector<1x512xf32> -> vector<1x512xf32>
    %78 = arith.addf %68, %77 : vector<1x512xf32>
    %c6 = arith.constant 6 : index
    %c0_63 = arith.constant 0 : index
    %79 = vector.load %arg15[%c6, %c0_63] : memref<12x256xf32, #tpu.memory_space<vmem>>, vector<1x256xf32>
    %c7 = arith.constant 7 : index
    %c0_64 = arith.constant 0 : index
    %80 = vector.load %arg15[%c7, %c0_64] : memref<12x256xf32, #tpu.memory_space<vmem>>, vector<1x256xf32>
    %81 = arith.maximumf %79, %80 : vector<1x256xf32>
    %c8 = arith.constant 8 : index
    %c0_65 = arith.constant 0 : index
    %82 = vector.load %arg15[%c8, %c0_65] : memref<12x256xf32, #tpu.memory_space<vmem>>, vector<1x256xf32>
    %83 = arith.maximumf %81, %82 : vector<1x256xf32>
    %c2_66 = arith.constant 2 : index
    %c0_67 = arith.constant 0 : index
    %c0_68 = arith.constant 0 : index
    %84 = vector.load %arg6[%c2_66, %c0_67, %c0_68] : memref<4x256x512xbf16, #tpu.memory_space<vmem>>, vector<1x256x512xbf16>
    %85 = vector.shape_cast %84 : vector<1x256x512xbf16> to vector<256x512xbf16>
    %86 = arith.truncf %83 : vector<1x256xf32> to vector<1x256xbf16>
    %cst_69 = arith.constant dense<0.000000e+00> : vector<1x512xf32>
    %87 = tpu.matmul %86, %85, %cst_69 {dimension_numbers = #tpu.dot_dimension_numbers<[1], [0], [0], [1], [0, 0, 1, 1], [], []>} : vector<1x256xbf16>, vector<256x512xbf16>, vector<1x512xf32> -> vector<1x512xf32>
    %88 = arith.addf %78, %87 : vector<1x512xf32>
    %c9 = arith.constant 9 : index
    %c0_70 = arith.constant 0 : index
    %89 = vector.load %arg15[%c9, %c0_70] : memref<12x256xf32, #tpu.memory_space<vmem>>, vector<1x256xf32>
    %c10 = arith.constant 10 : index
    %c0_71 = arith.constant 0 : index
    %90 = vector.load %arg15[%c10, %c0_71] : memref<12x256xf32, #tpu.memory_space<vmem>>, vector<1x256xf32>
    %91 = arith.maximumf %89, %90 : vector<1x256xf32>
    %c11 = arith.constant 11 : index
    %c0_72 = arith.constant 0 : index
    %92 = vector.load %arg15[%c11, %c0_72] : memref<12x256xf32, #tpu.memory_space<vmem>>, vector<1x256xf32>
    %93 = arith.maximumf %91, %92 : vector<1x256xf32>
    %c3_73 = arith.constant 3 : index
    %c0_74 = arith.constant 0 : index
    %c0_75 = arith.constant 0 : index
    %94 = vector.load %arg6[%c3_73, %c0_74, %c0_75] : memref<4x256x512xbf16, #tpu.memory_space<vmem>>, vector<1x256x512xbf16>
    %95 = vector.shape_cast %94 : vector<1x256x512xbf16> to vector<256x512xbf16>
    %96 = arith.truncf %93 : vector<1x256xf32> to vector<1x256xbf16>
    %cst_76 = arith.constant dense<0.000000e+00> : vector<1x512xf32>
    %97 = tpu.matmul %96, %95, %cst_76 {dimension_numbers = #tpu.dot_dimension_numbers<[1], [0], [0], [1], [0, 0, 1, 1], [], []>} : vector<1x256xbf16>, vector<256x512xbf16>, vector<1x512xf32> -> vector<1x512xf32>
    %98 = arith.addf %88, %97 : vector<1x512xf32>
    %cst_77 = arith.constant 0.000000e+00 : f32
    %99 = vector.broadcast %cst_77 : f32 to vector<1x512xf32>
    %100 = arith.cmpf oge, %98, %99 : vector<1x512xf32>
    %101 = vector.broadcast %0 : f32 to vector<1x512xf32>
    %102 = arith.mulf %101, %98 : vector<1x512xf32>
    %103 = arith.select %100, %98, %102 : vector<1x512xi1>, vector<1x512xf32>
    %c0_78 = arith.constant 0 : index
    %c0_79 = arith.constant 0 : index
    %104 = vector.load %arg8[%c0_78, %c0_79] : memref<512x128xbf16, #tpu.memory_space<vmem>>, vector<512x128xbf16>
    %105 = arith.truncf %103 : vector<1x512xf32> to vector<1x512xbf16>
    %cst_80 = arith.constant dense<0.000000e+00> : vector<1x128xf32>
    %106 = tpu.matmul %105, %104, %cst_80 {dimension_numbers = #tpu.dot_dimension_numbers<[1], [0], [0], [1], [0, 0, 1, 1], [], []>} : vector<1x512xbf16>, vector<512x128xbf16>, vector<1x128xf32> -> vector<1x128xf32>
    %c0_81 = arith.constant 0 : index
    %c0_82 = arith.constant 0 : index
    %107 = vector.load %arg9[%c0_81, %c0_82] : memref<1x128xf32, #tpu.memory_space<vmem>>, vector<1x128xf32>
    %108 = arith.addf %106, %107 : vector<1x128xf32>
    %cst_83 = arith.constant 0.000000e+00 : f32
    %109 = vector.broadcast %cst_83 : f32 to vector<1x128xf32>
    %110 = arith.cmpf oge, %108, %109 : vector<1x128xf32>
    %111 = vector.broadcast %0 : f32 to vector<1x128xf32>
    %112 = arith.mulf %111, %108 : vector<1x128xf32>
    %113 = arith.select %110, %108, %112 : vector<1x128xi1>, vector<1x128xf32>
    %c0_84 = arith.constant 0 : index
    %c0_85 = arith.constant 0 : index
    %114 = vector.load %arg10[%c0_84, %c0_85] : memref<128x7xbf16, #tpu.memory_space<vmem>>, vector<128x7xbf16>
    %115 = arith.truncf %113 : vector<1x128xf32> to vector<1x128xbf16>
    %cst_86 = arith.constant dense<0.000000e+00> : vector<1x7xf32>
    %116 = tpu.matmul %115, %114, %cst_86 {dimension_numbers = #tpu.dot_dimension_numbers<[1], [0], [0], [1], [0, 0, 1, 1], [], []>} : vector<1x128xbf16>, vector<128x7xbf16>, vector<1x7xf32> -> vector<1x7xf32>
    %c0_87 = arith.constant 0 : index
    %c0_88 = arith.constant 0 : index
    %117 = vector.load %arg11[%c0_87, %c0_88] : memref<1x7xf32, #tpu.memory_space<vmem>>, vector<1x7xf32>
    %118 = arith.addf %116, %117 : vector<1x7xf32>
    %cst_89 = arith.constant 0.000000e+00 : f32
    %119 = vector.broadcast %cst_89 : f32 to vector<1x7xf32>
    %120 = arith.cmpf oge, %118, %119 : vector<1x7xf32>
    %121 = vector.broadcast %0 : f32 to vector<1x7xf32>
    %122 = arith.mulf %121, %118 : vector<1x7xf32>
    %123 = arith.select %120, %118, %122 : vector<1x7xi1>, vector<1x7xf32>
    %cst_90 = arith.constant dense<0xFF800000> : vector<1xf32>
    %124 = vector.multi_reduction <maximumf>, %123, %cst_90 [1] : vector<1x7xf32> to vector<1xf32>
    %125 = vector.shape_cast %124 : vector<1xf32> to vector<1x1xf32>
    %126 = vector.broadcast %125 : vector<1x1xf32> to vector<1x7xf32>
    %127 = arith.subf %123, %126 : vector<1x7xf32>
    %128 = math.exp %127 : vector<1x7xf32>
    %cst_91 = arith.constant dense<0.000000e+00> : vector<1xf32>
    %129 = vector.multi_reduction <add>, %128, %cst_91 [1] : vector<1x7xf32> to vector<1xf32>
    %130 = vector.shape_cast %129 : vector<1xf32> to vector<1x1xf32>
    %131 = vector.broadcast %130 : vector<1x1xf32> to vector<1x7xf32>
    %132 = arith.divf %128, %131 : vector<1x7xf32>
    %c0_92 = arith.constant 0 : index
    %c0_93 = arith.constant 0 : index
    %c0_94 = arith.constant 0 : index
    %133 = vector.load %arg13[%c0_92, %c0_93, %c0_94] : memref<1x1x7xf32, #tpu.memory_space<vmem>>, vector<1x1x7xf32>
    %134 = vector.shape_cast %133 : vector<1x1x7xf32> to vector<1x7xf32>
    %135 = vector.shape_cast %132 : vector<1x7xf32> to vector<1x1x7xf32>
    tpu.vector_store %arg13[%c0_92, %c0_93, %c0_94], %135 {strides = array<i32>} : memref<1x1x7xf32, #tpu.memory_space<vmem>>, vector<1x1x7xf32>,
    return
  }
  func.func @transform_0(%arg0: i32) -> (i32, i32, i32) {
    %c0_i32 = arith.constant 0 : i32
    %c0_i32_0 = arith.constant 0 : i32
    %c0_i32_1 = arith.constant 0 : i32
    return %arg0, %c0_i32, %c0_i32_0 : i32, i32, i32
  }
  func.func @transform_1(%arg0: i32) -> (i32, i32) {
    %c0_i32 = arith.constant 0 : i32
    %c0_i32_0 = arith.constant 0 : i32
    %c0_i32_1 = arith.constant 0 : i32
    return %c0_i32, %c0_i32_0 : i32, i32
  }
  func.func @transform_2(%arg0: i32) -> (i32, i32) {
    %c0_i32 = arith.constant 0 : i32
    %c0_i32_0 = arith.constant 0 : i32
    %c0_i32_1 = arith.constant 0 : i32
    return %c0_i32, %c0_i32_0 : i32, i32
  }
  func.func @transform_3(%arg0: i32) -> (i32, i32, i32) {
    %c0_i32 = arith.constant 0 : i32
    %c0_i32_0 = arith.constant 0 : i32
    %c0_i32_1 = arith.constant 0 : i32
    %c0_i32_2 = arith.constant 0 : i32
    return %c0_i32, %c0_i32_0, %c0_i32_1 : i32, i32, i32
  }
  func.func @transform_4(%arg0: i32) -> (i32, i32) {
    %c0_i32 = arith.constant 0 : i32
    %c0_i32_0 = arith.constant 0 : i32
    %c0_i32_1 = arith.constant 0 : i32
    return %c0_i32, %c0_i32_0 : i32, i32
  }
  func.func @transform_5(%arg0: i32) -> (i32, i32, i32) {
    %c0_i32 = arith.constant 0 : i32
    %c0_i32_0 = arith.constant 0 : i32
    %c0_i32_1 = arith.constant 0 : i32
    %c0_i32_2 = arith.constant 0 : i32
    return %c0_i32, %c0_i32_0, %c0_i32_1 : i32, i32, i32
  }
  func.func @transform_6(%arg0: i32) -> (i32, i32) {
    %c0_i32 = arith.constant 0 : i32
    %c0_i32_0 = arith.constant 0 : i32
    %c0_i32_1 = arith.constant 0 : i32
    return %c0_i32, %c0_i32_0 : i32, i32
  }
  func.func @transform_7(%arg0: i32) -> (i32, i32) {
    %c0_i32 = arith.constant 0 : i32
    %c0_i32_0 = arith.constant 0 : i32
    %c0_i32_1 = arith.constant 0 : i32
    return %c0_i32, %c0_i32_0 : i32, i32
  }
  func.func @transform_8(%arg0: i32) -> (i32, i32) {
    %c0_i32 = arith.constant 0 : i32
    %c0_i32_0 = arith.constant 0 : i32
    %c0_i32_1 = arith.constant 0 : i32
    return %c0_i32, %c0_i32_0 : i32, i32
  }
  func.func @transform_9(%arg0: i32) -> (i32, i32) {
    %c0_i32 = arith.constant 0 : i32
    %c0_i32_0 = arith.constant 0 : i32
    %c0_i32_1 = arith.constant 0 : i32
    return %c0_i32, %c0_i32_0 : i32, i32
  }
  func.func @transform_10(%arg0: i32) -> (i32, i32) {
    %c0_i32 = arith.constant 0 : i32
    %c0_i32_0 = arith.constant 0 : i32
    %c0_i32_1 = arith.constant 0 : i32
    return %c0_i32, %c0_i32_0 : i32, i32
  }
  func.func @transform_11(%arg0: i32) -> (i32, i32) {
    %c0_i32 = arith.constant 0 : i32
    %c0_i32_0 = arith.constant 0 : i32
    %c0_i32_1 = arith.constant 0 : i32
    return %c0_i32, %c0_i32_0 : i32, i32
  }
  func.func @transform_12(%arg0: i32) -> (i32, i32, i32) {
    %c0_i32 = arith.constant 0 : i32
    %c0_i32_0 = arith.constant 0 : i32
    %c0_i32_1 = arith.constant 0 : i32
    return %arg0, %c0_i32, %c0_i32_0 : i32, i32, i32
  }
}

</mosaic_0001>

<llo_original>
// kernel: forward.1
$region0: #{forward.1}
  #allocation0 [shape = 'u32[]', space=smem, size = 0x4, offset = 0x4, fixed_abs, tag = 'smem constant byte address 0x4 - core index']
  #allocation1 [shape = 'u32[144,128]{1,0:T(1,128)}', space=vmem, size = 0x12000, scoped, tag = 'internal scratch']
  #allocation2 [shape = 'f32[16,192]{1,0:T(8,128)}', space=vmem, size = 0x4000, scoped, tag = 'scratch operand']
  #allocation3 [shape = 'f32[12,256]{1,0:T(8,128)}', space=vmem, size = 0x4000, scoped, tag = 'scratch operand']
  #allocation4 [shape = 'f32[1,1]{1,0:T(1,128)S(6)}', space=smem, size = 0x200, scoped, tag = 'scoped memory for forward.1']
  %s0 = inlined_call_operand.vmem [shape: f32[2,48,40], index: 0, kind: input, shape index: {}]
  %s1 = inlined_call_operand.vmem [shape: bf16[40,192], index: 1, kind: input, shape index: {}]
  %s2 = inlined_call_operand.vmem [shape: f32[1,192], index: 2, kind: input, shape index: {}]
  %s3 = inlined_call_operand.vmem [shape: bf16[5,192,256], index: 3, kind: input, shape index: {}]
  %s4 = inlined_call_operand.vmem [shape: f32[1,256], index: 4, kind: input, shape index: {}]
  %s5 = inlined_call_operand.hbm [shape: bf16[4,256,512], index: 5, kind: input, shape index: {}]
  %s6 = inlined_call_operand.vmem [shape: f32[1,512], index: 6, kind: input, shape index: {}]
  %s7 = inlined_call_operand.vmem [shape: bf16[512,128], index: 7, kind: input, shape index: {}]
  %s8 = inlined_call_operand.vmem [shape: f32[1,128], index: 8, kind: input, shape index: {}]
  %s9 = inlined_call_operand.vmem [shape: bf16[128,7], index: 9, kind: input, shape index: {}]
  %s10 = inlined_call_operand.vmem [shape: f32[1,7], index: 10, kind: input, shape index: {}]
  %s11 = inlined_call_operand.<no memory space> [shape: f32[1,1], index: 11, kind: input, shape index: {}]
  %s12 = inlined_call_operand.hbm [shape: f32[2,1,7], index: 12, kind: output, shape index: {}]
  %s13 = sld [smem:[#allocation0]]
  $region85: #{forward.1} parent=0
    _
  %s15 = ssub.s32 1, %s13
  %s16 = scalar_select 0, %s15, %s13
  %17 = sst [smem:[#allocation4]] %s11
  $region1: #{forward.1} parent=0
    #allocation5 [shape = 'u8[1048576]{0}', space=vmem, size = 0x100000, scoped, tag = 'input window, operand 5, single buffered']
    #allocation6 [shape = 's32[2]{0}', space=sflag, size = 0x8, scoped, tag = 'scoped memory for forward.1']
    #allocation7 [shape = 's32[2]{0}', space=sflag, size = 0x8, scoped, tag = 'scoped memory for forward.1']
    #allocation8 [shape = 'u8[1024]{0}', space=vmem, size = 0x400, scoped, tag = 'output window, operand 0']
    %18 = vsyncpa [#allocation6], 0
    %19 = vsyncpa [#allocation7], 0
    %s20 = scalar_lea.sflag [#allocation7], 1
    %21 = vsyncpa %s20, 0
    loop: start=0, step=1, limit=4
    $region2: #{forward.1} parent=1 // loop_pre_header
      _
    $region3: #{forward.1} parent=1 // loop_header
      %s23 = sphi 0, %s27
      %p24 = scmp.ge.s32.totalorder %s23, 4
      %s33 = sphi 0, %s35
      %s36 = sphi 0, %s33
      %s37 = sphi 0, %s36
      %s53 = sphi 0, %s37
      %s57 = sphi 0, %s57
      %s59 = sphi 0, %s57
      %s60 = sphi 0, %s59
      %s74 = sphi 0, %s60
      %s78 = sphi 0, %s78
      %s80 = sphi 0, %s78
      %s81 = sphi 0, %s80
      %s95 = sphi 0, %s81
      %s99 = sphi 0, %s99
      %s101 = sphi 0, %s99
      %s102 = sphi 0, %s101
      %s116 = sphi 0, %s102
      %s120 = sphi 0, %s120
      %s122 = sphi 0, %s120
      %s123 = sphi 0, %s122
      %s137 = sphi 0, %s123
      %s141 = sphi 0, %s141
      %s143 = sphi 0, %s141
      %s144 = sphi 0, %s143
      %s158 = sphi 0, %s144
      %s162 = sphi 0, %s162
      %s164 = sphi 0, %s162
      %s165 = sphi 0, %s164
      %s179 = sphi 0, %s165
      %s183 = sphi 0, %s183
      %s185 = sphi 0, %s183
      %s186 = sphi 0, %s185
      %s200 = sphi 0, %s186
      %s204 = sphi 0, %s204
      %s206 = sphi 0, %s204
      %s207 = sphi 0, %s206
      %s221 = sphi 0, %s207
      %s225 = sphi 0, %s225
      %s227 = sphi 0, %s225
      %s228 = sphi 0, %s227
      %s242 = sphi 0, %s228
      %s246 = sphi 0, %s246
      %s248 = sphi 0, %s246
      %s249 = sphi 0, %s248
      %s263 = sphi 0, %s249
      %s267 = sphi 0, %s267
      %s269 = sphi 0, %s267
      %s270 = sphi 0, %s269
      %s284 = sphi 0, %s270
      %s290 = sphi 0, %s292
      %s293 = sphi 0, %s290
      %s294 = sphi 0, %s293
      %s310 = sphi 0, %s294
    $region4: #{forward.1} parent=1 // loop_header_branch
      %26 = sbr.rel (%p24) target = $region8
    $region5: #{forward.1} parent=1 // loop_body
      %s28 = ssub.s32 %s23, 1
      %s29 = ssub.s32 %s23, 2
      %s30 = sadd.s32 %s23, 1
      %s31 = ssub.s32 %s23, %s30
      %p32 = scmp.eq.s32.totalorder %s31, 0
      %s34 = sadd.s32 %s33, 1
      %s35 = scalar_select %p32, %s33, %s34
      %p38 = pneg %p32
      %p39 = scmp.eq.s32.totalorder %s23, 1
      %p40 = por %p38, %p39
      %p41 = scmp.ne.s32.totalorder %s33, %s36
      %p42 = scmp.eq.s32.totalorder %s23, 0
      %p43 = por %p41, %p42
      %p44 = scmp.ne.s32.totalorder %s33, %s36
      %p45 = scmp.eq.s32.totalorder %s28, 1
      %p46 = por %p44, %p45
      %p47 = scmp.ne.s32.totalorder %s36, %s37
      %p48 = scmp.eq.s32.totalorder %s28, 0
      %p49 = por %p47, %p48
      %p50 = scmp.ne.s32.totalorder %s36, %s37
      %p51 = scmp.eq.s32.totalorder %s29, 1
      %p52 = por %p50, %p51
      %p54 = scmp.ne.s32.totalorder %s37, %s53
      %p55 = scmp.eq.s32.totalorder %s29, 0
      %p56 = por %p54, %p55
      %s58 = sadd.s32 %s57, 1
      %p61 = scmp.eq.s32.totalorder %s23, 1
      %p62 = scmp.ne.s32.totalorder %s57, %s59
      %p63 = scmp.eq.s32.totalorder %s23, 0
      %p64 = por %p62, %p63
      %p65 = scmp.ne.s32.totalorder %s57, %s59
      %p66 = scmp.eq.s32.totalorder %s28, 1
      %p67 = por %p65, %p66
      %p68 = scmp.ne.s32.totalorder %s59, %s60
      %p69 = scmp.eq.s32.totalorder %s28, 0
      %p70 = por %p68, %p69
      %p71 = scmp.ne.s32.totalorder %s59, %s60
      %p72 = scmp.eq.s32.totalorder %s29, 1
      %p73 = por %p71, %p72
      %p75 = scmp.ne.s32.totalorder %s60, %s74
      %p76 = scmp.eq.s32.totalorder %s29, 0
      %p77 = por %p75, %p76
      %s79 = sadd.s32 %s78, 1
      %p82 = scmp.eq.s32.totalorder %s23, 1
      %p83 = scmp.ne.s32.totalorder %s78, %s80
      %p84 = scmp.eq.s32.totalorder %s23, 0
      %p85 = por %p83, %p84
      %p86 = scmp.ne.s32.totalorder %s78, %s80
      %p87 = scmp.eq.s32.totalorder %s28, 1
      %p88 = por %p86, %p87
      %p89 = scmp.ne.s32.totalorder %s80, %s81
      %p90 = scmp.eq.s32.totalorder %s28, 0
      %p91 = por %p89, %p90
      %p92 = scmp.ne.s32.totalorder %s80, %s81
      %p93 = scmp.eq.s32.totalorder %s29, 1
      %p94 = por %p92, %p93
      %p96 = scmp.ne.s32.totalorder %s81, %s95
      %p97 = scmp.eq.s32.totalorder %s29, 0
      %p98 = por %p96, %p97
      %s100 = sadd.s32 %s99, 1
      %p103 = scmp.eq.s32.totalorder %s23, 1
      %p104 = scmp.ne.s32.totalorder %s99, %s101
      %p105 = scmp.eq.s32.totalorder %s23, 0
      %p106 = por %p104, %p105
      %p107 = scmp.ne.s32.totalorder %s99, %s101
      %p108 = scmp.eq.s32.totalorder %s28, 1
      %p109 = por %p107, %p108
      %p110 = scmp.ne.s32.totalorder %s101, %s102
      %p111 = scmp.eq.s32.totalorder %s28, 0
      %p112 = por %p110, %p111
      %p113 = scmp.ne.s32.totalorder %s101, %s102
      %p114 = scmp.eq.s32.totalorder %s29, 1
      %p115 = por %p113, %p114
      %p117 = scmp.ne.s32.totalorder %s102, %s116
      %p118 = scmp.eq.s32.totalorder %s29, 0
      %p119 = por %p117, %p118
      %s121 = sadd.s32 %s120, 1
      %p124 = scmp.eq.s32.totalorder %s23, 1
      %p125 = scmp.ne.s32.totalorder %s120, %s122
      %p126 = scmp.eq.s32.totalorder %s23, 0
      %p127 = por %p125, %p126
      %p128 = scmp.ne.s32.totalorder %s120, %s122
      %p129 = scmp.eq.s32.totalorder %s28, 1
      %p130 = por %p128, %p129
      %p131 = scmp.ne.s32.totalorder %s122, %s123
      %p132 = scmp.eq.s32.totalorder %s28, 0
      %p133 = por %p131, %p132
      %p134 = scmp.ne.s32.totalorder %s122, %s123
      %p135 = scmp.eq.s32.totalorder %s29, 1
      %p136 = por %p134, %p135
      %p138 = scmp.ne.s32.totalorder %s123, %s137
      %p139 = scmp.eq.s32.totalorder %s29, 0
      %p140 = por %p138, %p139
      %s142 = sadd.s32 %s141, 1
      %p145 = scmp.eq.s32.totalorder %s23, 1
      %p146 = scmp.ne.s32.totalorder %s141, %s143
      %p147 = scmp.eq.s32.totalorder %s23, 0
      %p148 = por %p146, %p147
      %p149 = scmp.ne.s32.totalorder %s141, %s143
      %p150 = scmp.eq.s32.totalorder %s28, 1
      %p151 = por %p149, %p150
      %p152 = scmp.ne.s32.totalorder %s143, %s144
      %p153 = scmp.eq.s32.totalorder %s28, 0
      %p154 = por %p152, %p153
      %p155 = scmp.ne.s32.totalorder %s143, %s144
      %p156 = scmp.eq.s32.totalorder %s29, 1
      %p157 = por %p155, %p156
      %p159 = scmp.ne.s32.totalorder %s144, %s158
      %p160 = scmp.eq.s32.totalorder %s29, 0
      %p161 = por %p159, %p160
      %s163 = sadd.s32 %s162, 1
      %p166 = scmp.eq.s32.totalorder %s23, 1
      %p167 = scmp.ne.s32.totalorder %s162, %s164
      %p168 = scmp.eq.s32.totalorder %s23, 0
      %p169 = por %p167, %p168
      %p170 = scmp.ne.s32.totalorder %s162, %s164
      %p171 = scmp.eq.s32.totalorder %s28, 1
      %p172 = por %p170, %p171
      %p173 = scmp.ne.s32.totalorder %s164, %s165
      %p174 = scmp.eq.s32.totalorder %s28, 0
      %p175 = por %p173, %p174
      %p176 = scmp.ne.s32.totalorder %s164, %s165
      %p177 = scmp.eq.s32.totalorder %s29, 1
      %p178 = por %p176, %p177
      %p180 = scmp.ne.s32.totalorder %s165, %s179
      %p181 = scmp.eq.s32.totalorder %s29, 0
      %p182 = por %p180, %p181
      %s184 = sadd.s32 %s183, 1
      %p187 = scmp.eq.s32.totalorder %s23, 1
      %p188 = scmp.ne.s32.totalorder %s183, %s185
      %p189 = scmp.eq.s32.totalorder %s23, 0
      %p190 = por %p188, %p189
      %p191 = scmp.ne.s32.totalorder %s183, %s185
      %p192 = scmp.eq.s32.totalorder %s28, 1
      %p193 = por %p191, %p192
      %p194 = scmp.ne.s32.totalorder %s185, %s186
      %p195 = scmp.eq.s32.totalorder %s28, 0
      %p196 = por %p194, %p195
      %p197 = scmp.ne.s32.totalorder %s185, %s186
      %p198 = scmp.eq.s32.totalorder %s29, 1
      %p199 = por %p197, %p198
      %p201 = scmp.ne.s32.totalorder %s186, %s200
      %p202 = scmp.eq.s32.totalorder %s29, 0
      %p203 = por %p201, %p202
      %s205 = sadd.s32 %s204, 1
      %p208 = scmp.eq.s32.totalorder %s23, 1
      %p209 = scmp.ne.s32.totalorder %s204, %s206
      %p210 = scmp.eq.s32.totalorder %s23, 0
      %p211 = por %p209, %p210
      %p212 = scmp.ne.s32.totalorder %s204, %s206
      %p213 = scmp.eq.s32.totalorder %s28, 1
      %p214 = por %p212, %p213
      %p215 = scmp.ne.s32.totalorder %s206, %s207
      %p216 = scmp.eq.s32.totalorder %s28, 0
      %p217 = por %p215, %p216
      %p218 = scmp.ne.s32.totalorder %s206, %s207
      %p219 = scmp.eq.s32.totalorder %s29, 1
      %p220 = por %p218, %p219
      %p222 = scmp.ne.s32.totalorder %s207, %s221
      %p223 = scmp.eq.s32.totalorder %s29, 0
      %p224 = por %p222, %p223
      %s226 = sadd.s32 %s225, 1
      %p229 = scmp.eq.s32.totalorder %s23, 1
      %p230 = scmp.ne.s32.totalorder %s225, %s227
      %p231 = scmp.eq.s32.totalorder %s23, 0
      %p232 = por %p230, %p231
      %p233 = scmp.ne.s32.totalorder %s225, %s227
      %p234 = scmp.eq.s32.totalorder %s28, 1
      %p235 = por %p233, %p234
      %p236 = scmp.ne.s32.totalorder %s227, %s228
      %p237 = scmp.eq.s32.totalorder %s28, 0
      %p238 = por %p236, %p237
      %p239 = scmp.ne.s32.totalorder %s227, %s228
      %p240 = scmp.eq.s32.totalorder %s29, 1
      %p241 = por %p239, %p240
      %p243 = scmp.ne.s32.totalorder %s228, %s242
      %p244 = scmp.eq.s32.totalorder %s29, 0
      %p245 = por %p243, %p244
      %s247 = sadd.s32 %s246, 1
      %p250 = scmp.eq.s32.totalorder %s23, 1
      %p251 = scmp.ne.s32.totalorder %s246, %s248
      %p252 = scmp.eq.s32.totalorder %s23, 0
      %p253 = por %p251, %p252
      %p254 = scmp.ne.s32.totalorder %s246, %s248
      %p255 = scmp.eq.s32.totalorder %s28, 1
      %p256 = por %p254, %p255
      %p257 = scmp.ne.s32.totalorder %s248, %s249
      %p258 = scmp.eq.s32.totalorder %s28, 0
      %p259 = por %p257, %p258
      %p260 = scmp.ne.s32.totalorder %s248, %s249
      %p261 = scmp.eq.s32.totalorder %s29, 1
      %p262 = por %p260, %p261
      %p264 = scmp.ne.s32.totalorder %s249, %s263
      %p265 = scmp.eq.s32.totalorder %s29, 0
      %p266 = por %p264, %p265
      %s268 = sadd.s32 %s267, 1
      %p271 = scmp.eq.s32.totalorder %s23, 1
      %p272 = scmp.ne.s32.totalorder %s267, %s269
      %p273 = scmp.eq.s32.totalorder %s23, 0
      %p274 = por %p272, %p273
      %p275 = scmp.ne.s32.totalorder %s267, %s269
      %p276 = scmp.eq.s32.totalorder %s28, 1
      %p277 = por %p275, %p276
      %p278 = scmp.ne.s32.totalorder %s269, %s270
      %p279 = scmp.eq.s32.totalorder %s28, 0
      %p280 = por %p278, %p279
      %p281 = scmp.ne.s32.totalorder %s269, %s270
      %p282 = scmp.eq.s32.totalorder %s29, 1
      %p283 = por %p281, %p282
      %p285 = scmp.ne.s32.totalorder %s270, %s284
      %p286 = scmp.eq.s32.totalorder %s29, 0
      %p287 = por %p285, %p286
      %s288 = ssub.s32 %s23, %s30
      %p289 = scmp.eq.s32.totalorder %s288, 0
      %s291 = sadd.s32 %s290, 1
      %s292 = scalar_select %p289, %s290, %s291
      %p295 = pneg %p289
      %p296 = scmp.eq.s32.totalorder %s23, 1
      %p297 = por %p295, %p296
      %p298 = scmp.ne.s32.totalorder %s290, %s293
      %p299 = scmp.eq.s32.totalorder %s23, 0
      %p300 = por %p298, %p299
      %p301 = scmp.ne.s32.totalorder %s290, %s293
      %p302 = scmp.eq.s32.totalorder %s28, 1
      %p303 = por %p301, %p302
      %p304 = scmp.ne.s32.totalorder %s293, %s294
      %p305 = scmp.eq.s32.totalorder %s28, 0
      %p306 = por %p304, %p305
      %p307 = scmp.ne.s32.totalorder %s293, %s294
      %p308 = scmp.eq.s32.totalorder %s29, 1
      %p309 = por %p307, %p308
      %p311 = scmp.ne.s32.totalorder %s294, %s310
      %p312 = scmp.eq.s32.totalorder %s29, 0
      %p313 = por %p311, %p312
      %p314 = scmp.le.s32.totalorder 1, %s23
      %p315 = scmp.lt.s32.totalorder %s23, 3
      %p316 = pnand %p314, %p315
      %p317 = pneg %p316
      // Predicated region
      $region9: #{forward.1} parent=5 // pred_check
        _
      $region10: #{forward.1} parent=5 // pred_check_branch
        %319 = sbr.rel (%p316) target = $region12
      $region11: #{forward.1} parent=5 // pred_region
        %s320 = ssub.s32 %s23, 1
        // Predicated region
        $region13: #{forward.1} parent=11 // pred_check
          %p321 = pneg %p70
        $region14: #{forward.1} parent=11 // pred_check_branch
          %323 = sbr.rel (%p321) target = $region16
        $region15: #{forward.1} parent=11 // pred_region
          _
        $region16: #{forward.1} parent=11 // pred_fallthru
          _
        // Predicated region
        $region17: #{forward.1} parent=11 // pred_check
          %p324 = pneg %p91
        $region18: #{forward.1} parent=11 // pred_check_branch
          %326 = sbr.rel (%p324) target = $region20
        $region19: #{forward.1} parent=11 // pred_region
          _
        $region20: #{forward.1} parent=11 // pred_fallthru
          _
        // Predicated region
        $region21: #{forward.1} parent=11 // pred_check
          %p327 = pneg %p112
        $region22: #{forward.1} parent=11 // pred_check_branch
          %329 = sbr.rel (%p327) target = $region24
        $region23: #{forward.1} parent=11 // pred_region
          _
        $region24: #{forward.1} parent=11 // pred_fallthru
          _
        // Predicated region
        $region25: #{forward.1} parent=11 // pred_check
          %p330 = pneg %p133
        $region26: #{forward.1} parent=11 // pred_check_branch
          %332 = sbr.rel (%p330) target = $region28
        $region27: #{forward.1} parent=11 // pred_region
          _
        $region28: #{forward.1} parent=11 // pred_fallthru
          _
        // Predicated region
        $region29: #{forward.1} parent=11 // pred_check
          %p333 = pneg %p154
        $region30: #{forward.1} parent=11 // pred_check_branch
          %335 = sbr.rel (%p333) target = $region32
        $region31: #{forward.1} parent=11 // pred_region
          %s337 = ssub.s32 32768, 32768
          %338 = vsyncadd [#allocation6], %s337
          %s339 = sshll.u32 [#allocation5], 4
          %s340 = int_to_ptr.vmem [resolvable:$true] %s339
          %345 = dma.hbm_to_vmem [thread:$0]  %s5, 32768, %s340, [#allocation6], 256, 256, 16
        $region32: #{forward.1} parent=11 // pred_fallthru
          _
        // Predicated region
        $region33: #{forward.1} parent=11 // pred_check
          %p346 = pneg %p175
        $region34: #{forward.1} parent=11 // pred_check_branch
          %348 = sbr.rel (%p346) target = $region36
        $region35: #{forward.1} parent=11 // pred_region
          _
        $region36: #{forward.1} parent=11 // pred_fallthru
          _
        // Predicated region
        $region37: #{forward.1} parent=11 // pred_check
          %p349 = pneg %p196
        $region38: #{forward.1} parent=11 // pred_check_branch
          %351 = sbr.rel (%p349) target = $region40
        $region39: #{forward.1} parent=11 // pred_region
          _
        $region40: #{forward.1} parent=11 // pred_fallthru
          _
        // Predicated region
        $region41: #{forward.1} parent=11 // pred_check
          %p352 = pneg %p217
        $region42: #{forward.1} parent=11 // pred_check_branch
          %354 = sbr.rel (%p352) target = $region44
        $region43: #{forward.1} parent=11 // pred_region
          _
        $region44: #{forward.1} parent=11 // pred_fallthru
          _
        // Predicated region
        $region45: #{forward.1} parent=11 // pred_check
          %p355 = pneg %p238
        $region46: #{forward.1} parent=11 // pred_check_branch
          %357 = sbr.rel (%p355) target = $region48
        $region47: #{forward.1} parent=11 // pred_region
          _
        $region48: #{forward.1} parent=11 // pred_fallthru
          _
        // Predicated region
        $region49: #{forward.1} parent=11 // pred_check
          %p358 = pneg %p259
        $region50: #{forward.1} parent=11 // pred_check_branch
          %360 = sbr.rel (%p358) target = $region52
        $region51: #{forward.1} parent=11 // pred_region
          _
        $region52: #{forward.1} parent=11 // pred_fallthru
          _
        // Predicated region
        $region53: #{forward.1} parent=11 // pred_check
          %p361 = pneg %p280
        $region54: #{forward.1} parent=11 // pred_check_branch
          %363 = sbr.rel (%p361) target = $region56
        $region55: #{forward.1} parent=11 // pred_region
          _
        $region56: #{forward.1} parent=11 // pred_fallthru
          _
      $region12: #{forward.1} parent=5 // pred_fallthru
        _
      %p364 = scmp.lt.s32.totalorder %s23, 2
      // Predicated region
      $region57: #{forward.1} parent=5 // pred_check
        %p365 = pneg %p364
      $region58: #{forward.1} parent=5 // pred_check_branch
        %367 = sbr.rel (%p365) target = $region60
      $region59: #{forward.1} parent=5 // pred_region
        // Predicated region
        $region61: #{forward.1} parent=59 // pred_check
          %p368 = pneg %p43
        $region62: #{forward.1} parent=59 // pred_check_branch
          %370 = sbr.rel (%p368) target = $region64
        $region63: #{forward.1} parent=59 // pred_region
          %p371 = scmp.lt.s32.totalorder %s23, 1
          %s372 = scalar_select %p371, %s23, 1
          %s373 = smul.addr %s372, 6
          %s374 = smul.addr %s373, 8
          %s375 = scalar_lea.vmem %s0, %s374
        $region64: #{forward.1} parent=59 // pred_fallthru
          _
      $region60: #{forward.1} parent=5 // pred_fallthru
        _
      %p376 = scmp.le.s32.totalorder 1, %s23
      %p377 = scmp.lt.s32.totalorder %s23, 3
      %p378 = pnand %p376, %p377
      %p379 = pneg %p378
      // Predicated region
      $region65: #{forward.1} parent=5 // pred_check
        _
      $region66: #{forward.1} parent=5 // pred_check_branch
        %381 = sbr.rel (%p378) target = $region68
      $region67: #{forward.1} parent=5 // pred_region
        %s382 = ssub.s32 %s23, 1
        // Predicated region
        $region69: #{forward.1} parent=67 // pred_check
          %p383 = pneg %p154
        $region70: #{forward.1} parent=67 // pred_check_branch
          %385 = sbr.rel (%p383) target = $region72
        $region71: #{forward.1} parent=67 // pred_region
          %386 = dma.done [#allocation6], 32768
        $region72: #{forward.1} parent=67 // pred_fallthru
          _
        %p387 = scmp.lt.s32.totalorder %s28, 1
        %s388 = scalar_select %p387, %s28, 1
        %s389 = smul.addr %s388, 6
        %s390 = smul.addr %s389, 8
        %s391 = scalar_lea.vmem %s0, %s390
        %p392 = pneg %p49
        %p393 = pneg %p46
        %p394 = pneg %p70
        %p395 = pneg %p67
        %p396 = pneg %p91
        %p397 = pneg %p88
        %p398 = pneg %p112
        %p399 = pneg %p109
        %p400 = pneg %p133
        %p401 = pneg %p130
        %p402 = pneg %p154
        %p403 = pneg %p151
        %p404 = pneg %p175
        %p405 = pneg %p172
        %p406 = pneg %p196
        %p407 = pneg %p193
        %p408 = pneg %p217
        %p409 = pneg %p214
        %p410 = pneg %p238
        %p411 = pneg %p235
        %p412 = pneg %p259
        %p413 = pneg %p256
        %p414 = pneg %p280
        %p415 = pneg %p277
        %p416 = pneg %p306
        %p417 = pneg %p303
        %s418 = sand.u32 %s293, 1
        %s419 = scalar_lea.sflag [#allocation7], %s418
        %s420 = sand.u32 %s293, 1
        %s421 = scalar_lea.vmem [#allocation8], %s420
        %p422 = scmp.lt.s32.totalorder %s28, 1
        %s423 = scalar_select %p422, %s28, 1
        %s424 = smul.addr %s423, 6
        %s425 = smul.addr %s424, 8
        %s426 = scalar_lea.vmem %s0, %s425
        %s428 = sld [smem:[#allocation4]]
        %v429 = vld [vmem:[%s426] sm:$0xff]
        %v430 = vld [vmem:[%s426 + $0x8] sm:$0xff]
        %v431 = vld [vmem:[%s426 + $0x10] sm:$0xff]
        %v432 = vld [vmem:[%s426 + $0x18] sm:$0xff]
        %v433 = vld [vmem:[%s426 + $0x20] sm:$0xff]
        %v434 = vld [vmem:[%s426 + $0x28] sm:$0xff]
        %v435 = vld [vmem:[%s1] sm:$0xff]
        %v436 = vld [vmem:[%s1 + $0x8] sm:$0xff]
        %v437 = vld [vmem:[%s1 + $0x10] sm:$0xff]
        %v438 = vld [vmem:[%s1 + $0x18] sm:$0xff]
        %v439 = vld [vmem:[%s1 + $0x20] sm:$0xff]
        %v440 = vpack.c.bf16 %v430, %v429
        %v441 = vpack.c.bf16 %v432, %v431
        %v442 = vpack.c.bf16 %v434, %v433
        %v443 = vld [vmem:[%s2] sm:$0x3]
        %v445 = vlaneseq
        %v446 = vshrl.u32 %v445, 7
        %v447 = vsub.s32 0, %v446
        %v448 = vrot.slane %v443, %v447
        %v449 = vlaneseq
        %v450 = vshrl.u32 %v449, 7
        %v451 = vsub.s32 1, %v450
        %v452 = vrot.slane %v443, %v451
        %v460 = vunpack.c.l.b16 %v435
        %v461 = vunpack.c.h.b16 %v435
        %v462 = vunpack.c.l.b16 %v436
        %v463 = vunpack.c.h.b16 %v436
        %v464 = vunpack.c.l.b16 %v437
        %v465 = vunpack.c.h.b16 %v437
        %v466 = vunpack.c.l.b16 %v438
        %v467 = vunpack.c.h.b16 %v438
        %v468 = vunpack.c.l.b16 %v439
        %v469 = vunpack.c.h.b16 %v439
        %v470 = vpack.c.b16 %v462, %v460
        %v471 = vpack.c.b16 %v463, %v461
        %v472 = vpack.c.b16 %v466, %v464
        %v473 = vpack.c.b16 %v467, %v465
        %v474 = vpack.c.b16 %v468, %v468
        %v475 = vpack.c.b16 %v469, %v469
        %vm480 = vcmask 326656
        %v482 = vsel %vm480, %v440, 0
        %v485 = vsel %vm480, %v441, 0
        %v488 = vsel %vm480, %v442, 0
        %vm490 = vcmask 1043456
        %v492 = vsel %vm490, %v474, 0
        %v495 = vsel %vm490, %v475, 0
        %497 = vmatprep.subr.bf16.mxu0 0
        %498 = vmatpush1.bf16.msra.mxu0 0
        %499 = vmatprep.subr.bf16.mxu0 0
        %500 = vmatpush1.bf16.msra.mxu0 0
        %501 = vmatprep.subr.bf16.mxu0 0
        %502 = vmatpush1.bf16.msra.mxu0 0
        %503 = vmatprep.subr.bf16.mxu0 0
        %504 = vmatpush1.bf16.msra.mxu0 0
        %505 = vmatprep.subr.bf16.mxu0 0
        %506 = vmatpush1.bf16.msra.mxu0 0
        %507 = vmatprep.subr.bf16.mxu0 %v495
        %508 = vmatpush1.bf16.msra.mxu0 %v492
        %509 = vmatprep.subr.bf16.mxu0 %v473
        %510 = vmatpush1.bf16.msra.mxu0 %v472
        %511 = vmatprep.subr.bf16.mxu0 %v471
        %512 = vmatpush1.bf16.msra.mxu0 %v470
        %513 = vmatprep.subr.bf16.mxu0 0
        %514 = vmatpush2.bf16.msra.mxu0 0
        %515 = vmatprep.subr.bf16.mxu0 0
        %516 = vmatpush2.bf16.msra.mxu0 0
        %517 = vmatprep.subr.bf16.mxu0 0
        %518 = vmatpush2.bf16.msra.mxu0 0
        %519 = vmatprep.subr.bf16.mxu0 0
        %520 = vmatpush2.bf16.msra.mxu0 0
        %521 = vmatprep.subr.bf16.mxu0 0
        %522 = vmatpush2.bf16.msra.mxu0 0
        %523 = vmatprep.subr.bf16.mxu0 0
        %524 = vmatpush2.bf16.msra.mxu0 0
        %525 = vmatprep.subr.bf16.mxu0 0
        %526 = vmatpush2.bf16.msra.mxu0 0
        %527 = vmatprep.subr.bf16.mxu0 0
        %528 = vmatpush2.bf16.msra.mxu0 0
        %529 = vmatprep.mubr.bf16.mxu0 0
        %530 = vmatmul.mubr.bf16.gmra.mxu0 %v482
        %v531 = vpop.f32.mrf.mxu0
        %v532 = vadd.f32 %v448, %v531
        %v533 = vpop.f32.mrf.mxu0
        %v534 = vadd.f32 %v452, %v533
        %v535 = vpop.f32.mrf.mxu0
        %v536 = vadd.f32 %v448, %v535
        %v537 = vpop.f32.mrf.mxu0
        %v538 = vadd.f32 %v452, %v537
        %539 = vmatprep.mubr.bf16.mxu0 0
        %540 = vmatmul.mubr.bf16.gmra.mxu0 %v485
        %v541 = vpop.f32.mrf.mxu0
        %v542 = vadd.f32 %v448, %v541
        %v543 = vpop.f32.mrf.mxu0
        %v544 = vadd.f32 %v452, %v543
        %v545 = vpop.f32.mrf.mxu0
        %v546 = vadd.f32 %v448, %v545
        %v547 = vpop.f32.mrf.mxu0
        %v548 = vadd.f32 %v452, %v547
        %549 = vmatprep.mubr.bf16.mxu0 0
        %550 = vmatmul.mubr.bf16.gmra.mxu0 %v488
        %v551 = vpop.f32.mrf.mxu0
        %v552 = vadd.f32 %v448, %v551
        %v553 = vpop.f32.mrf.mxu0
        %v554 = vadd.f32 %v452, %v553
        %v555 = vpop.f32.mrf.mxu0
        %v556 = vadd.f32 %v448, %v555
        %v557 = vpop.f32.mrf.mxu0
        %v558 = vadd.f32 %v452, %v557
        %559 = vdwg.mxu0
        %vm560 = vcmp.ge.f32.partialorder %v532, 0.0
        %vm561 = vcmp.ge.f32.partialorder %v534, 0.0
        %vm562 = vcmp.ge.f32.partialorder %v536, 0.0
        %vm563 = vcmp.ge.f32.partialorder %v538, 0.0
        %vm564 = vcmp.ge.f32.partialorder %v542, 0.0
        %vm565 = vcmp.ge.f32.partialorder %v544, 0.0
        %vm566 = vcmp.ge.f32.partialorder %v546, 0.0
        %vm567 = vcmp.ge.f32.partialorder %v548, 0.0
        %vm568 = vcmp.ge.f32.partialorder %v552, 0.0
        %vm569 = vcmp.ge.f32.partialorder %v554, 0.0
        %vm570 = vcmp.ge.f32.partialorder %v556, 0.0
        %vm571 = vcmp.ge.f32.partialorder %v558, 0.0
        %v572 = vstv %s428
        %v573 = vmul.f32 %v572, %v532
        %v574 = vmul.f32 %v572, %v534
        %v575 = vmul.f32 %v572, %v536
        %v576 = vmul.f32 %v572, %v538
        %v577 = vmul.f32 %v572, %v542
        %v578 = vmul.f32 %v572, %v544
        %v579 = vmul.f32 %v572, %v546
        %v580 = vmul.f32 %v572, %v548
        %v581 = vmul.f32 %v572, %v552
        %v582 = vmul.f32 %v572, %v554
        %v583 = vmul.f32 %v572, %v556
        %v584 = vmul.f32 %v572, %v558
        %v585 = vsel %vm560, %v532, %v573
        %v586 = vsel %vm561, %v534, %v574
        %v587 = vsel %vm562, %v536, %v575
        %v588 = vsel %vm563, %v538, %v576
        %v589 = vsel %vm564, %v542, %v577
        %v590 = vsel %vm565, %v544, %v578
        %v591 = vsel %vm566, %v546, %v579
        %v592 = vsel %vm567, %v548, %v580
        %v593 = vsel %vm568, %v552, %v581
        %v594 = vsel %vm569, %v554, %v582
        %v595 = vsel %vm570, %v556, %v583
        %v596 = vsel %vm571, %v558, %v584
        %v597 = vmax.f32 %v585, %v589
        %v598 = vmax.f32 %v586, %v590
        %v599 = vmax.f32 %v587, %v591
        %v600 = vmax.f32 %v588, %v592
        %v601 = vmax.f32 %v597, %v593
        %v602 = vmax.f32 %v598, %v594
        %v603 = vmax.f32 %v599, %v595
        %v604 = vmax.f32 %v600, %v596
        %605 = vst [vmem:[#allocation2] sm:$0xff] %v601
        %vm606 = vcmask 523264
        %607 = vst.msk [vmem:[#allocation2 + $0x8] sm:$0xff] %vm606, %v602
        %608 = vst [vmem:[#allocation2 + $0x10] sm:$0xff] %v603
        %609 = vst.msk [vmem:[#allocation2 + $0x18] sm:$0xff] %vm606, %v604
        %v610 = vld [vmem:[#allocation2] sm:$0xff]
        %v611 = vld [vmem:[#allocation2 + $0x8] sm:$0xff]
        %v612 = vld [vmem:[#allocation2 + $0x10] sm:$0xf]
        %v613 = vld [vmem:[#allocation2 + $0x18] sm:$0xf]
        %v614 = vld [vmem:[%s3] sm:$0xff]
        %v615 = vld [vmem:[%s3 + $0x8] sm:$0xff]
        %v616 = vld [vmem:[%s3 + $0x10] sm:$0xff]
        %v617 = vld [vmem:[%s3 + $0x18] sm:$0xff]
        %v618 = vld [vmem:[%s3 + $0x20] sm:$0xff]
        %v619 = vld [vmem:[%s3 + $0x28] sm:$0xff]
        %v620 = vld [vmem:[%s3 + $0x30] sm:$0xff]
        %v621 = vld [vmem:[%s3 + $0x38] sm:$0xff]
        %v622 = vld [vmem:[%s3 + $0x40] sm:$0xff]
        %v623 = vld [vmem:[%s3 + $0x48] sm:$0xff]
        %v624 = vld [vmem:[%s3 + $0x50] sm:$0xff]
        %v625 = vld [vmem:[%s3 + $0x58] sm:$0xff]
        %v626 = vld [vmem:[%s3 + $0x60] sm:$0xff]
        %v627 = vld [vmem:[%s3 + $0x68] sm:$0xff]
        %v628 = vld [vmem:[%s3 + $0x70] sm:$0xff]
        %v629 = vld [vmem:[%s3 + $0x78] sm:$0xff]
        %v630 = vld [vmem:[%s3 + $0x80] sm:$0xff]
        %v631 = vld [vmem:[%s3 + $0x88] sm:$0xff]
        %v632 = vld [vmem:[%s3 + $0x90] sm:$0xff]
        %v633 = vld [vmem:[%s3 + $0x98] sm:$0xff]
        %v634 = vld [vmem:[%s3 + $0xa0] sm:$0xff]
        %v635 = vld [vmem:[%s3 + $0xa8] sm:$0xff]
        %v636 = vld [vmem:[%s3 + $0xb0] sm:$0xff]
        %v637 = vld [vmem:[%s3 + $0xb8] sm:$0xff]
        %v638 = vpack.c.bf16 %v612, %v610
        %v639 = vpack.c.bf16 %v613, %v611
        %v640 = vld [vmem:[#allocation2] sm:$0xfe]
        %v641 = vld [vmem:[#allocation2 + $0x8] sm:$0xfe]
        %v642 = vld [vmem:[#allocation2 + $0x10] sm:$0x1f]
        %v643 = vld [vmem:[#allocation2 + $0x18] sm:$0x1f]
        %s644 = scalar_lea.vmem %s3, 192
        %v645 = vld [vmem:[%s644] sm:$0xff]
        %v646 = vld [vmem:[%s644 + $0x8] sm:$0xff]
        %v647 = vld [vmem:[%s644 + $0x10] sm:$0xff]
        %v648 = vld [vmem:[%s644 + $0x18] sm:$0xff]
        %v649 = vld [vmem:[%s644 + $0x20] sm:$0xff]
        %v650 = vld [vmem:[%s644 + $0x28] sm:$0xff]
        %v651 = vld [vmem:[%s644 + $0x30] sm:$0xff]
        %v652 = vld [vmem:[%s644 + $0x38] sm:$0xff]
        %v653 = vld [vmem:[%s644 + $0x40] sm:$0xff]
        %v654 = vld [vmem:[%s644 + $0x48] sm:$0xff]
        %v655 = vld [vmem:[%s644 + $0x50] sm:$0xff]
        %v656 = vld [vmem:[%s644 + $0x58] sm:$0xff]
        %v657 = vld [vmem:[%s644 + $0x60] sm:$0xff]
        %v658 = vld [vmem:[%s644 + $0x68] sm:$0xff]
        %v659 = vld [vmem:[%s644 + $0x70] sm:$0xff]
        %v660 = vld [vmem:[%s644 + $0x78] sm:$0xff]
        %v661 = vld [vmem:[%s644 + $0x80] sm:$0xff]
        %v662 = vld [vmem:[%s644 + $0x88] sm:$0xff]
        %v663 = vld [vmem:[%s644 + $0x90] sm:$0xff]
        %v664 = vld [vmem:[%s644 + $0x98] sm:$0xff]
        %v665 = vld [vmem:[%s644 + $0xa0] sm:$0xff]
        %v666 = vld [vmem:[%s644 + $0xa8] sm:$0xff]
        %v667 = vld [vmem:[%s644 + $0xb0] sm:$0xff]
        %v668 = vld [vmem:[%s644 + $0xb8] sm:$0xff]
        %v669 = vpack.c.bf16 %v642, %v640
        %v670 = vpack.c.bf16 %v643, %v641
        %v672 = vshrl.u32 %v669, 16
        %v674 = vshll.u32 %v669, 16
        %v676 = vrot.slane %v674, 1
        %v677 = vor.u32 %v672, %v676
        %v679 = vshrl.u32 %v670, 16
        %v681 = vshll.u32 %v670, 16
        %v683 = vrot.slane %v681, 1
        %v684 = vor.u32 %v679, %v683
        %v710 = vunpack.c.l.b16 %v645
        %v711 = vunpack.c.h.b16 %v645
        %v712 = vunpack.c.l.b16 %v646
        %v713 = vunpack.c.h.b16 %v646
        %v714 = vunpack.c.l.b16 %v647
        %v715 = vunpack.c.h.b16 %v647
        %v716 = vunpack.c.l.b16 %v648
        %v717 = vunpack.c.h.b16 %v648
        %v718 = vunpack.c.l.b16 %v649
        %v719 = vunpack.c.h.b16 %v649
        %v720 = vunpack.c.l.b16 %v650
        %v721 = vunpack.c.h.b16 %v650
        %v722 = vunpack.c.l.b16 %v651
        %v723 = vunpack.c.h.b16 %v651
        %v724 = vunpack.c.l.b16 %v652
        %v725 = vunpack.c.h.b16 %v652
        %v726 = vunpack.c.l.b16 %v653
        %v727 = vunpack.c.h.b16 %v653
        %v728 = vunpack.c.l.b16 %v654
        %v729 = vunpack.c.h.b16 %v654
        %v730 = vunpack.c.l.b16 %v655
        %v731 = vunpack.c.h.b16 %v655
        %v732 = vunpack.c.l.b16 %v656
        %v733 = vunpack.c.h.b16 %v656
        %v734 = vunpack.c.l.b16 %v657
        %v735 = vunpack.c.h.b16 %v657
        %v736 = vunpack.c.l.b16 %v658
        %v737 = vunpack.c.h.b16 %v658
        %v738 = vunpack.c.l.b16 %v659
        %v739 = vunpack.c.h.b16 %v659
        %v740 = vunpack.c.l.b16 %v660
        %v741 = vunpack.c.h.b16 %v660
        %v742 = vunpack.c.l.b16 %v661
        %v743 = vunpack.c.h.b16 %v661
        %v744 = vunpack.c.l.b16 %v662
        %v745 = vunpack.c.h.b16 %v662
        %v746 = vunpack.c.l.b16 %v663
        %v747 = vunpack.c.h.b16 %v663
        %v748 = vunpack.c.l.b16 %v664
        %v749 = vunpack.c.h.b16 %v664
        %v750 = vunpack.c.l.b16 %v665
        %v751 = vunpack.c.h.b16 %v665
        %v752 = vunpack.c.l.b16 %v666
        %v753 = vunpack.c.h.b16 %v666
        %v754 = vunpack.c.l.b16 %v667
        %v755 = vunpack.c.h.b16 %v667
        %v756 = vunpack.c.l.b16 %v668
        %v757 = vunpack.c.h.b16 %v668
        %v758 = vpack.c.b16 %v712, %v710
        %v759 = vpack.c.b16 %v713, %v711
        %v760 = vpack.c.b16 %v716, %v714
        %v761 = vpack.c.b16 %v717, %v715
        %v762 = vpack.c.b16 %v720, %v718
        %v763 = vpack.c.b16 %v721, %v719
        %v764 = vpack.c.b16 %v724, %v722
        %v765 = vpack.c.b16 %v725, %v723
        %v766 = vpack.c.b16 %v728, %v726
        %v767 = vpack.c.b16 %v729, %v727
        %v768 = vpack.c.b16 %v732, %v730
        %v769 = vpack.c.b16 %v733, %v731
        %v770 = vpack.c.b16 %v736, %v734
        %v771 = vpack.c.b16 %v737, %v735
        %v772 = vpack.c.b16 %v740, %v738
        %v773 = vpack.c.b16 %v741, %v739
        %v774 = vpack.c.b16 %v744, %v742
        %v775 = vpack.c.b16 %v745, %v743
        %v776 = vpack.c.b16 %v748, %v746
        %v777 = vpack.c.b16 %v749, %v747
        %v778 = vpack.c.b16 %v752, %v750
        %v779 = vpack.c.b16 %v753, %v751
        %v780 = vpack.c.b16 %v756, %v754
        %v781 = vpack.c.b16 %v757, %v755
        %v807 = vsel %vm606, %v684, 0
        %809 = vmatprep.subr.bf16.mxu0 %v773
        %810 = vmatpush1.bf16.msra.mxu0 %v772
        %811 = vmatprep.subr.bf16.mxu0 %v771
        %812 = vmatpush1.bf16.msra.mxu0 %v770
        %813 = vmatprep.subr.bf16.mxu0 %v769
        %814 = vmatpush1.bf16.msra.mxu0 %v768
        %815 = vmatprep.subr.bf16.mxu0 %v767
        %816 = vmatpush1.bf16.msra.mxu0 %v766
        %817 = vmatprep.subr.bf16.mxu0 %v765
        %818 = vmatpush1.bf16.msra.mxu0 %v764
        %819 = vmatprep.subr.bf16.mxu0 %v763
        %820 = vmatpush1.bf16.msra.mxu0 %v762
        %821 = vmatprep.subr.bf16.mxu0 %v761
        %822 = vmatpush1.bf16.msra.mxu0 %v760
        %823 = vmatprep.subr.bf16.mxu0 %v759
        %824 = vmatpush1.bf16.msra.mxu0 %v758
        %825 = vmatprep.subr.bf16.mxu0 0
        %826 = vmatpush2.bf16.msra.mxu0 0
        %827 = vmatprep.subr.bf16.mxu0 0
        %828 = vmatpush2.bf16.msra.mxu0 0
        %829 = vmatprep.subr.bf16.mxu0 0
        %830 = vmatpush2.bf16.msra.mxu0 0
        %831 = vmatprep.subr.bf16.mxu0 0
        %832 = vmatpush2.bf16.msra.mxu0 0
        %833 = vmatprep.subr.bf16.mxu0 %v781
        %834 = vmatpush2.bf16.msra.mxu0 %v780
        %835 = vmatprep.subr.bf16.mxu0 %v779
        %836 = vmatpush2.bf16.msra.mxu0 %v778
        %837 = vmatprep.subr.bf16.mxu0 %v777
        %838 = vmatpush2.bf16.msra.mxu0 %v776
        %839 = vmatprep.subr.bf16.mxu0 %v775
        %840 = vmatpush2.bf16.msra.mxu0 %v774
        %841 = vmatprep.mubr.bf16.mxu0 %v807
        %842 = vmatmul.mubr.bf16.gmra.mxu0 %v677
        %v843 = vpop.f32.mrf.mxu0
        %v844 = vadd.f32 0.0, %v843
        %v845 = vpop.f32.mrf.mxu0
        %v846 = vadd.f32 0.0, %v845
        %v847 = vpop.f32.mrf.mxu0
        %v848 = vadd.f32 0.0, %v847
        %v849 = vpop.f32.mrf.mxu0
        %v850 = vadd.f32 0.0, %v849
        %851 = vdwg.mxu0
        %v876 = vunpack.c.l.b16 %v614
        %v877 = vunpack.c.h.b16 %v614
        %v878 = vunpack.c.l.b16 %v615
        %v879 = vunpack.c.h.b16 %v615
        %v880 = vunpack.c.l.b16 %v616
        %v881 = vunpack.c.h.b16 %v616
        %v882 = vunpack.c.l.b16 %v617
        %v883 = vunpack.c.h.b16 %v617
        %v884 = vunpack.c.l.b16 %v618
        %v885 = vunpack.c.h.b16 %v618
        %v886 = vunpack.c.l.b16 %v619
        %v887 = vunpack.c.h.b16 %v619
        %v888 = vunpack.c.l.b16 %v620
        %v889 = vunpack.c.h.b16 %v620
        %v890 = vunpack.c.l.b16 %v621
        %v891 = vunpack.c.h.b16 %v621
        %v892 = vunpack.c.l.b16 %v622
        %v893 = vunpack.c.h.b16 %v622
        %v894 = vunpack.c.l.b16 %v623
        %v895 = vunpack.c.h.b16 %v623
        %v896 = vunpack.c.l.b16 %v624
        %v897 = vunpack.c.h.b16 %v624
        %v898 = vunpack.c.l.b16 %v625
        %v899 = vunpack.c.h.b16 %v625
        %v900 = vunpack.c.l.b16 %v626
        %v901 = vunpack.c.h.b16 %v626
        %v902 = vunpack.c.l.b16 %v627
        %v903 = vunpack.c.h.b16 %v627
        %v904 = vunpack.c.l.b16 %v628
        %v905 = vunpack.c.h.b16 %v628
        %v906 = vunpack.c.l.b16 %v629
        %v907 = vunpack.c.h.b16 %v629
        %v908 = vunpack.c.l.b16 %v630
        %v909 = vunpack.c.h.b16 %v630
        %v910 = vunpack.c.l.b16 %v631
        %v911 = vunpack.c.h.b16 %v631
        %v912 = vunpack.c.l.b16 %v632
        %v913 = vunpack.c.h.b16 %v632
        %v914 = vunpack.c.l.b16 %v633
        %v915 = vunpack.c.h.b16 %v633
        %v916 = vunpack.c.l.b16 %v634
        %v917 = vunpack.c.h.b16 %v634
        %v918 = vunpack.c.l.b16 %v635
        %v919 = vunpack.c.h.b16 %v635
        %v920 = vunpack.c.l.b16 %v636
        %v921 = vunpack.c.h.b16 %v636
        %v922 = vunpack.c.l.b16 %v637
        %v923 = vunpack.c.h.b16 %v637
        %v924 = vpack.c.b16 %v878, %v876
        %v925 = vpack.c.b16 %v879, %v877
        %v926 = vpack.c.b16 %v882, %v880
        %v927 = vpack.c.b16 %v883, %v881
        %v928 = vpack.c.b16 %v886, %v884
        %v929 = vpack.c.b16 %v887, %v885
        %v930 = vpack.c.b16 %v890, %v888
        %v931 = vpack.c.b16 %v891, %v889
        %v932 = vpack.c.b16 %v894, %v892
        %v933 = vpack.c.b16 %v895, %v893
        %v934 = vpack.c.b16 %v898, %v896
        %v935 = vpack.c.b16 %v899, %v897
        %v936 = vpack.c.b16 %v902, %v900
        %v937 = vpack.c.b16 %v903, %v901
        %v938 = vpack.c.b16 %v906, %v904
        %v939 = vpack.c.b16 %v907, %v905
        %v940 = vpack.c.b16 %v910, %v908
        %v941 = vpack.c.b16 %v911, %v909
        %v942 = vpack.c.b16 %v914, %v912
        %v943 = vpack.c.b16 %v915, %v913
        %v944 = vpack.c.b16 %v918, %v916
        %v945 = vpack.c.b16 %v919, %v917
        %v946 = vpack.c.b16 %v922, %v920
        %v947 = vpack.c.b16 %v923, %v921
        %v973 = vsel %vm606, %v639, 0
        %975 = vmatprep.subr.bf16.mxu0 %v939
        %976 = vmatpush1.bf16.msra.mxu0 %v938
        %977 = vmatprep.subr.bf16.mxu0 %v937
        %978 = vmatpush1.bf16.msra.mxu0 %v936
        %979 = vmatprep.subr.bf16.mxu0 %v935
        %980 = vmatpush1.bf16.msra.mxu0 %v934
        %981 = vmatprep.subr.bf16.mxu0 %v933
        %982 = vmatpush1.bf16.msra.mxu0 %v932
        %983 = vmatprep.subr.bf16.mxu0 %v931
        %984 = vmatpush1.bf16.msra.mxu0 %v930
        %985 = vmatprep.subr.bf16.mxu0 %v929
        %986 = vmatpush1.bf16.msra.mxu0 %v928
        %987 = vmatprep.subr.bf16.mxu0 %v927
        %988 = vmatpush1.bf16.msra.mxu0 %v926
        %989 = vmatprep.subr.bf16.mxu0 %v925
        %990 = vmatpush1.bf16.msra.mxu0 %v924
        %991 = vmatprep.subr.bf16.mxu0 0
        %992 = vmatpush2.bf16.msra.mxu0 0
        %993 = vmatprep.subr.bf16.mxu0 0
        %994 = vmatpush2.bf16.msra.mxu0 0
        %995 = vmatprep.subr.bf16.mxu0 0
        %996 = vmatpush2.bf16.msra.mxu0 0
        %997 = vmatprep.subr.bf16.mxu0 0
        %998 = vmatpush2.bf16.msra.mxu0 0
        %999 = vmatprep.subr.bf16.mxu0 %v947
        %1000 = vmatpush2.bf16.msra.mxu0 %v946
        %1001 = vmatprep.subr.bf16.mxu0 %v945
        %1002 = vmatpush2.bf16.msra.mxu0 %v944
        %1003 = vmatprep.subr.bf16.mxu0 %v943
        %1004 = vmatpush2.bf16.msra.mxu0 %v942
        %1005 = vmatprep.subr.bf16.mxu0 %v941
        %1006 = vmatpush2.bf16.msra.mxu0 %v940
        %1007 = vmatprep.mubr.bf16.mxu0 %v973
        %1008 = vmatmul.mubr.bf16.gmra.mxu0 %v638
        %v1009 = vpop.f32.mrf.mxu0
        %v1010 = vadd.f32 %v844, %v1009
        %v1011 = vpop.f32.mrf.mxu0
        %v1012 = vadd.f32 %v846, %v1011
        %v1013 = vpop.f32.mrf.mxu0
        %v1014 = vadd.f32 %v848, %v1013
        %v1015 = vpop.f32.mrf.mxu0
        %v1016 = vadd.f32 %v850, %v1015
        %1017 = vdwg.mxu0
        %v1018 = vld [vmem:[#allocation2] sm:$0xfc]
        %v1019 = vld [vmem:[#allocation2 + $0x8] sm:$0xfc]
        %v1020 = vld [vmem:[#allocation2 + $0x10] sm:$0x3f]
        %v1021 = vld [vmem:[#allocation2 + $0x18] sm:$0x3f]
        %s1022 = scalar_lea.vmem %s3, 384
        %v1023 = vld [vmem:[%s1022] sm:$0xff]
        %v1024 = vld [vmem:[%s1022 + $0x8] sm:$0xff]
        %v1025 = vld [vmem:[%s1022 + $0x10] sm:$0xff]
        %v1026 = vld [vmem:[%s1022 + $0x18] sm:$0xff]
        %v1027 = vld [vmem:[%s1022 + $0x20] sm:$0xff]
        %v1028 = vld [vmem:[%s1022 + $0x28] sm:$0xff]
        %v1029 = vld [vmem:[%s1022 + $0x30] sm:$0xff]
        %v1030 = vld [vmem:[%s1022 + $0x38] sm:$0xff]
        %v1031 = vld [vmem:[%s1022 + $0x40] sm:$0xff]
        %v1032 = vld [vmem:[%s1022 + $0x48] sm:$0xff]
        %v1033 = vld [vmem:[%s1022 + $0x50] sm:$0xff]
        %v1034 = vld [vmem:[%s1022 + $0x58] sm:$0xff]
        %v1035 = vld [vmem:[%s1022 + $0x60] sm:$0xff]
        %v1036 = vld [vmem:[%s1022 + $0x68] sm:$0xff]
        %v1037 = vld [vmem:[%s1022 + $0x70] sm:$0xff]
        %v1038 = vld [vmem:[%s1022 + $0x78] sm:$0xff]
        %v1039 = vld [vmem:[%s1022 + $0x80] sm:$0xff]
        %v1040 = vld [vmem:[%s1022 + $0x88] sm:$0xff]
        %v1041 = vld [vmem:[%s1022 + $0x90] sm:$0xff]
        %v1042 = vld [vmem:[%s1022 + $0x98] sm:$0xff]
        %v1043 = vld [vmem:[%s1022 + $0xa0] sm:$0xff]
        %v1044 = vld [vmem:[%s1022 + $0xa8] sm:$0xff]
        %v1045 = vld [vmem:[%s1022 + $0xb0] sm:$0xff]
        %v1046 = vld [vmem:[%s1022 + $0xb8] sm:$0xff]
        %v1047 = vpack.c.bf16 %v1020, %v1018
        %v1048 = vpack.c.bf16 %v1021, %v1019
        %v1051 = vrot.slane %v1047, 1
        %v1052 = vrot.slane %v1048, 1
        %v1078 = vunpack.c.l.b16 %v1023
        %v1079 = vunpack.c.h.b16 %v1023
        %v1080 = vunpack.c.l.b16 %v1024
        %v1081 = vunpack.c.h.b16 %v1024
        %v1082 = vunpack.c.l.b16 %v1025
        %v1083 = vunpack.c.h.b16 %v1025
        %v1084 = vunpack.c.l.b16 %v1026
        %v1085 = vunpack.c.h.b16 %v1026
        %v1086 = vunpack.c.l.b16 %v1027
        %v1087 = vunpack.c.h.b16 %v1027
        %v1088 = vunpack.c.l.b16 %v1028
        %v1089 = vunpack.c.h.b16 %v1028
        %v1090 = vunpack.c.l.b16 %v1029
        %v1091 = vunpack.c.h.b16 %v1029
        %v1092 = vunpack.c.l.b16 %v1030
        %v1093 = vunpack.c.h.b16 %v1030
        %v1094 = vunpack.c.l.b16 %v1031
        %v1095 = vunpack.c.h.b16 %v1031
        %v1096 = vunpack.c.l.b16 %v1032
        %v1097 = vunpack.c.h.b16 %v1032
        %v1098 = vunpack.c.l.b16 %v1033
        %v1099 = vunpack.c.h.b16 %v1033
        %v1100 = vunpack.c.l.b16 %v1034
        %v1101 = vunpack.c.h.b16 %v1034
        %v1102 = vunpack.c.l.b16 %v1035
        %v1103 = vunpack.c.h.b16 %v1035
        %v1104 = vunpack.c.l.b16 %v1036
        %v1105 = vunpack.c.h.b16 %v1036
        %v1106 = vunpack.c.l.b16 %v1037
        %v1107 = vunpack.c.h.b16 %v1037
        %v1108 = vunpack.c.l.b16 %v1038
        %v1109 = vunpack.c.h.b16 %v1038
        %v1110 = vunpack.c.l.b16 %v1039
        %v1111 = vunpack.c.h.b16 %v1039
        %v1112 = vunpack.c.l.b16 %v1040
        %v1113 = vunpack.c.h.b16 %v1040
        %v1114 = vunpack.c.l.b16 %v1041
        %v1115 = vunpack.c.h.b16 %v1041
        %v1116 = vunpack.c.l.b16 %v1042
        %v1117 = vunpack.c.h.b16 %v1042
        %v1118 = vunpack.c.l.b16 %v1043
        %v1119 = vunpack.c.h.b16 %v1043
        %v1120 = vunpack.c.l.b16 %v1044
        %v1121 = vunpack.c.h.b16 %v1044
        %v1122 = vunpack.c.l.b16 %v1045
        %v1123 = vunpack.c.h.b16 %v1045
        %v1124 = vunpack.c.l.b16 %v1046
        %v1125 = vunpack.c.h.b16 %v1046
        %v1126 = vpack.c.b16 %v1080, %v1078
        %v1127 = vpack.c.b16 %v1081, %v1079
        %v1128 = vpack.c.b16 %v1084, %v1082
        %v1129 = vpack.c.b16 %v1085, %v1083
        %v1130 = vpack.c.b16 %v1088, %v1086
        %v1131 = vpack.c.b16 %v1089, %v1087
        %v1132 = vpack.c.b16 %v1092, %v1090
        %v1133 = vpack.c.b16 %v1093, %v1091
        %v1134 = vpack.c.b16 %v1096, %v1094
        %v1135 = vpack.c.b16 %v1097, %v1095
        %v1136 = vpack.c.b16 %v1100, %v1098
        %v1137 = vpack.c.b16 %v1101, %v1099
        %v1138 = vpack.c.b16 %v1104, %v1102
        %v1139 = vpack.c.b16 %v1105, %v1103
        %v1140 = vpack.c.b16 %v1108, %v1106
        %v1141 = vpack.c.b16 %v1109, %v1107
        %v1142 = vpack.c.b16 %v1112, %v1110
        %v1143 = vpack.c.b16 %v1113, %v1111
        %v1144 = vpack.c.b16 %v1116, %v1114
        %v1145 = vpack.c.b16 %v1117, %v1115
        %v1146 = vpack.c.b16 %v1120, %v1118
        %v1147 = vpack.c.b16 %v1121, %v1119
        %v1148 = vpack.c.b16 %v1124, %v1122
        %v1149 = vpack.c.b16 %v1125, %v1123
        %v1175 = vsel %vm606, %v1052, 0
        %1177 = vmatprep.subr.bf16.mxu0 %v1141
        %1178 = vmatpush1.bf16.msra.mxu0 %v1140
        %1179 = vmatprep.subr.bf16.mxu0 %v1139
        %1180 = vmatpush1.bf16.msra.mxu0 %v1138
        %1181 = vmatprep.subr.bf16.mxu0 %v1137
        %1182 = vmatpush1.bf16.msra.mxu0 %v1136
        %1183 = vmatprep.subr.bf16.mxu0 %v1135
        %1184 = vmatpush1.bf16.msra.mxu0 %v1134
        %1185 = vmatprep.subr.bf16.mxu0 %v1133
        %1186 = vmatpush1.bf16.msra.mxu0 %v1132
        %1187 = vmatprep.subr.bf16.mxu0 %v1131
        %1188 = vmatpush1.bf16.msra.mxu0 %v1130
        %1189 = vmatprep.subr.bf16.mxu0 %v1129
        %1190 = vmatpush1.bf16.msra.mxu0 %v1128
        %1191 = vmatprep.subr.bf16.mxu0 %v1127
        %1192 = vmatpush1.bf16.msra.mxu0 %v1126
        %1193 = vmatprep.subr.bf16.mxu0 0
        %1194 = vmatpush2.bf16.msra.mxu0 0
        %1195 = vmatprep.subr.bf16.mxu0 0
        %1196 = vmatpush2.bf16.msra.mxu0 0
        %1197 = vmatprep.subr.bf16.mxu0 0
        %1198 = vmatpush2.bf16.msra.mxu0 0
        %1199 = vmatprep.subr.bf16.mxu0 0
        %1200 = vmatpush2.bf16.msra.mxu0 0
        %1201 = vmatprep.subr.bf16.mxu0 %v1149
        %1202 = vmatpush2.bf16.msra.mxu0 %v1148
        %1203 = vmatprep.subr.bf16.mxu0 %v1147
        %1204 = vmatpush2.bf16.msra.mxu0 %v1146
        %1205 = vmatprep.subr.bf16.mxu0 %v1145
        %1206 = vmatpush2.bf16.msra.mxu0 %v1144
        %1207 = vmatprep.subr.bf16.mxu0 %v1143
        %1208 = vmatpush2.bf16.msra.mxu0 %v1142
        %1209 = vmatprep.mubr.bf16.mxu0 %v1175
        %1210 = vmatmul.mubr.bf16.gmra.mxu0 %v1051
        %v1211 = vpop.f32.mrf.mxu0
        %v1212 = vadd.f32 0.0, %v1211
        %v1213 = vpop.f32.mrf.mxu0
        %v1214 = vadd.f32 0.0, %v1213
        %v1215 = vpop.f32.mrf.mxu0
        %v1216 = vadd.f32 0.0, %v1215
        %v1217 = vpop.f32.mrf.mxu0
        %v1218 = vadd.f32 0.0, %v1217
        %1219 = vdwg.mxu0
        %v1220 = vadd.f32 %v1010, %v1212
        %v1221 = vadd.f32 %v1012, %v1214
        %v1222 = vadd.f32 %v1014, %v1216
        %v1223 = vadd.f32 %v1016, %v1218
        %v1224 = vld [vmem:[#allocation2] sm:$0xf8]
        %v1225 = vld [vmem:[#allocation2 + $0x8] sm:$0xf8]
        %v1226 = vld [vmem:[#allocation2 + $0x10] sm:$0x7f]
        %v1227 = vld [vmem:[#allocation2 + $0x18] sm:$0x7f]
        %s1228 = scalar_lea.vmem %s3, 576
        %v1229 = vld [vmem:[%s1228] sm:$0xff]
        %v1230 = vld [vmem:[%s1228 + $0x8] sm:$0xff]
        %v1231 = vld [vmem:[%s1228 + $0x10] sm:$0xff]
        %v1232 = vld [vmem:[%s1228 + $0x18] sm:$0xff]
        %v1233 = vld [vmem:[%s1228 + $0x20] sm:$0xff]
        %v1234 = vld [vmem:[%s1228 + $0x28] sm:$0xff]
        %v1235 = vld [vmem:[%s1228 + $0x30] sm:$0xff]
        %v1236 = vld [vmem:[%s1228 + $0x38] sm:$0xff]
        %v1237 = vld [vmem:[%s1228 + $0x40] sm:$0xff]
        %v1238 = vld [vmem:[%s1228 + $0x48] sm:$0xff]
        %v1239 = vld [vmem:[%s1228 + $0x50] sm:$0xff]
        %v1240 = vld [vmem:[%s1228 + $0x58] sm:$0xff]
        %v1241 = vld [vmem:[%s1228 + $0x60] sm:$0xff]
        %v1242 = vld [vmem:[%s1228 + $0x68] sm:$0xff]
        %v1243 = vld [vmem:[%s1228 + $0x70] sm:$0xff]
        %v1244 = vld [vmem:[%s1228 + $0x78] sm:$0xff]
        %v1245 = vld [vmem:[%s1228 + $0x80] sm:$0xff]
        %v1246 = vld [vmem:[%s1228 + $0x88] sm:$0xff]
        %v1247 = vld [vmem:[%s1228 + $0x90] sm:$0xff]
        %v1248 = vld [vmem:[%s1228 + $0x98] sm:$0xff]
        %v1249 = vld [vmem:[%s1228 + $0xa0] sm:$0xff]
        %v1250 = vld [vmem:[%s1228 + $0xa8] sm:$0xff]
        %v1251 = vld [vmem:[%s1228 + $0xb0] sm:$0xff]
        %v1252 = vld [vmem:[%s1228 + $0xb8] sm:$0xff]
        %v1253 = vpack.c.bf16 %v1226, %v1224
        %v1254 = vpack.c.bf16 %v1227, %v1225
        %v1256 = vshrl.u32 %v1253, 16
        %v1258 = vrot.slane %v1256, 1
        %v1259 = vshll.u32 %v1253, 16
        %v1261 = vrot.slane %v1259, 2
        %v1262 = vor.u32 %v1258, %v1261
        %v1264 = vshrl.u32 %v1254, 16
        %v1266 = vrot.slane %v1264, 1
        %v1267 = vshll.u32 %v1254, 16
        %v1269 = vrot.slane %v1267, 2
        %v1270 = vor.u32 %v1266, %v1269
        %v1296 = vunpack.c.l.b16 %v1229
        %v1297 = vunpack.c.h.b16 %v1229
        %v1298 = vunpack.c.l.b16 %v1230
        %v1299 = vunpack.c.h.b16 %v1230
        %v1300 = vunpack.c.l.b16 %v1231
        %v1301 = vunpack.c.h.b16 %v1231
        %v1302 = vunpack.c.l.b16 %v1232
        %v1303 = vunpack.c.h.b16 %v1232
        %v1304 = vunpack.c.l.b16 %v1233
        %v1305 = vunpack.c.h.b16 %v1233
        %v1306 = vunpack.c.l.b16 %v1234
        %v1307 = vunpack.c.h.b16 %v1234
        %v1308 = vunpack.c.l.b16 %v1235
        %v1309 = vunpack.c.h.b16 %v1235
        %v1310 = vunpack.c.l.b16 %v1236
        %v1311 = vunpack.c.h.b16 %v1236
        %v1312 = vunpack.c.l.b16 %v1237
        %v1313 = vunpack.c.h.b16 %v1237
        %v1314 = vunpack.c.l.b16 %v1238
        %v1315 = vunpack.c.h.b16 %v1238
        %v1316 = vunpack.c.l.b16 %v1239
        %v1317 = vunpack.c.h.b16 %v1239
        %v1318 = vunpack.c.l.b16 %v1240
        %v1319 = vunpack.c.h.b16 %v1240
        %v1320 = vunpack.c.l.b16 %v1241
        %v1321 = vunpack.c.h.b16 %v1241
        %v1322 = vunpack.c.l.b16 %v1242
        %v1323 = vunpack.c.h.b16 %v1242
        %v1324 = vunpack.c.l.b16 %v1243
        %v1325 = vunpack.c.h.b16 %v1243
        %v1326 = vunpack.c.l.b16 %v1244
        %v1327 = vunpack.c.h.b16 %v1244
        %v1328 = vunpack.c.l.b16 %v1245
        %v1329 = vunpack.c.h.b16 %v1245
        %v1330 = vunpack.c.l.b16 %v1246
        %v1331 = vunpack.c.h.b16 %v1246
        %v1332 = vunpack.c.l.b16 %v1247
        %v1333 = vunpack.c.h.b16 %v1247
        %v1334 = vunpack.c.l.b16 %v1248
        %v1335 = vunpack.c.h.b16 %v1248
        %v1336 = vunpack.c.l.b16 %v1249
        %v1337 = vunpack.c.h.b16 %v1249
        %v1338 = vunpack.c.l.b16 %v1250
        %v1339 = vunpack.c.h.b16 %v1250
        %v1340 = vunpack.c.l.b16 %v1251
        %v1341 = vunpack.c.h.b16 %v1251
        %v1342 = vunpack.c.l.b16 %v1252
        %v1343 = vunpack.c.h.b16 %v1252
        %v1344 = vpack.c.b16 %v1298, %v1296
        %v1345 = vpack.c.b16 %v1299, %v1297
        %v1346 = vpack.c.b16 %v1302, %v1300
        %v1347 = vpack.c.b16 %v1303, %v1301
        %v1348 = vpack.c.b16 %v1306, %v1304
        %v1349 = vpack.c.b16 %v1307, %v1305
        %v1350 = vpack.c.b16 %v1310, %v1308
        %v1351 = vpack.c.b16 %v1311, %v1309
        %v1352 = vpack.c.b16 %v1314, %v1312
        %v1353 = vpack.c.b16 %v1315, %v1313
        %v1354 = vpack.c.b16 %v1318, %v1316
        %v1355 = vpack.c.b16 %v1319, %v1317
        %v1356 = vpack.c.b16 %v1322, %v1320
        %v1357 = vpack.c.b16 %v1323, %v1321
        %v1358 = vpack.c.b16 %v1326, %v1324
        %v1359 = vpack.c.b16 %v1327, %v1325
        %v1360 = vpack.c.b16 %v1330, %v1328
        %v1361 = vpack.c.b16 %v1331, %v1329
        %v1362 = vpack.c.b16 %v1334, %v1332
        %v1363 = vpack.c.b16 %v1335, %v1333
        %v1364 = vpack.c.b16 %v1338, %v1336
        %v1365 = vpack.c.b16 %v1339, %v1337
        %v1366 = vpack.c.b16 %v1342, %v1340
        %v1367 = vpack.c.b16 %v1343, %v1341
        %v1393 = vsel %vm606, %v1270, 0
        %1395 = vmatprep.subr.bf16.mxu0 %v1359
        %1396 = vmatpush1.bf16.msra.mxu0 %v1358
        %1397 = vmatprep.subr.bf16.mxu0 %v1357
        %1398 = vmatpush1.bf16.msra.mxu0 %v1356
        %1399 = vmatprep.subr.bf16.mxu0 %v1355
        %1400 = vmatpush1.bf16.msra.mxu0 %v1354
        %1401 = vmatprep.subr.bf16.mxu0 %v1353
        %1402 = vmatpush1.bf16.msra.mxu0 %v1352
        %1403 = vmatprep.subr.bf16.mxu0 %v1351
        %1404 = vmatpush1.bf16.msra.mxu0 %v1350
        %1405 = vmatprep.subr.bf16.mxu0 %v1349
        %1406 = vmatpush1.bf16.msra.mxu0 %v1348
        %1407 = vmatprep.subr.bf16.mxu0 %v1347
        %1408 = vmatpush1.bf16.msra.mxu0 %v1346
        %1409 = vmatprep.subr.bf16.mxu0 %v1345
        %1410 = vmatpush1.bf16.msra.mxu0 %v1344
        %1411 = vmatprep.subr.bf16.mxu0 0
        %1412 = vmatpush2.bf16.msra.mxu0 0
        %1413 = vmatprep.subr.bf16.mxu0 0
        %1414 = vmatpush2.bf16.msra.mxu0 0
        %1415 = vmatprep.subr.bf16.mxu0 0
        %1416 = vmatpush2.bf16.msra.mxu0 0
        %1417 = vmatprep.subr.bf16.mxu0 0
        %1418 = vmatpush2.bf16.msra.mxu0 0
        %1419 = vmatprep.subr.bf16.mxu0 %v1367
        %1420 = vmatpush2.bf16.msra.mxu0 %v1366
        %1421 = vmatprep.subr.bf16.mxu0 %v1365
        %1422 = vmatpush2.bf16.msra.mxu0 %v1364
        %1423 = vmatprep.subr.bf16.mxu0 %v1363
        %1424 = vmatpush2.bf16.msra.mxu0 %v1362
        %1425 = vmatprep.subr.bf16.mxu0 %v1361
        %1426 = vmatpush2.bf16.msra.mxu0 %v1360
        %1427 = vmatprep.mubr.bf16.mxu0 %v1393
        %1428 = vmatmul.mubr.bf16.gmra.mxu0 %v1262
        %v1429 = vpop.f32.mrf.mxu0
        %v1430 = vadd.f32 0.0, %v1429
        %v1431 = vpop.f32.mrf.mxu0
        %v1432 = vadd.f32 0.0, %v1431
        %v1433 = vpop.f32.mrf.mxu0
        %v1434 = vadd.f32 0.0, %v1433
        %v1435 = vpop.f32.mrf.mxu0
        %v1436 = vadd.f32 0.0, %v1435
        %1437 = vdwg.mxu0
        %v1438 = vadd.f32 %v1220, %v1430
        %v1439 = vadd.f32 %v1221, %v1432
        %v1440 = vadd.f32 %v1222, %v1434
        %v1441 = vadd.f32 %v1223, %v1436
        %v1442 = vld [vmem:[#allocation2] sm:$0xf0]
        %v1443 = vld [vmem:[#allocation2 + $0x8] sm:$0xf0]
        %v1444 = vld [vmem:[#allocation2 + $0x10] sm:$0xff]
        %v1445 = vld [vmem:[#allocation2 + $0x18] sm:$0xff]
        %s1446 = scalar_lea.vmem %s3, 768
        %v1447 = vld [vmem:[%s1446] sm:$0xff]
        %v1448 = vld [vmem:[%s1446 + $0x8] sm:$0xff]
        %v1449 = vld [vmem:[%s1446 + $0x10] sm:$0xff]
        %v1450 = vld [vmem:[%s1446 + $0x18] sm:$0xff]
        %v1451 = vld [vmem:[%s1446 + $0x20] sm:$0xff]
        %v1452 = vld [vmem:[%s1446 + $0x28] sm:$0xff]
        %v1453 = vld [vmem:[%s1446 + $0x30] sm:$0xff]
        %v1454 = vld [vmem:[%s1446 + $0x38] sm:$0xff]
        %v1455 = vld [vmem:[%s1446 + $0x40] sm:$0xff]
        %v1456 = vld [vmem:[%s1446 + $0x48] sm:$0xff]
        %v1457 = vld [vmem:[%s1446 + $0x50] sm:$0xff]
        %v1458 = vld [vmem:[%s1446 + $0x58] sm:$0xff]
        %v1459 = vld [vmem:[%s1446 + $0x60] sm:$0xff]
        %v1460 = vld [vmem:[%s1446 + $0x68] sm:$0xff]
        %v1461 = vld [vmem:[%s1446 + $0x70] sm:$0xff]
        %v1462 = vld [vmem:[%s1446 + $0x78] sm:$0xff]
        %v1463 = vld [vmem:[%s1446 + $0x80] sm:$0xff]
        %v1464 = vld [vmem:[%s1446 + $0x88] sm:$0xff]
        %v1465 = vld [vmem:[%s1446 + $0x90] sm:$0xff]
        %v1466 = vld [vmem:[%s1446 + $0x98] sm:$0xff]
        %v1467 = vld [vmem:[%s1446 + $0xa0] sm:$0xff]
        %v1468 = vld [vmem:[%s1446 + $0xa8] sm:$0xff]
        %v1469 = vld [vmem:[%s1446 + $0xb0] sm:$0xff]
        %v1470 = vld [vmem:[%s1446 + $0xb8] sm:$0xff]
        %v1471 = vpack.c.bf16 %v1444, %v1442
        %v1472 = vpack.c.bf16 %v1445, %v1443
        %v1475 = vrot.slane %v1471, 2
        %v1476 = vrot.slane %v1472, 2
        %v1502 = vunpack.c.l.b16 %v1447
        %v1503 = vunpack.c.h.b16 %v1447
        %v1504 = vunpack.c.l.b16 %v1448
        %v1505 = vunpack.c.h.b16 %v1448
        %v1506 = vunpack.c.l.b16 %v1449
        %v1507 = vunpack.c.h.b16 %v1449
        %v1508 = vunpack.c.l.b16 %v1450
        %v1509 = vunpack.c.h.b16 %v1450
        %v1510 = vunpack.c.l.b16 %v1451
        %v1511 = vunpack.c.h.b16 %v1451
        %v1512 = vunpack.c.l.b16 %v1452
        %v1513 = vunpack.c.h.b16 %v1452
        %v1514 = vunpack.c.l.b16 %v1453
        %v1515 = vunpack.c.h.b16 %v1453
        %v1516 = vunpack.c.l.b16 %v1454
        %v1517 = vunpack.c.h.b16 %v1454
        %v1518 = vunpack.c.l.b16 %v1455
        %v1519 = vunpack.c.h.b16 %v1455
        %v1520 = vunpack.c.l.b16 %v1456
        %v1521 = vunpack.c.h.b16 %v1456
        %v1522 = vunpack.c.l.b16 %v1457
        %v1523 = vunpack.c.h.b16 %v1457
        %v1524 = vunpack.c.l.b16 %v1458
        %v1525 = vunpack.c.h.b16 %v1458
        %v1526 = vunpack.c.l.b16 %v1459
        %v1527 = vunpack.c.h.b16 %v1459
        %v1528 = vunpack.c.l.b16 %v1460
        %v1529 = vunpack.c.h.b16 %v1460
        %v1530 = vunpack.c.l.b16 %v1461
        %v1531 = vunpack.c.h.b16 %v1461
        %v1532 = vunpack.c.l.b16 %v1462
        %v1533 = vunpack.c.h.b16 %v1462
        %v1534 = vunpack.c.l.b16 %v1463
        %v1535 = vunpack.c.h.b16 %v1463
        %v1536 = vunpack.c.l.b16 %v1464
        %v1537 = vunpack.c.h.b16 %v1464
        %v1538 = vunpack.c.l.b16 %v1465
        %v1539 = vunpack.c.h.b16 %v1465
        %v1540 = vunpack.c.l.b16 %v1466
        %v1541 = vunpack.c.h.b16 %v1466
        %v1542 = vunpack.c.l.b16 %v1467
        %v1543 = vunpack.c.h.b16 %v1467
        %v1544 = vunpack.c.l.b16 %v1468
        %v1545 = vunpack.c.h.b16 %v1468
        %v1546 = vunpack.c.l.b16 %v1469
        %v1547 = vunpack.c.h.b16 %v1469
        %v1548 = vunpack.c.l.b16 %v1470
        %v1549 = vunpack.c.h.b16 %v1470
        %v1550 = vpack.c.b16 %v1504, %v1502
        %v1551 = vpack.c.b16 %v1505, %v1503
        %v1552 = vpack.c.b16 %v1508, %v1506
        %v1553 = vpack.c.b16 %v1509, %v1507
        %v1554 = vpack.c.b16 %v1512, %v1510
        %v1555 = vpack.c.b16 %v1513, %v1511
        %v1556 = vpack.c.b16 %v1516, %v1514
        %v1557 = vpack.c.b16 %v1517, %v1515
        %v1558 = vpack.c.b16 %v1520, %v1518
        %v1559 = vpack.c.b16 %v1521, %v1519
        %v1560 = vpack.c.b16 %v1524, %v1522
        %v1561 = vpack.c.b16 %v1525, %v1523
        %v1562 = vpack.c.b16 %v1528, %v1526
        %v1563 = vpack.c.b16 %v1529, %v1527
        %v1564 = vpack.c.b16 %v1532, %v1530
        %v1565 = vpack.c.b16 %v1533, %v1531
        %v1566 = vpack.c.b16 %v1536, %v1534
        %v1567 = vpack.c.b16 %v1537, %v1535
        %v1568 = vpack.c.b16 %v1540, %v1538
        %v1569 = vpack.c.b16 %v1541, %v1539
        %v1570 = vpack.c.b16 %v1544, %v1542
        %v1571 = vpack.c.b16 %v1545, %v1543
        %v1572 = vpack.c.b16 %v1548, %v1546
        %v1573 = vpack.c.b16 %v1549, %v1547
        %v1599 = vsel %vm606, %v1476, 0
        %1601 = vmatprep.subr.bf16.mxu0 %v1565
        %1602 = vmatpush1.bf16.msra.mxu0 %v1564
        %1603 = vmatprep.subr.bf16.mxu0 %v1563
        %1604 = vmatpush1.bf16.msra.mxu0 %v1562
        %1605 = vmatprep.subr.bf16.mxu0 %v1561
        %1606 = vmatpush1.bf16.msra.mxu0 %v1560
        %1607 = vmatprep.subr.bf16.mxu0 %v1559
        %1608 = vmatpush1.bf16.msra.mxu0 %v1558
        %1609 = vmatprep.subr.bf16.mxu0 %v1557
        %1610 = vmatpush1.bf16.msra.mxu0 %v1556
        %1611 = vmatprep.subr.bf16.mxu0 %v1555
        %1612 = vmatpush1.bf16.msra.mxu0 %v1554
        %1613 = vmatprep.subr.bf16.mxu0 %v1553
        %1614 = vmatpush1.bf16.msra.mxu0 %v1552
        %1615 = vmatprep.subr.bf16.mxu0 %v1551
        %1616 = vmatpush1.bf16.msra.mxu0 %v1550
        %1617 = vmatprep.subr.bf16.mxu0 0
        %1618 = vmatpush2.bf16.msra.mxu0 0
        %1619 = vmatprep.subr.bf16.mxu0 0
        %1620 = vmatpush2.bf16.msra.mxu0 0
        %1621 = vmatprep.subr.bf16.mxu0 0
        %1622 = vmatpush2.bf16.msra.mxu0 0
        %1623 = vmatprep.subr.bf16.mxu0 0
        %1624 = vmatpush2.bf16.msra.mxu0 0
        %1625 = vmatprep.subr.bf16.mxu0 %v1573
        %1626 = vmatpush2.bf16.msra.mxu0 %v1572
        %1627 = vmatprep.subr.bf16.mxu0 %v1571
        %1628 = vmatpush2.bf16.msra.mxu0 %v1570
        %1629 = vmatprep.subr.bf16.mxu0 %v1569
        %1630 = vmatpush2.bf16.msra.mxu0 %v1568
        %1631 = vmatprep.subr.bf16.mxu0 %v1567
        %1632 = vmatpush2.bf16.msra.mxu0 %v1566
        %1633 = vmatprep.mubr.bf16.mxu0 %v1599
        %1634 = vmatmul.mubr.bf16.gmra.mxu0 %v1475
        %v1635 = vpop.f32.mrf.mxu0
        %v1636 = vadd.f32 0.0, %v1635
        %v1637 = vpop.f32.mrf.mxu0
        %v1638 = vadd.f32 0.0, %v1637
        %v1639 = vpop.f32.mrf.mxu0
        %v1640 = vadd.f32 0.0, %v1639
        %v1641 = vpop.f32.mrf.mxu0
        %v1642 = vadd.f32 0.0, %v1641
        %1643 = vdwg.mxu0
        %v1644 = vadd.f32 %v1438, %v1636
        %v1645 = vadd.f32 %v1439, %v1638
        %v1646 = vadd.f32 %v1440, %v1640
        %v1647 = vadd.f32 %v1441, %v1642
        %v1648 = vld [vmem:[%s4] sm:$0x3]
        %v1650 = vlaneseq
        %v1651 = vshrl.u32 %v1650, 7
        %v1652 = vsub.s32 0, %v1651
        %v1653 = vrot.slane %v1648, %v1652
        %v1654 = vlaneseq
        %v1655 = vshrl.u32 %v1654, 7
        %v1656 = vsub.s32 1, %v1655
        %v1657 = vrot.slane %v1648, %v1656
        %v1660 = vadd.f32 %v1644, %v1653
        %v1661 = vadd.f32 %v1645, %v1657
        %v1662 = vadd.f32 %v1646, %v1653
        %v1663 = vadd.f32 %v1647, %v1657
        %vm1664 = vcmp.ge.f32.partialorder %v1660, 0.0
        %vm1665 = vcmp.ge.f32.partialorder %v1661, 0.0
        %vm1666 = vcmp.ge.f32.partialorder %v1662, 0.0
        %vm1667 = vcmp.ge.f32.partialorder %v1663, 0.0
        %v1668 = vmul.f32 %v572, %v1660
        %v1669 = vmul.f32 %v572, %v1661
        %v1670 = vmul.f32 %v572, %v1662
        %v1671 = vmul.f32 %v572, %v1663
        %v1672 = vsel %vm1664, %v1660, %v1668
        %v1673 = vsel %vm1665, %v1661, %v1669
        %v1674 = vsel %vm1666, %v1662, %v1670
        %v1675 = vsel %vm1667, %v1663, %v1671
        %1676 = vst [vmem:[#allocation3] sm:$0xff] %v1672
        %1677 = vst [vmem:[#allocation3 + $0x8] sm:$0xff] %v1673
        %1678 = vst [vmem:[#allocation3 + $0x10] sm:$0xf] %v1674
        %1679 = vst [vmem:[#allocation3 + $0x18] sm:$0xf] %v1675
        %v1680 = vld [vmem:[%s6] sm:$0xf]
        %v1681 = vld [vmem:[#allocation3] ss:$8 sm:$0x3]
        %s1682 = scalar_lea.vmem [#allocation3], 1
        %v1683 = vld [vmem:[%s1682] ss:$8 sm:$0x3]
        %v1684 = vmax.f32 %v1681, %v1683
        %s1685 = scalar_lea.vmem [#allocation3], 2
        %v1686 = vld [vmem:[%s1685] ss:$8 sm:$0x3]
        %v1687 = vmax.f32 %v1684, %v1686
        %v1688 = vld [vmem:[#allocation5] sm:$0xff]
        %v1689 = vld [vmem:[#allocation5 + $0x8] sm:$0xff]
        %v1690 = vld [vmem:[#allocation5 + $0x10] sm:$0xff]
        %v1691 = vld [vmem:[#allocation5 + $0x18] sm:$0xff]
        %v1692 = vld [vmem:[#allocation5 + $0x20] sm:$0xff]
        %v1693 = vld [vmem:[#allocation5 + $0x28] sm:$0xff]
        %v1694 = vld [vmem:[#allocation5 + $0x30] sm:$0xff]
        %v1695 = vld [vmem:[#allocation5 + $0x38] sm:$0xff]
        %v1696 = vld [vmem:[#allocation5 + $0x40] sm:$0xff]
        %v1697 = vld [vmem:[#allocation5 + $0x48] sm:$0xff]
        %v1698 = vld [vmem:[#allocation5 + $0x50] sm:$0xff]
        %v1699 = vld [vmem:[#allocation5 + $0x58] sm:$0xff]
        %v1700 = vld [vmem:[#allocation5 + $0x60] sm:$0xff]
        %v1701 = vld [vmem:[#allocation5 + $0x68] sm:$0xff]
        %v1702 = vld [vmem:[#allocation5 + $0x70] sm:$0xff]
        %v1703 = vld [vmem:[#allocation5 + $0x78] sm:$0xff]
        %v1704 = vld [vmem:[#allocation5 + $0x80] sm:$0xff]
        %v1705 = vld [vmem:[#allocation5 + $0x88] sm:$0xff]
        %v1706 = vld [vmem:[#allocation5 + $0x90] sm:$0xff]
        %v1707 = vld [vmem:[#allocation5 + $0x98] sm:$0xff]
        %v1708 = vld [vmem:[#allocation5 + $0xa0] sm:$0xff]
        %v1709 = vld [vmem:[#allocation5 + $0xa8] sm:$0xff]
        %v1710 = vld [vmem:[#allocation5 + $0xb0] sm:$0xff]
        %v1711 = vld [vmem:[#allocation5 + $0xb8] sm:$0xff]
        %v1712 = vld [vmem:[#allocation5 + $0xc0] sm:$0xff]
        %v1713 = vld [vmem:[#allocation5 + $0xc8] sm:$0xff]
        %v1714 = vld [vmem:[#allocation5 + $0xd0] sm:$0xff]
        %v1715 = vld [vmem:[#allocation5 + $0xd8] sm:$0xff]
        %v1716 = vld [vmem:[#allocation5 + $0xe0] sm:$0xff]
        %v1717 = vld [vmem:[#allocation5 + $0xe8] sm:$0xff]
        %v1718 = vld [vmem:[#allocation5 + $0xf0] sm:$0xff]
        %v1719 = vld [vmem:[#allocation5 + $0xf8] sm:$0xff]
        %v1720 = vld [vmem:[#allocation5 + $0x100] sm:$0xff]
        %v1721 = vld [vmem:[#allocation5 + $0x108] sm:$0xff]
        %v1722 = vld [vmem:[#allocation5 + $0x110] sm:$0xff]
        %v1723 = vld [vmem:[#allocation5 + $0x118] sm:$0xff]
        %v1724 = vld [vmem:[#allocation5 + $0x120] sm:$0xff]
        %v1725 = vld [vmem:[#allocation5 + $0x128] sm:$0xff]
        %v1726 = vld [vmem:[#allocation5 + $0x130] sm:$0xff]
        %v1727 = vld [vmem:[#allocation5 + $0x138] sm:$0xff]
        %v1728 = vld [vmem:[#allocation5 + $0x140] sm:$0xff]
        %v1729 = vld [vmem:[#allocation5 + $0x148] sm:$0xff]
        %v1730 = vld [vmem:[#allocation5 + $0x150] sm:$0xff]
        %v1731 = vld [vmem:[#allocation5 + $0x158] sm:$0xff]
        %v1732 = vld [vmem:[#allocation5 + $0x160] sm:$0xff]
        %v1733 = vld [vmem:[#allocation5 + $0x168] sm:$0xff]
        %v1734 = vld [vmem:[#allocation5 + $0x170] sm:$0xff]
        %v1735 = vld [vmem:[#allocation5 + $0x178] sm:$0xff]
        %v1736 = vld [vmem:[#allocation5 + $0x180] sm:$0xff]
        %v1737 = vld [vmem:[#allocation5 + $0x188] sm:$0xff]
        %v1738 = vld [vmem:[#allocation5 + $0x190] sm:$0xff]
        %v1739 = vld [vmem:[#allocation5 + $0x198] sm:$0xff]
        %v1740 = vld [vmem:[#allocation5 + $0x1a0] sm:$0xff]
        %v1741 = vld [vmem:[#allocation5 + $0x1a8] sm:$0xff]
        %v1742 = vld [vmem:[#allocation5 + $0x1b0] sm:$0xff]
        %v1743 = vld [vmem:[#allocation5 + $0x1b8] sm:$0xff]
        %v1744 = vld [vmem:[#allocation5 + $0x1c0] sm:$0xff]
        %v1745 = vld [vmem:[#allocation5 + $0x1c8] sm:$0xff]
        %v1746 = vld [vmem:[#allocation5 + $0x1d0] sm:$0xff]
        %v1747 = vld [vmem:[#allocation5 + $0x1d8] sm:$0xff]
        %v1748 = vld [vmem:[#allocation5 + $0x1e0] sm:$0xff]
        %v1749 = vld [vmem:[#allocation5 + $0x1e8] sm:$0xff]
        %v1750 = vld [vmem:[#allocation5 + $0x1f0] sm:$0xff]
        %v1751 = vld [vmem:[#allocation5 + $0x1f8] sm:$0xff]
        %v1753 = vlaneseq
        %v1754 = vshrl.u32 %v1753, 7
        %v1755 = vsub.s32 0, %v1754
        %v1756 = vrot.slane %v1687, %v1755
        %v1757 = vlaneseq
        %v1758 = vshrl.u32 %v1757, 7
        %v1759 = vsub.s32 1, %v1758
        %v1760 = vrot.slane %v1687, %v1759
        %v1763 = vpack.c.bf16 %v1756, %v1756
        %v1764 = vpack.c.bf16 %v1760, %v1760
        %v1829 = vunpack.c.l.b16 %v1688
        %v1830 = vunpack.c.h.b16 %v1688
        %v1831 = vunpack.c.l.b16 %v1689
        %v1832 = vunpack.c.h.b16 %v1689
        %v1833 = vunpack.c.l.b16 %v1690
        %v1834 = vunpack.c.h.b16 %v1690
        %v1835 = vunpack.c.l.b16 %v1691
        %v1836 = vunpack.c.h.b16 %v1691
        %v1837 = vunpack.c.l.b16 %v1692
        %v1838 = vunpack.c.h.b16 %v1692
        %v1839 = vunpack.c.l.b16 %v1693
        %v1840 = vunpack.c.h.b16 %v1693
        %v1841 = vunpack.c.l.b16 %v1694
        %v1842 = vunpack.c.h.b16 %v1694
        %v1843 = vunpack.c.l.b16 %v1695
        %v1844 = vunpack.c.h.b16 %v1695
        %v1845 = vunpack.c.l.b16 %v1696
        %v1846 = vunpack.c.h.b16 %v1696
        %v1847 = vunpack.c.l.b16 %v1697
        %v1848 = vunpack.c.h.b16 %v1697
        %v1849 = vunpack.c.l.b16 %v1698
        %v1850 = vunpack.c.h.b16 %v1698
        %v1851 = vunpack.c.l.b16 %v1699
        %v1852 = vunpack.c.h.b16 %v1699
        %v1853 = vunpack.c.l.b16 %v1700
        %v1854 = vunpack.c.h.b16 %v1700
        %v1855 = vunpack.c.l.b16 %v1701
        %v1856 = vunpack.c.h.b16 %v1701
        %v1857 = vunpack.c.l.b16 %v1702
        %v1858 = vunpack.c.h.b16 %v1702
        %v1859 = vunpack.c.l.b16 %v1703
        %v1860 = vunpack.c.h.b16 %v1703
        %v1861 = vunpack.c.l.b16 %v1704
        %v1862 = vunpack.c.h.b16 %v1704
        %v1863 = vunpack.c.l.b16 %v1705
        %v1864 = vunpack.c.h.b16 %v1705
        %v1865 = vunpack.c.l.b16 %v1706
        %v1866 = vunpack.c.h.b16 %v1706
        %v1867 = vunpack.c.l.b16 %v1707
        %v1868 = vunpack.c.h.b16 %v1707
        %v1869 = vunpack.c.l.b16 %v1708
        %v1870 = vunpack.c.h.b16 %v1708
        %v1871 = vunpack.c.l.b16 %v1709
        %v1872 = vunpack.c.h.b16 %v1709
        %v1873 = vunpack.c.l.b16 %v1710
        %v1874 = vunpack.c.h.b16 %v1710
        %v1875 = vunpack.c.l.b16 %v1711
        %v1876 = vunpack.c.h.b16 %v1711
        %v1877 = vunpack.c.l.b16 %v1712
        %v1878 = vunpack.c.h.b16 %v1712
        %v1879 = vunpack.c.l.b16 %v1713
        %v1880 = vunpack.c.h.b16 %v1713
        %v1881 = vunpack.c.l.b16 %v1714
        %v1882 = vunpack.c.h.b16 %v1714
        %v1883 = vunpack.c.l.b16 %v1715
        %v1884 = vunpack.c.h.b16 %v1715
        %v1885 = vunpack.c.l.b16 %v1716
        %v1886 = vunpack.c.h.b16 %v1716
        %v1887 = vunpack.c.l.b16 %v1717
        %v1888 = vunpack.c.h.b16 %v1717
        %v1889 = vunpack.c.l.b16 %v1718
        %v1890 = vunpack.c.h.b16 %v1718
        %v1891 = vunpack.c.l.b16 %v1719
        %v1892 = vunpack.c.h.b16 %v1719
        %v1893 = vunpack.c.l.b16 %v1720
        %v1894 = vunpack.c.h.b16 %v1720
        %v1895 = vunpack.c.l.b16 %v1721
        %v1896 = vunpack.c.h.b16 %v1721
        %v1897 = vunpack.c.l.b16 %v1722
        %v1898 = vunpack.c.h.b16 %v1722
        %v1899 = vunpack.c.l.b16 %v1723
        %v1900 = vunpack.c.h.b16 %v1723
        %v1901 = vunpack.c.l.b16 %v1724
        %v1902 = vunpack.c.h.b16 %v1724
        %v1903 = vunpack.c.l.b16 %v1725
        %v1904 = vunpack.c.h.b16 %v1725
        %v1905 = vunpack.c.l.b16 %v1726
        %v1906 = vunpack.c.h.b16 %v1726
        %v1907 = vunpack.c.l.b16 %v1727
        %v1908 = vunpack.c.h.b16 %v1727
        %v1909 = vunpack.c.l.b16 %v1728
        %v1910 = vunpack.c.h.b16 %v1728
        %v1911 = vunpack.c.l.b16 %v1729
        %v1912 = vunpack.c.h.b16 %v1729
        %v1913 = vunpack.c.l.b16 %v1730
        %v1914 = vunpack.c.h.b16 %v1730
        %v1915 = vunpack.c.l.b16 %v1731
        %v1916 = vunpack.c.h.b16 %v1731
        %v1917 = vunpack.c.l.b16 %v1732
        %v1918 = vunpack.c.h.b16 %v1732
        %v1919 = vunpack.c.l.b16 %v1733
        %v1920 = vunpack.c.h.b16 %v1733
        %v1921 = vunpack.c.l.b16 %v1734
        %v1922 = vunpack.c.h.b16 %v1734
        %v1923 = vunpack.c.l.b16 %v1735
        %v1924 = vunpack.c.h.b16 %v1735
        %v1925 = vunpack.c.l.b16 %v1736
        %v1926 = vunpack.c.h.b16 %v1736
        %v1927 = vunpack.c.l.b16 %v1737
        %v1928 = vunpack.c.h.b16 %v1737
        %v1929 = vunpack.c.l.b16 %v1738
        %v1930 = vunpack.c.h.b16 %v1738
        %v1931 = vunpack.c.l.b16 %v1739
        %v1932 = vunpack.c.h.b16 %v1739
        %v1933 = vunpack.c.l.b16 %v1740
        %v1934 = vunpack.c.h.b16 %v1740
        %v1935 = vunpack.c.l.b16 %v1741
        %v1936 = vunpack.c.h.b16 %v1741
        %v1937 = vunpack.c.l.b16 %v1742
        %v1938 = vunpack.c.h.b16 %v1742
        %v1939 = vunpack.c.l.b16 %v1743
        %v1940 = vunpack.c.h.b16 %v1743
        %v1941 = vunpack.c.l.b16 %v1744
        %v1942 = vunpack.c.h.b16 %v1744
        %v1943 = vunpack.c.l.b16 %v1745
        %v1944 = vunpack.c.h.b16 %v1745
        %v1945 = vunpack.c.l.b16 %v1746
        %v1946 = vunpack.c.h.b16 %v1746
        %v1947 = vunpack.c.l.b16 %v1747
        %v1948 = vunpack.c.h.b16 %v1747
        %v1949 = vunpack.c.l.b16 %v1748
        %v1950 = vunpack.c.h.b16 %v1748
        %v1951 = vunpack.c.l.b16 %v1749
        %v1952 = vunpack.c.h.b16 %v1749
        %v1953 = vunpack.c.l.b16 %v1750
        %v1954 = vunpack.c.h.b16 %v1750
        %v1955 = vunpack.c.l.b16 %v1751
        %v1956 = vunpack.c.h.b16 %v1751
        %v1957 = vpack.c.b16 %v1833, %v1829
        %v1958 = vpack.c.b16 %v1834, %v1830
        %v1959 = vpack.c.b16 %v1835, %v1831
        %v1960 = vpack.c.b16 %v1836, %v1832
        %v1961 = vpack.c.b16 %v1841, %v1837
        %v1962 = vpack.c.b16 %v1842, %v1838
        %v1963 = vpack.c.b16 %v1843, %v1839
        %v1964 = vpack.c.b16 %v1844, %v1840
        %v1965 = vpack.c.b16 %v1849, %v1845
        %v1966 = vpack.c.b16 %v1850, %v1846
        %v1967 = vpack.c.b16 %v1851, %v1847
        %v1968 = vpack.c.b16 %v1852, %v1848
        %v1969 = vpack.c.b16 %v1857, %v1853
        %v1970 = vpack.c.b16 %v1858, %v1854
        %v1971 = vpack.c.b16 %v1859, %v1855
        %v1972 = vpack.c.b16 %v1860, %v1856
        %v1973 = vpack.c.b16 %v1865, %v1861
        %v1974 = vpack.c.b16 %v1866, %v1862
        %v1975 = vpack.c.b16 %v1867, %v1863
        %v1976 = vpack.c.b16 %v1868, %v1864
        %v1977 = vpack.c.b16 %v1873, %v1869
        %v1978 = vpack.c.b16 %v1874, %v1870
        %v1979 = vpack.c.b16 %v1875, %v1871
        %v1980 = vpack.c.b16 %v1876, %v1872
        %v1981 = vpack.c.b16 %v1881, %v1877
        %v1982 = vpack.c.b16 %v1882, %v1878
        %v1983 = vpack.c.b16 %v1883, %v1879
        %v1984 = vpack.c.b16 %v1884, %v1880
        %v1985 = vpack.c.b16 %v1889, %v1885
        %v1986 = vpack.c.b16 %v1890, %v1886
        %v1987 = vpack.c.b16 %v1891, %v1887
        %v1988 = vpack.c.b16 %v1892, %v1888
        %v1989 = vpack.c.b16 %v1897, %v1893
        %v1990 = vpack.c.b16 %v1898, %v1894
        %v1991 = vpack.c.b16 %v1899, %v1895
        %v1992 = vpack.c.b16 %v1900, %v1896
        %v1993 = vpack.c.b16 %v1905, %v1901
        %v1994 = vpack.c.b16 %v1906, %v1902
        %v1995 = vpack.c.b16 %v1907, %v1903
        %v1996 = vpack.c.b16 %v1908, %v1904
        %v1997 = vpack.c.b16 %v1913, %v1909
        %v1998 = vpack.c.b16 %v1914, %v1910
        %v1999 = vpack.c.b16 %v1915, %v1911
        %v2000 = vpack.c.b16 %v1916, %v1912
        %v2001 = vpack.c.b16 %v1921, %v1917
        %v2002 = vpack.c.b16 %v1922, %v1918
        %v2003 = vpack.c.b16 %v1923, %v1919
        %v2004 = vpack.c.b16 %v1924, %v1920
        %v2005 = vpack.c.b16 %v1929, %v1925
        %v2006 = vpack.c.b16 %v1930, %v1926
        %v2007 = vpack.c.b16 %v1931, %v1927
        %v2008 = vpack.c.b16 %v1932, %v1928
        %v2009 = vpack.c.b16 %v1937, %v1933
        %v2010 = vpack.c.b16 %v1938, %v1934
        %v2011 = vpack.c.b16 %v1939, %v1935
        %v2012 = vpack.c.b16 %v1940, %v1936
        %v2013 = vpack.c.b16 %v1945, %v1941
        %v2014 = vpack.c.b16 %v1946, %v1942
        %v2015 = vpack.c.b16 %v1947, %v1943
        %v2016 = vpack.c.b16 %v1948, %v1944
        %v2017 = vpack.c.b16 %v1953, %v1949
        %v2018 = vpack.c.b16 %v1954, %v1950
        %v2019 = vpack.c.b16 %v1955, %v1951
        %v2020 = vpack.c.b16 %v1956, %v1952
        %2085 = vmatprep.subr.bf16.mxu0 %v1986
        %2086 = vmatpush1.bf16.msra.mxu0 %v1985
        %2087 = vmatprep.subr.bf16.mxu0 %v1982
        %2088 = vmatpush1.bf16.msra.mxu0 %v1981
        %2089 = vmatprep.subr.bf16.mxu0 %v1978
        %2090 = vmatpush1.bf16.msra.mxu0 %v1977
        %2091 = vmatprep.subr.bf16.mxu0 %v1974
        %2092 = vmatpush1.bf16.msra.mxu0 %v1973
        %2093 = vmatprep.subr.bf16.mxu0 %v1970
        %2094 = vmatpush1.bf16.msra.mxu0 %v1969
        %2095 = vmatprep.subr.bf16.mxu0 %v1966
        %2096 = vmatpush1.bf16.msra.mxu0 %v1965
        %2097 = vmatprep.subr.bf16.mxu0 %v1962
        %2098 = vmatpush1.bf16.msra.mxu0 %v1961
        %2099 = vmatprep.subr.bf16.mxu0 %v1958
        %2100 = vmatpush1.bf16.msra.mxu0 %v1957
        %2101 = vmatprep.subr.bf16.mxu0 %v2018
        %2102 = vmatpush2.bf16.msra.mxu0 %v2017
        %2103 = vmatprep.subr.bf16.mxu0 %v2014
        %2104 = vmatpush2.bf16.msra.mxu0 %v2013
        %2105 = vmatprep.subr.bf16.mxu0 %v2010
        %2106 = vmatpush2.bf16.msra.mxu0 %v2009
        %2107 = vmatprep.subr.bf16.mxu0 %v2006
        %2108 = vmatpush2.bf16.msra.mxu0 %v2005
        %2109 = vmatprep.subr.bf16.mxu0 %v2002
        %2110 = vmatpush2.bf16.msra.mxu0 %v2001
        %2111 = vmatprep.subr.bf16.mxu0 %v1998
        %2112 = vmatpush2.bf16.msra.mxu0 %v1997
        %2113 = vmatprep.subr.bf16.mxu0 %v1994
        %2114 = vmatpush2.bf16.msra.mxu0 %v1993
        %2115 = vmatprep.subr.bf16.mxu0 %v1990
        %2116 = vmatpush2.bf16.msra.mxu0 %v1989
        %2117 = vmatprep.mubr.bf16.mxu0 %v1764
        %2118 = vmatmul.mubr.bf16.gmra.mxu0 %v1763
        %v2119 = vpop.f32.mrf.mxu0
        %v2120 = vadd.f32 0.0, %v2119
        %v2121 = vpop.f32.mrf.mxu0
        %v2122 = vadd.f32 0.0, %v2121
        %v2123 = vpop.f32.mrf.mxu0
        %v2124 = vpop.f32.mrf.mxu0
        %2125 = vdwg.mxu0
        %2126 = vmatprep.subr.bf16.mxu0 %v1988
        %2127 = vmatpush1.bf16.msra.mxu0 %v1987
        %2128 = vmatprep.subr.bf16.mxu0 %v1984
        %2129 = vmatpush1.bf16.msra.mxu0 %v1983
        %2130 = vmatprep.subr.bf16.mxu0 %v1980
        %2131 = vmatpush1.bf16.msra.mxu0 %v1979
        %2132 = vmatprep.subr.bf16.mxu0 %v1976
        %2133 = vmatpush1.bf16.msra.mxu0 %v1975
        %2134 = vmatprep.subr.bf16.mxu0 %v1972
        %2135 = vmatpush1.bf16.msra.mxu0 %v1971
        %2136 = vmatprep.subr.bf16.mxu0 %v1968
        %2137 = vmatpush1.bf16.msra.mxu0 %v1967
        %2138 = vmatprep.subr.bf16.mxu0 %v1964
        %2139 = vmatpush1.bf16.msra.mxu0 %v1963
        %2140 = vmatprep.subr.bf16.mxu0 %v1960
        %2141 = vmatpush1.bf16.msra.mxu0 %v1959
        %2142 = vmatprep.subr.bf16.mxu0 %v2020
        %2143 = vmatpush2.bf16.msra.mxu0 %v2019
        %2144 = vmatprep.subr.bf16.mxu0 %v2016
        %2145 = vmatpush2.bf16.msra.mxu0 %v2015
        %2146 = vmatprep.subr.bf16.mxu0 %v2012
        %2147 = vmatpush2.bf16.msra.mxu0 %v2011
        %2148 = vmatprep.subr.bf16.mxu0 %v2008
        %2149 = vmatpush2.bf16.msra.mxu0 %v2007
        %2150 = vmatprep.subr.bf16.mxu0 %v2004
        %2151 = vmatpush2.bf16.msra.mxu0 %v2003
        %2152 = vmatprep.subr.bf16.mxu0 %v2000
        %2153 = vmatpush2.bf16.msra.mxu0 %v1999
        %2154 = vmatprep.subr.bf16.mxu0 %v1996
        %2155 = vmatpush2.bf16.msra.mxu0 %v1995
        %2156 = vmatprep.subr.bf16.mxu0 %v1992
        %2157 = vmatpush2.bf16.msra.mxu0 %v1991
        %2158 = vmatprep.mubr.bf16.mxu0 %v1764
        %2159 = vmatmul.mubr.bf16.gmra.mxu0 %v1763
        %v2160 = vpop.f32.mrf.mxu0
        %v2161 = vadd.f32 0.0, %v2160
        %v2162 = vpop.f32.mrf.mxu0
        %v2163 = vadd.f32 0.0, %v2162
        %v2164 = vpop.f32.mrf.mxu0
        %v2165 = vpop.f32.mrf.mxu0
        %2166 = vdwg.mxu0
        %v2171 = vcombine.low %v2120, %v2122
        %v2172 = vcombine.low %v2161, %v2163
        %v2174 = vunpack.c.l.s4 1966171168
        %v2175 = vunpack.c.0.s8 %v2174
        %v2176 = vlaneseq
        %v2177 = vshrl.u32 %v2176, 7
        %v2178 = vsub.s32 %v2175, %v2177
        %v2179 = vrot.slane %v2171, %v2178
        %v2181 = vunpack.c.l.s4 1966171168
        %v2182 = vunpack.c.0.s8 %v2181
        %v2183 = vlaneseq
        %v2184 = vshrl.u32 %v2183, 7
        %v2185 = vsub.s32 %v2182, %v2184
        %v2186 = vrot.slane %v2172, %v2185
        %v2187 = vcombine.low %v2179, %v2186
        %v2189 = vunpack.c.l.s4 1966171168
        %v2190 = vunpack.c.0.s8 %v2189
        %v2191 = vlaneseq
        %v2192 = vshrl.u32 %v2191, 7
        %v2193 = vsub.s32 %v2190, %v2192
        %v2194 = vrot.slane %v2187, %v2193
        %v2196 = vadd.f32 %v1680, %v2194
        %s2197 = scalar_lea.vmem [#allocation3], 3
        %v2198 = vld [vmem:[%s2197] ss:$8 sm:$0x3]
        %s2199 = scalar_lea.vmem [#allocation3], 4
        %v2200 = vld [vmem:[%s2199] ss:$8 sm:$0x3]
        %v2201 = vmax.f32 %v2198, %v2200
        %s2202 = scalar_lea.vmem [#allocation3], 5
        %v2203 = vld [vmem:[%s2202] ss:$8 sm:$0x3]
        %v2204 = vmax.f32 %v2201, %v2203
        %s2205 = scalar_lea.vmem [#allocation5], 512
        %v2206 = vld [vmem:[%s2205] sm:$0xff]
        %v2207 = vld [vmem:[%s2205 + $0x8] sm:$0xff]
        %v2208 = vld [vmem:[%s2205 + $0x10] sm:$0xff]
        %v2209 = vld [vmem:[%s2205 + $0x18] sm:$0xff]
        %v2210 = vld [vmem:[%s2205 + $0x20] sm:$0xff]
        %v2211 = vld [vmem:[%s2205 + $0x28] sm:$0xff]
        %v2212 = vld [vmem:[%s2205 + $0x30] sm:$0xff]
        %v2213 = vld [vmem:[%s2205 + $0x38] sm:$0xff]
        %v2214 = vld [vmem:[%s2205 + $0x40] sm:$0xff]
        %v2215 = vld [vmem:[%s2205 + $0x48] sm:$0xff]
        %v2216 = vld [vmem:[%s2205 + $0x50] sm:$0xff]
        %v2217 = vld [vmem:[%s2205 + $0x58] sm:$0xff]
        %v2218 = vld [vmem:[%s2205 + $0x60] sm:$0xff]
        %v2219 = vld [vmem:[%s2205 + $0x68] sm:$0xff]
        %v2220 = vld [vmem:[%s2205 + $0x70] sm:$0xff]
        %v2221 = vld [vmem:[%s2205 + $0x78] sm:$0xff]
        %v2222 = vld [vmem:[%s2205 + $0x80] sm:$0xff]
        %v2223 = vld [vmem:[%s2205 + $0x88] sm:$0xff]
        %v2224 = vld [vmem:[%s2205 + $0x90] sm:$0xff]
        %v2225 = vld [vmem:[%s2205 + $0x98] sm:$0xff]
        %v2226 = vld [vmem:[%s2205 + $0xa0] sm:$0xff]
        %v2227 = vld [vmem:[%s2205 + $0xa8] sm:$0xff]
        %v2228 = vld [vmem:[%s2205 + $0xb0] sm:$0xff]
        %v2229 = vld [vmem:[%s2205 + $0xb8] sm:$0xff]
        %v2230 = vld [vmem:[%s2205 + $0xc0] sm:$0xff]
        %v2231 = vld [vmem:[%s2205 + $0xc8] sm:$0xff]
        %v2232 = vld [vmem:[%s2205 + $0xd0] sm:$0xff]
        %v2233 = vld [vmem:[%s2205 + $0xd8] sm:$0xff]
        %v2234 = vld [vmem:[%s2205 + $0xe0] sm:$0xff]
        %v2235 = vld [vmem:[%s2205 + $0xe8] sm:$0xff]
        %v2236 = vld [vmem:[%s2205 + $0xf0] sm:$0xff]
        %v2237 = vld [vmem:[%s2205 + $0xf8] sm:$0xff]
        %v2238 = vld [vmem:[%s2205 + $0x100] sm:$0xff]
        %v2239 = vld [vmem:[%s2205 + $0x108] sm:$0xff]
        %v2240 = vld [vmem:[%s2205 + $0x110] sm:$0xff]
        %v2241 = vld [vmem:[%s2205 + $0x118] sm:$0xff]
        %v2242 = vld [vmem:[%s2205 + $0x120] sm:$0xff]
        %v2243 = vld [vmem:[%s2205 + $0x128] sm:$0xff]
        %v2244 = vld [vmem:[%s2205 + $0x130] sm:$0xff]
        %v2245 = vld [vmem:[%s2205 + $0x138] sm:$0xff]
        %v2246 = vld [vmem:[%s2205 + $0x140] sm:$0xff]
        %v2247 = vld [vmem:[%s2205 + $0x148] sm:$0xff]
        %v2248 = vld [vmem:[%s2205 + $0x150] sm:$0xff]
        %v2249 = vld [vmem:[%s2205 + $0x158] sm:$0xff]
        %v2250 = vld [vmem:[%s2205 + $0x160] sm:$0xff]
        %v2251 = vld [vmem:[%s2205 + $0x168] sm:$0xff]
        %v2252 = vld [vmem:[%s2205 + $0x170] sm:$0xff]
        %v2253 = vld [vmem:[%s2205 + $0x178] sm:$0xff]
        %v2254 = vld [vmem:[%s2205 + $0x180] sm:$0xff]
        %v2255 = vld [vmem:[%s2205 + $0x188] sm:$0xff]
        %v2256 = vld [vmem:[%s2205 + $0x190] sm:$0xff]
        %v2257 = vld [vmem:[%s2205 + $0x198] sm:$0xff]
        %v2258 = vld [vmem:[%s2205 + $0x1a0] sm:$0xff]
        %v2259 = vld [vmem:[%s2205 + $0x1a8] sm:$0xff]
        %v2260 = vld [vmem:[%s2205 + $0x1b0] sm:$0xff]
        %v2261 = vld [vmem:[%s2205 + $0x1b8] sm:$0xff]
        %v2262 = vld [vmem:[%s2205 + $0x1c0] sm:$0xff]
        %v2263 = vld [vmem:[%s2205 + $0x1c8] sm:$0xff]
        %v2264 = vld [vmem:[%s2205 + $0x1d0] sm:$0xff]
        %v2265 = vld [vmem:[%s2205 + $0x1d8] sm:$0xff]
        %v2266 = vld [vmem:[%s2205 + $0x1e0] sm:$0xff]
        %v2267 = vld [vmem:[%s2205 + $0x1e8] sm:$0xff]
        %v2268 = vld [vmem:[%s2205 + $0x1f0] sm:$0xff]
        %v2269 = vld [vmem:[%s2205 + $0x1f8] sm:$0xff]
        %v2271 = vlaneseq
        %v2272 = vshrl.u32 %v2271, 7
        %v2273 = vsub.s32 0, %v2272
        %v2274 = vrot.slane %v2204, %v2273
        %v2275 = vlaneseq
        %v2276 = vshrl.u32 %v2275, 7
        %v2277 = vsub.s32 1, %v2276
        %v2278 = vrot.slane %v2204, %v2277
        %v2281 = vpack.c.bf16 %v2274, %v2274
        %v2282 = vpack.c.bf16 %v2278, %v2278
        %v2347 = vunpack.c.l.b16 %v2206
        %v2348 = vunpack.c.h.b16 %v2206
        %v2349 = vunpack.c.l.b16 %v2207
        %v2350 = vunpack.c.h.b16 %v2207
        %v2351 = vunpack.c.l.b16 %v2208
        %v2352 = vunpack.c.h.b16 %v2208
        %v2353 = vunpack.c.l.b16 %v2209
        %v2354 = vunpack.c.h.b16 %v2209
        %v2355 = vunpack.c.l.b16 %v2210
        %v2356 = vunpack.c.h.b16 %v2210
        %v2357 = vunpack.c.l.b16 %v2211
        %v2358 = vunpack.c.h.b16 %v2211
        %v2359 = vunpack.c.l.b16 %v2212
        %v2360 = vunpack.c.h.b16 %v2212
        %v2361 = vunpack.c.l.b16 %v2213
        %v2362 = vunpack.c.h.b16 %v2213
        %v2363 = vunpack.c.l.b16 %v2214
        %v2364 = vunpack.c.h.b16 %v2214
        %v2365 = vunpack.c.l.b16 %v2215
        %v2366 = vunpack.c.h.b16 %v2215
        %v2367 = vunpack.c.l.b16 %v2216
        %v2368 = vunpack.c.h.b16 %v2216
        %v2369 = vunpack.c.l.b16 %v2217
        %v2370 = vunpack.c.h.b16 %v2217
        %v2371 = vunpack.c.l.b16 %v2218
        %v2372 = vunpack.c.h.b16 %v2218
        %v2373 = vunpack.c.l.b16 %v2219
        %v2374 = vunpack.c.h.b16 %v2219
        %v2375 = vunpack.c.l.b16 %v2220
        %v2376 = vunpack.c.h.b16 %v2220
        %v2377 = vunpack.c.l.b16 %v2221
        %v2378 = vunpack.c.h.b16 %v2221
        %v2379 = vunpack.c.l.b16 %v2222
        %v2380 = vunpack.c.h.b16 %v2222
        %v2381 = vunpack.c.l.b16 %v2223
        %v2382 = vunpack.c.h.b16 %v2223
        %v2383 = vunpack.c.l.b16 %v2224
        %v2384 = vunpack.c.h.b16 %v2224
        %v2385 = vunpack.c.l.b16 %v2225
        %v2386 = vunpack.c.h.b16 %v2225
        %v2387 = vunpack.c.l.b16 %v2226
        %v2388 = vunpack.c.h.b16 %v2226
        %v2389 = vunpack.c.l.b16 %v2227
        %v2390 = vunpack.c.h.b16 %v2227
        %v2391 = vunpack.c.l.b16 %v2228
        %v2392 = vunpack.c.h.b16 %v2228
        %v2393 = vunpack.c.l.b16 %v2229
        %v2394 = vunpack.c.h.b16 %v2229
        %v2395 = vunpack.c.l.b16 %v2230
        %v2396 = vunpack.c.h.b16 %v2230
        %v2397 = vunpack.c.l.b16 %v2231
        %v2398 = vunpack.c.h.b16 %v2231
        %v2399 = vunpack.c.l.b16 %v2232
        %v2400 = vunpack.c.h.b16 %v2232
        %v2401 = vunpack.c.l.b16 %v2233
        %v2402 = vunpack.c.h.b16 %v2233
        %v2403 = vunpack.c.l.b16 %v2234
        %v2404 = vunpack.c.h.b16 %v2234
        %v2405 = vunpack.c.l.b16 %v2235
        %v2406 = vunpack.c.h.b16 %v2235
        %v2407 = vunpack.c.l.b16 %v2236
        %v2408 = vunpack.c.h.b16 %v2236
        %v2409 = vunpack.c.l.b16 %v2237
        %v2410 = vunpack.c.h.b16 %v2237
        %v2411 = vunpack.c.l.b16 %v2238
        %v2412 = vunpack.c.h.b16 %v2238
        %v2413 = vunpack.c.l.b16 %v2239
        %v2414 = vunpack.c.h.b16 %v2239
        %v2415 = vunpack.c.l.b16 %v2240
        %v2416 = vunpack.c.h.b16 %v2240
        %v2417 = vunpack.c.l.b16 %v2241
        %v2418 = vunpack.c.h.b16 %v2241
        %v2419 = vunpack.c.l.b16 %v2242
        %v2420 = vunpack.c.h.b16 %v2242
        %v2421 = vunpack.c.l.b16 %v2243
        %v2422 = vunpack.c.h.b16 %v2243
        %v2423 = vunpack.c.l.b16 %v2244
        %v2424 = vunpack.c.h.b16 %v2244
        %v2425 = vunpack.c.l.b16 %v2245
        %v2426 = vunpack.c.h.b16 %v2245
        %v2427 = vunpack.c.l.b16 %v2246
        %v2428 = vunpack.c.h.b16 %v2246
        %v2429 = vunpack.c.l.b16 %v2247
        %v2430 = vunpack.c.h.b16 %v2247
        %v2431 = vunpack.c.l.b16 %v2248
        %v2432 = vunpack.c.h.b16 %v2248
        %v2433 = vunpack.c.l.b16 %v2249
        %v2434 = vunpack.c.h.b16 %v2249
        %v2435 = vunpack.c.l.b16 %v2250
        %v2436 = vunpack.c.h.b16 %v2250
        %v2437 = vunpack.c.l.b16 %v2251
        %v2438 = vunpack.c.h.b16 %v2251
        %v2439 = vunpack.c.l.b16 %v2252
        %v2440 = vunpack.c.h.b16 %v2252
        %v2441 = vunpack.c.l.b16 %v2253
        %v2442 = vunpack.c.h.b16 %v2253
        %v2443 = vunpack.c.l.b16 %v2254
        %v2444 = vunpack.c.h.b16 %v2254
        %v2445 = vunpack.c.l.b16 %v2255
        %v2446 = vunpack.c.h.b16 %v2255
        %v2447 = vunpack.c.l.b16 %v2256
        %v2448 = vunpack.c.h.b16 %v2256
        %v2449 = vunpack.c.l.b16 %v2257
        %v2450 = vunpack.c.h.b16 %v2257
        %v2451 = vunpack.c.l.b16 %v2258
        %v2452 = vunpack.c.h.b16 %v2258
        %v2453 = vunpack.c.l.b16 %v2259
        %v2454 = vunpack.c.h.b16 %v2259
        %v2455 = vunpack.c.l.b16 %v2260
        %v2456 = vunpack.c.h.b16 %v2260
        %v2457 = vunpack.c.l.b16 %v2261
        %v2458 = vunpack.c.h.b16 %v2261
        %v2459 = vunpack.c.l.b16 %v2262
        %v2460 = vunpack.c.h.b16 %v2262
        %v2461 = vunpack.c.l.b16 %v2263
        %v2462 = vunpack.c.h.b16 %v2263
        %v2463 = vunpack.c.l.b16 %v2264
        %v2464 = vunpack.c.h.b16 %v2264
        %v2465 = vunpack.c.l.b16 %v2265
        %v2466 = vunpack.c.h.b16 %v2265
        %v2467 = vunpack.c.l.b16 %v2266
        %v2468 = vunpack.c.h.b16 %v2266
        %v2469 = vunpack.c.l.b16 %v2267
        %v2470 = vunpack.c.h.b16 %v2267
        %v2471 = vunpack.c.l.b16 %v2268
        %v2472 = vunpack.c.h.b16 %v2268
        %v2473 = vunpack.c.l.b16 %v2269
        %v2474 = vunpack.c.h.b16 %v2269
        %v2475 = vpack.c.b16 %v2351, %v2347
        %v2476 = vpack.c.b16 %v2352, %v2348
        %v2477 = vpack.c.b16 %v2353, %v2349
        %v2478 = vpack.c.b16 %v2354, %v2350
        %v2479 = vpack.c.b16 %v2359, %v2355
        %v2480 = vpack.c.b16 %v2360, %v2356
        %v2481 = vpack.c.b16 %v2361, %v2357
        %v2482 = vpack.c.b16 %v2362, %v2358
        %v2483 = vpack.c.b16 %v2367, %v2363
        %v2484 = vpack.c.b16 %v2368, %v2364
        %v2485 = vpack.c.b16 %v2369, %v2365
        %v2486 = vpack.c.b16 %v2370, %v2366
        %v2487 = vpack.c.b16 %v2375, %v2371
        %v2488 = vpack.c.b16 %v2376, %v2372
        %v2489 = vpack.c.b16 %v2377, %v2373
        %v2490 = vpack.c.b16 %v2378, %v2374
        %v2491 = vpack.c.b16 %v2383, %v2379
        %v2492 = vpack.c.b16 %v2384, %v2380
        %v2493 = vpack.c.b16 %v2385, %v2381
        %v2494 = vpack.c.b16 %v2386, %v2382
        %v2495 = vpack.c.b16 %v2391, %v2387
        %v2496 = vpack.c.b16 %v2392, %v2388
        %v2497 = vpack.c.b16 %v2393, %v2389
        %v2498 = vpack.c.b16 %v2394, %v2390
        %v2499 = vpack.c.b16 %v2399, %v2395
        %v2500 = vpack.c.b16 %v2400, %v2396
        %v2501 = vpack.c.b16 %v2401, %v2397
        %v2502 = vpack.c.b16 %v2402, %v2398
        %v2503 = vpack.c.b16 %v2407, %v2403
        %v2504 = vpack.c.b16 %v2408, %v2404
        %v2505 = vpack.c.b16 %v2409, %v2405
        %v2506 = vpack.c.b16 %v2410, %v2406
        %v2507 = vpack.c.b16 %v2415, %v2411
        %v2508 = vpack.c.b16 %v2416, %v2412
        %v2509 = vpack.c.b16 %v2417, %v2413
        %v2510 = vpack.c.b16 %v2418, %v2414
        %v2511 = vpack.c.b16 %v2423, %v2419
        %v2512 = vpack.c.b16 %v2424, %v2420
        %v2513 = vpack.c.b16 %v2425, %v2421
        %v2514 = vpack.c.b16 %v2426, %v2422
        %v2515 = vpack.c.b16 %v2431, %v2427
        %v2516 = vpack.c.b16 %v2432, %v2428
        %v2517 = vpack.c.b16 %v2433, %v2429
        %v2518 = vpack.c.b16 %v2434, %v2430
        %v2519 = vpack.c.b16 %v2439, %v2435
        %v2520 = vpack.c.b16 %v2440, %v2436
        %v2521 = vpack.c.b16 %v2441, %v2437
        %v2522 = vpack.c.b16 %v2442, %v2438
        %v2523 = vpack.c.b16 %v2447, %v2443
        %v2524 = vpack.c.b16 %v2448, %v2444
        %v2525 = vpack.c.b16 %v2449, %v2445
        %v2526 = vpack.c.b16 %v2450, %v2446
        %v2527 = vpack.c.b16 %v2455, %v2451
        %v2528 = vpack.c.b16 %v2456, %v2452
        %v2529 = vpack.c.b16 %v2457, %v2453
        %v2530 = vpack.c.b16 %v2458, %v2454
        %v2531 = vpack.c.b16 %v2463, %v2459
        %v2532 = vpack.c.b16 %v2464, %v2460
        %v2533 = vpack.c.b16 %v2465, %v2461
        %v2534 = vpack.c.b16 %v2466, %v2462
        %v2535 = vpack.c.b16 %v2471, %v2467
        %v2536 = vpack.c.b16 %v2472, %v2468
        %v2537 = vpack.c.b16 %v2473, %v2469
        %v2538 = vpack.c.b16 %v2474, %v2470
        %2603 = vmatprep.subr.bf16.mxu0 %v2504
        %2604 = vmatpush1.bf16.msra.mxu0 %v2503
        %2605 = vmatprep.subr.bf16.mxu0 %v2500
        %2606 = vmatpush1.bf16.msra.mxu0 %v2499
        %2607 = vmatprep.subr.bf16.mxu0 %v2496
        %2608 = vmatpush1.bf16.msra.mxu0 %v2495
        %2609 = vmatprep.subr.bf16.mxu0 %v2492
        %2610 = vmatpush1.bf16.msra.mxu0 %v2491
        %2611 = vmatprep.subr.bf16.mxu0 %v2488
        %2612 = vmatpush1.bf16.msra.mxu0 %v2487
        %2613 = vmatprep.subr.bf16.mxu0 %v2484
        %2614 = vmatpush1.bf16.msra.mxu0 %v2483
        %2615 = vmatprep.subr.bf16.mxu0 %v2480
        %2616 = vmatpush1.bf16.msra.mxu0 %v2479
        %2617 = vmatprep.subr.bf16.mxu0 %v2476
        %2618 = vmatpush1.bf16.msra.mxu0 %v2475
        %2619 = vmatprep.subr.bf16.mxu0 %v2536
        %2620 = vmatpush2.bf16.msra.mxu0 %v2535
        %2621 = vmatprep.subr.bf16.mxu0 %v2532
        %2622 = vmatpush2.bf16.msra.mxu0 %v2531
        %2623 = vmatprep.subr.bf16.mxu0 %v2528
        %2624 = vmatpush2.bf16.msra.mxu0 %v2527
        %2625 = vmatprep.subr.bf16.mxu0 %v2524
        %2626 = vmatpush2.bf16.msra.mxu0 %v2523
        %2627 = vmatprep.subr.bf16.mxu0 %v2520
        %2628 = vmatpush2.bf16.msra.mxu0 %v2519
        %2629 = vmatprep.subr.bf16.mxu0 %v2516
        %2630 = vmatpush2.bf16.msra.mxu0 %v2515
        %2631 = vmatprep.subr.bf16.mxu0 %v2512
        %2632 = vmatpush2.bf16.msra.mxu0 %v2511
        %2633 = vmatprep.subr.bf16.mxu0 %v2508
        %2634 = vmatpush2.bf16.msra.mxu0 %v2507
        %2635 = vmatprep.mubr.bf16.mxu0 %v2282
        %2636 = vmatmul.mubr.bf16.gmra.mxu0 %v2281
        %v2637 = vpop.f32.mrf.mxu0
        %v2638 = vadd.f32 0.0, %v2637
        %v2639 = vpop.f32.mrf.mxu0
        %v2640 = vadd.f32 0.0, %v2639
        %v2641 = vpop.f32.mrf.mxu0
        %v2642 = vpop.f32.mrf.mxu0
        %2643 = vdwg.mxu0
        %2644 = vmatprep.subr.bf16.mxu0 %v2506
        %2645 = vmatpush1.bf16.msra.mxu0 %v2505
        %2646 = vmatprep.subr.bf16.mxu0 %v2502
        %2647 = vmatpush1.bf16.msra.mxu0 %v2501
        %2648 = vmatprep.subr.bf16.mxu0 %v2498
        %2649 = vmatpush1.bf16.msra.mxu0 %v2497
        %2650 = vmatprep.subr.bf16.mxu0 %v2494
        %2651 = vmatpush1.bf16.msra.mxu0 %v2493
        %2652 = vmatprep.subr.bf16.mxu0 %v2490
        %2653 = vmatpush1.bf16.msra.mxu0 %v2489
        %2654 = vmatprep.subr.bf16.mxu0 %v2486
        %2655 = vmatpush1.bf16.msra.mxu0 %v2485
        %2656 = vmatprep.subr.bf16.mxu0 %v2482
        %2657 = vmatpush1.bf16.msra.mxu0 %v2481
        %2658 = vmatprep.subr.bf16.mxu0 %v2478
        %2659 = vmatpush1.bf16.msra.mxu0 %v2477
        %2660 = vmatprep.subr.bf16.mxu0 %v2538
        %2661 = vmatpush2.bf16.msra.mxu0 %v2537
        %2662 = vmatprep.subr.bf16.mxu0 %v2534
        %2663 = vmatpush2.bf16.msra.mxu0 %v2533
        %2664 = vmatprep.subr.bf16.mxu0 %v2530
        %2665 = vmatpush2.bf16.msra.mxu0 %v2529
        %2666 = vmatprep.subr.bf16.mxu0 %v2526
        %2667 = vmatpush2.bf16.msra.mxu0 %v2525
        %2668 = vmatprep.subr.bf16.mxu0 %v2522
        %2669 = vmatpush2.bf16.msra.mxu0 %v2521
        %2670 = vmatprep.subr.bf16.mxu0 %v2518
        %2671 = vmatpush2.bf16.msra.mxu0 %v2517
        %2672 = vmatprep.subr.bf16.mxu0 %v2514
        %2673 = vmatpush2.bf16.msra.mxu0 %v2513
        %2674 = vmatprep.subr.bf16.mxu0 %v2510
        %2675 = vmatpush2.bf16.msra.mxu0 %v2509
        %2676 = vmatprep.mubr.bf16.mxu0 %v2282
        %2677 = vmatmul.mubr.bf16.gmra.mxu0 %v2281
        %v2678 = vpop.f32.mrf.mxu0
        %v2679 = vadd.f32 0.0, %v2678
        %v2680 = vpop.f32.mrf.mxu0
        %v2681 = vadd.f32 0.0, %v2680
        %v2682 = vpop.f32.mrf.mxu0
        %v2683 = vpop.f32.mrf.mxu0
        %2684 = vdwg.mxu0
        %v2689 = vcombine.low %v2638, %v2640
        %v2690 = vcombine.low %v2679, %v2681
        %v2692 = vunpack.c.l.s4 1966171168
        %v2693 = vunpack.c.0.s8 %v2692
        %v2694 = vlaneseq
        %v2695 = vshrl.u32 %v2694, 7
        %v2696 = vsub.s32 %v2693, %v2695
        %v2697 = vrot.slane %v2689, %v2696
        %v2699 = vunpack.c.l.s4 1966171168
        %v2700 = vunpack.c.0.s8 %v2699
        %v2701 = vlaneseq
        %v2702 = vshrl.u32 %v2701, 7
        %v2703 = vsub.s32 %v2700, %v2702
        %v2704 = vrot.slane %v2690, %v2703
        %v2705 = vcombine.low %v2697, %v2704
        %v2707 = vunpack.c.l.s4 1966171168
        %v2708 = vunpack.c.0.s8 %v2707
        %v2709 = vlaneseq
        %v2710 = vshrl.u32 %v2709, 7
        %v2711 = vsub.s32 %v2708, %v2710
        %v2712 = vrot.slane %v2705, %v2711
        %v2714 = vadd.f32 %v2196, %v2712
        %s2715 = scalar_lea.vmem [#allocation3], 6
        %v2716 = vld [vmem:[%s2715] ss:$8 sm:$0x3]
        %s2717 = scalar_lea.vmem [#allocation3], 7
        %v2718 = vld [vmem:[%s2717] ss:$8 sm:$0x3]
        %v2719 = vmax.f32 %v2716, %v2718
        %s2720 = scalar_lea.vmem [#allocation3], 16
        %v2721 = vld [vmem:[%s2720] ss:$8 sm:$0x3]
        %v2722 = vmax.f32 %v2719, %v2721
        %s2723 = scalar_lea.vmem [#allocation5], 1024
        %v2724 = vld [vmem:[%s2723] sm:$0xff]
        %v2725 = vld [vmem:[%s2723 + $0x8] sm:$0xff]
        %v2726 = vld [vmem:[%s2723 + $0x10] sm:$0xff]
        %v2727 = vld [vmem:[%s2723 + $0x18] sm:$0xff]
        %v2728 = vld [vmem:[%s2723 + $0x20] sm:$0xff]
        %v2729 = vld [vmem:[%s2723 + $0x28] sm:$0xff]
        %v2730 = vld [vmem:[%s2723 + $0x30] sm:$0xff]
        %v2731 = vld [vmem:[%s2723 + $0x38] sm:$0xff]
        %v2732 = vld [vmem:[%s2723 + $0x40] sm:$0xff]
        %v2733 = vld [vmem:[%s2723 + $0x48] sm:$0xff]
        %v2734 = vld [vmem:[%s2723 + $0x50] sm:$0xff]
        %v2735 = vld [vmem:[%s2723 + $0x58] sm:$0xff]
        %v2736 = vld [vmem:[%s2723 + $0x60] sm:$0xff]
        %v2737 = vld [vmem:[%s2723 + $0x68] sm:$0xff]
        %v2738 = vld [vmem:[%s2723 + $0x70] sm:$0xff]
        %v2739 = vld [vmem:[%s2723 + $0x78] sm:$0xff]
        %v2740 = vld [vmem:[%s2723 + $0x80] sm:$0xff]
        %v2741 = vld [vmem:[%s2723 + $0x88] sm:$0xff]
        %v2742 = vld [vmem:[%s2723 + $0x90] sm:$0xff]
        %v2743 = vld [vmem:[%s2723 + $0x98] sm:$0xff]
        %v2744 = vld [vmem:[%s2723 + $0xa0] sm:$0xff]
        %v2745 = vld [vmem:[%s2723 + $0xa8] sm:$0xff]
        %v2746 = vld [vmem:[%s2723 + $0xb0] sm:$0xff]
        %v2747 = vld [vmem:[%s2723 + $0xb8] sm:$0xff]
        %v2748 = vld [vmem:[%s2723 + $0xc0] sm:$0xff]
        %v2749 = vld [vmem:[%s2723 + $0xc8] sm:$0xff]
        %v2750 = vld [vmem:[%s2723 + $0xd0] sm:$0xff]
        %v2751 = vld [vmem:[%s2723 + $0xd8] sm:$0xff]
        %v2752 = vld [vmem:[%s2723 + $0xe0] sm:$0xff]
        %v2753 = vld [vmem:[%s2723 + $0xe8] sm:$0xff]
        %v2754 = vld [vmem:[%s2723 + $0xf0] sm:$0xff]
        %v2755 = vld [vmem:[%s2723 + $0xf8] sm:$0xff]
        %v2756 = vld [vmem:[%s2723 + $0x100] sm:$0xff]
        %v2757 = vld [vmem:[%s2723 + $0x108] sm:$0xff]
        %v2758 = vld [vmem:[%s2723 + $0x110] sm:$0xff]
        %v2759 = vld [vmem:[%s2723 + $0x118] sm:$0xff]
        %v2760 = vld [vmem:[%s2723 + $0x120] sm:$0xff]
        %v2761 = vld [vmem:[%s2723 + $0x128] sm:$0xff]
        %v2762 = vld [vmem:[%s2723 + $0x130] sm:$0xff]
        %v2763 = vld [vmem:[%s2723 + $0x138] sm:$0xff]
        %v2764 = vld [vmem:[%s2723 + $0x140] sm:$0xff]
        %v2765 = vld [vmem:[%s2723 + $0x148] sm:$0xff]
        %v2766 = vld [vmem:[%s2723 + $0x150] sm:$0xff]
        %v2767 = vld [vmem:[%s2723 + $0x158] sm:$0xff]
        %v2768 = vld [vmem:[%s2723 + $0x160] sm:$0xff]
        %v2769 = vld [vmem:[%s2723 + $0x168] sm:$0xff]
        %v2770 = vld [vmem:[%s2723 + $0x170] sm:$0xff]
        %v2771 = vld [vmem:[%s2723 + $0x178] sm:$0xff]
        %v2772 = vld [vmem:[%s2723 + $0x180] sm:$0xff]
        %v2773 = vld [vmem:[%s2723 + $0x188] sm:$0xff]
        %v2774 = vld [vmem:[%s2723 + $0x190] sm:$0xff]
        %v2775 = vld [vmem:[%s2723 + $0x198] sm:$0xff]
        %v2776 = vld [vmem:[%s2723 + $0x1a0] sm:$0xff]
        %v2777 = vld [vmem:[%s2723 + $0x1a8] sm:$0xff]
        %v2778 = vld [vmem:[%s2723 + $0x1b0] sm:$0xff]
        %v2779 = vld [vmem:[%s2723 + $0x1b8] sm:$0xff]
        %v2780 = vld [vmem:[%s2723 + $0x1c0] sm:$0xff]
        %v2781 = vld [vmem:[%s2723 + $0x1c8] sm:$0xff]
        %v2782 = vld [vmem:[%s2723 + $0x1d0] sm:$0xff]
        %v2783 = vld [vmem:[%s2723 + $0x1d8] sm:$0xff]
        %v2784 = vld [vmem:[%s2723 + $0x1e0] sm:$0xff]
        %v2785 = vld [vmem:[%s2723 + $0x1e8] sm:$0xff]
        %v2786 = vld [vmem:[%s2723 + $0x1f0] sm:$0xff]
        %v2787 = vld [vmem:[%s2723 + $0x1f8] sm:$0xff]
        %v2789 = vlaneseq
        %v2790 = vshrl.u32 %v2789, 7
        %v2791 = vsub.s32 0, %v2790
        %v2792 = vrot.slane %v2722, %v2791
        %v2793 = vlaneseq
        %v2794 = vshrl.u32 %v2793, 7
        %v2795 = vsub.s32 1, %v2794
        %v2796 = vrot.slane %v2722, %v2795
        %v2799 = vpack.c.bf16 %v2792, %v2792
        %v2800 = vpack.c.bf16 %v2796, %v2796
        %v2865 = vunpack.c.l.b16 %v2724
        %v2866 = vunpack.c.h.b16 %v2724
        %v2867 = vunpack.c.l.b16 %v2725
        %v2868 = vunpack.c.h.b16 %v2725
        %v2869 = vunpack.c.l.b16 %v2726
        %v2870 = vunpack.c.h.b16 %v2726
        %v2871 = vunpack.c.l.b16 %v2727
        %v2872 = vunpack.c.h.b16 %v2727
        %v2873 = vunpack.c.l.b16 %v2728
        %v2874 = vunpack.c.h.b16 %v2728
        %v2875 = vunpack.c.l.b16 %v2729
        %v2876 = vunpack.c.h.b16 %v2729
        %v2877 = vunpack.c.l.b16 %v2730
        %v2878 = vunpack.c.h.b16 %v2730
        %v2879 = vunpack.c.l.b16 %v2731
        %v2880 = vunpack.c.h.b16 %v2731
        %v2881 = vunpack.c.l.b16 %v2732
        %v2882 = vunpack.c.h.b16 %v2732
        %v2883 = vunpack.c.l.b16 %v2733
        %v2884 = vunpack.c.h.b16 %v2733
        %v2885 = vunpack.c.l.b16 %v2734
        %v2886 = vunpack.c.h.b16 %v2734
        %v2887 = vunpack.c.l.b16 %v2735
        %v2888 = vunpack.c.h.b16 %v2735
        %v2889 = vunpack.c.l.b16 %v2736
        %v2890 = vunpack.c.h.b16 %v2736
        %v2891 = vunpack.c.l.b16 %v2737
        %v2892 = vunpack.c.h.b16 %v2737
        %v2893 = vunpack.c.l.b16 %v2738
        %v2894 = vunpack.c.h.b16 %v2738
        %v2895 = vunpack.c.l.b16 %v2739
        %v2896 = vunpack.c.h.b16 %v2739
        %v2897 = vunpack.c.l.b16 %v2740
        %v2898 = vunpack.c.h.b16 %v2740
        %v2899 = vunpack.c.l.b16 %v2741
        %v2900 = vunpack.c.h.b16 %v2741
        %v2901 = vunpack.c.l.b16 %v2742
        %v2902 = vunpack.c.h.b16 %v2742
        %v2903 = vunpack.c.l.b16 %v2743
        %v2904 = vunpack.c.h.b16 %v2743
        %v2905 = vunpack.c.l.b16 %v2744
        %v2906 = vunpack.c.h.b16 %v2744
        %v2907 = vunpack.c.l.b16 %v2745
        %v2908 = vunpack.c.h.b16 %v2745
        %v2909 = vunpack.c.l.b16 %v2746
        %v2910 = vunpack.c.h.b16 %v2746
        %v2911 = vunpack.c.l.b16 %v2747
        %v2912 = vunpack.c.h.b16 %v2747
        %v2913 = vunpack.c.l.b16 %v2748
        %v2914 = vunpack.c.h.b16 %v2748
        %v2915 = vunpack.c.l.b16 %v2749
        %v2916 = vunpack.c.h.b16 %v2749
        %v2917 = vunpack.c.l.b16 %v2750
        %v2918 = vunpack.c.h.b16 %v2750
        %v2919 = vunpack.c.l.b16 %v2751
        %v2920 = vunpack.c.h.b16 %v2751
        %v2921 = vunpack.c.l.b16 %v2752
        %v2922 = vunpack.c.h.b16 %v2752
        %v2923 = vunpack.c.l.b16 %v2753
        %v2924 = vunpack.c.h.b16 %v2753
        %v2925 = vunpack.c.l.b16 %v2754
        %v2926 = vunpack.c.h.b16 %v2754
        %v2927 = vunpack.c.l.b16 %v2755
        %v2928 = vunpack.c.h.b16 %v2755
        %v2929 = vunpack.c.l.b16 %v2756
        %v2930 = vunpack.c.h.b16 %v2756
        %v2931 = vunpack.c.l.b16 %v2757
        %v2932 = vunpack.c.h.b16 %v2757
        %v2933 = vunpack.c.l.b16 %v2758
        %v2934 = vunpack.c.h.b16 %v2758
        %v2935 = vunpack.c.l.b16 %v2759
        %v2936 = vunpack.c.h.b16 %v2759
        %v2937 = vunpack.c.l.b16 %v2760
        %v2938 = vunpack.c.h.b16 %v2760
        %v2939 = vunpack.c.l.b16 %v2761
        %v2940 = vunpack.c.h.b16 %v2761
        %v2941 = vunpack.c.l.b16 %v2762
        %v2942 = vunpack.c.h.b16 %v2762
        %v2943 = vunpack.c.l.b16 %v2763
        %v2944 = vunpack.c.h.b16 %v2763
        %v2945 = vunpack.c.l.b16 %v2764
        %v2946 = vunpack.c.h.b16 %v2764
        %v2947 = vunpack.c.l.b16 %v2765
        %v2948 = vunpack.c.h.b16 %v2765
        %v2949 = vunpack.c.l.b16 %v2766
        %v2950 = vunpack.c.h.b16 %v2766
        %v2951 = vunpack.c.l.b16 %v2767
        %v2952 = vunpack.c.h.b16 %v2767
        %v2953 = vunpack.c.l.b16 %v2768
        %v2954 = vunpack.c.h.b16 %v2768
        %v2955 = vunpack.c.l.b16 %v2769
        %v2956 = vunpack.c.h.b16 %v2769
        %v2957 = vunpack.c.l.b16 %v2770
        %v2958 = vunpack.c.h.b16 %v2770
        %v2959 = vunpack.c.l.b16 %v2771
        %v2960 = vunpack.c.h.b16 %v2771
        %v2961 = vunpack.c.l.b16 %v2772
        %v2962 = vunpack.c.h.b16 %v2772
        %v2963 = vunpack.c.l.b16 %v2773
        %v2964 = vunpack.c.h.b16 %v2773
        %v2965 = vunpack.c.l.b16 %v2774
        %v2966 = vunpack.c.h.b16 %v2774
        %v2967 = vunpack.c.l.b16 %v2775
        %v2968 = vunpack.c.h.b16 %v2775
        %v2969 = vunpack.c.l.b16 %v2776
        %v2970 = vunpack.c.h.b16 %v2776
        %v2971 = vunpack.c.l.b16 %v2777
        %v2972 = vunpack.c.h.b16 %v2777
        %v2973 = vunpack.c.l.b16 %v2778
        %v2974 = vunpack.c.h.b16 %v2778
        %v2975 = vunpack.c.l.b16 %v2779
        %v2976 = vunpack.c.h.b16 %v2779
        %v2977 = vunpack.c.l.b16 %v2780
        %v2978 = vunpack.c.h.b16 %v2780
        %v2979 = vunpack.c.l.b16 %v2781
        %v2980 = vunpack.c.h.b16 %v2781
        %v2981 = vunpack.c.l.b16 %v2782
        %v2982 = vunpack.c.h.b16 %v2782
        %v2983 = vunpack.c.l.b16 %v2783
        %v2984 = vunpack.c.h.b16 %v2783
        %v2985 = vunpack.c.l.b16 %v2784
        %v2986 = vunpack.c.h.b16 %v2784
        %v2987 = vunpack.c.l.b16 %v2785
        %v2988 = vunpack.c.h.b16 %v2785
        %v2989 = vunpack.c.l.b16 %v2786
        %v2990 = vunpack.c.h.b16 %v2786
        %v2991 = vunpack.c.l.b16 %v2787
        %v2992 = vunpack.c.h.b16 %v2787
        %v2993 = vpack.c.b16 %v2869, %v2865
        %v2994 = vpack.c.b16 %v2870, %v2866
        %v2995 = vpack.c.b16 %v2871, %v2867
        %v2996 = vpack.c.b16 %v2872, %v2868
        %v2997 = vpack.c.b16 %v2877, %v2873
        %v2998 = vpack.c.b16 %v2878, %v2874
        %v2999 = vpack.c.b16 %v2879, %v2875
        %v3000 = vpack.c.b16 %v2880, %v2876
        %v3001 = vpack.c.b16 %v2885, %v2881
        %v3002 = vpack.c.b16 %v2886, %v2882
        %v3003 = vpack.c.b16 %v2887, %v2883
        %v3004 = vpack.c.b16 %v2888, %v2884
        %v3005 = vpack.c.b16 %v2893, %v2889
        %v3006 = vpack.c.b16 %v2894, %v2890
        %v3007 = vpack.c.b16 %v2895, %v2891
        %v3008 = vpack.c.b16 %v2896, %v2892
        %v3009 = vpack.c.b16 %v2901, %v2897
        %v3010 = vpack.c.b16 %v2902, %v2898
        %v3011 = vpack.c.b16 %v2903, %v2899
        %v3012 = vpack.c.b16 %v2904, %v2900
        %v3013 = vpack.c.b16 %v2909, %v2905
        %v3014 = vpack.c.b16 %v2910, %v2906
        %v3015 = vpack.c.b16 %v2911, %v2907
        %v3016 = vpack.c.b16 %v2912, %v2908
        %v3017 = vpack.c.b16 %v2917, %v2913
        %v3018 = vpack.c.b16 %v2918, %v2914
        %v3019 = vpack.c.b16 %v2919, %v2915
        %v3020 = vpack.c.b16 %v2920, %v2916
        %v3021 = vpack.c.b16 %v2925, %v2921
        %v3022 = vpack.c.b16 %v2926, %v2922
        %v3023 = vpack.c.b16 %v2927, %v2923
        %v3024 = vpack.c.b16 %v2928, %v2924
        %v3025 = vpack.c.b16 %v2933, %v2929
        %v3026 = vpack.c.b16 %v2934, %v2930
        %v3027 = vpack.c.b16 %v2935, %v2931
        %v3028 = vpack.c.b16 %v2936, %v2932
        %v3029 = vpack.c.b16 %v2941, %v2937
        %v3030 = vpack.c.b16 %v2942, %v2938
        %v3031 = vpack.c.b16 %v2943, %v2939
        %v3032 = vpack.c.b16 %v2944, %v2940
        %v3033 = vpack.c.b16 %v2949, %v2945
        %v3034 = vpack.c.b16 %v2950, %v2946
        %v3035 = vpack.c.b16 %v2951, %v2947
        %v3036 = vpack.c.b16 %v2952, %v2948
        %v3037 = vpack.c.b16 %v2957, %v2953
        %v3038 = vpack.c.b16 %v2958, %v2954
        %v3039 = vpack.c.b16 %v2959, %v2955
        %v3040 = vpack.c.b16 %v2960, %v2956
        %v3041 = vpack.c.b16 %v2965, %v2961
        %v3042 = vpack.c.b16 %v2966, %v2962
        %v3043 = vpack.c.b16 %v2967, %v2963
        %v3044 = vpack.c.b16 %v2968, %v2964
        %v3045 = vpack.c.b16 %v2973, %v2969
        %v3046 = vpack.c.b16 %v2974, %v2970
        %v3047 = vpack.c.b16 %v2975, %v2971
        %v3048 = vpack.c.b16 %v2976, %v2972
        %v3049 = vpack.c.b16 %v2981, %v2977
        %v3050 = vpack.c.b16 %v2982, %v2978
        %v3051 = vpack.c.b16 %v2983, %v2979
        %v3052 = vpack.c.b16 %v2984, %v2980
        %v3053 = vpack.c.b16 %v2989, %v2985
        %v3054 = vpack.c.b16 %v2990, %v2986
        %v3055 = vpack.c.b16 %v2991, %v2987
        %v3056 = vpack.c.b16 %v2992, %v2988
        %3121 = vmatprep.subr.bf16.mxu0 %v3022
        %3122 = vmatpush1.bf16.msra.mxu0 %v3021
        %3123 = vmatprep.subr.bf16.mxu0 %v3018
        %3124 = vmatpush1.bf16.msra.mxu0 %v3017
        %3125 = vmatprep.subr.bf16.mxu0 %v3014
        %3126 = vmatpush1.bf16.msra.mxu0 %v3013
        %3127 = vmatprep.subr.bf16.mxu0 %v3010
        %3128 = vmatpush1.bf16.msra.mxu0 %v3009
        %3129 = vmatprep.subr.bf16.mxu0 %v3006
        %3130 = vmatpush1.bf16.msra.mxu0 %v3005
        %3131 = vmatprep.subr.bf16.mxu0 %v3002
        %3132 = vmatpush1.bf16.msra.mxu0 %v3001
        %3133 = vmatprep.subr.bf16.mxu0 %v2998
        %3134 = vmatpush1.bf16.msra.mxu0 %v2997
        %3135 = vmatprep.subr.bf16.mxu0 %v2994
        %3136 = vmatpush1.bf16.msra.mxu0 %v2993
        %3137 = vmatprep.subr.bf16.mxu0 %v3054
        %3138 = vmatpush2.bf16.msra.mxu0 %v3053
        %3139 = vmatprep.subr.bf16.mxu0 %v3050
        %3140 = vmatpush2.bf16.msra.mxu0 %v3049
        %3141 = vmatprep.subr.bf16.mxu0 %v3046
        %3142 = vmatpush2.bf16.msra.mxu0 %v3045
        %3143 = vmatprep.subr.bf16.mxu0 %v3042
        %3144 = vmatpush2.bf16.msra.mxu0 %v3041
        %3145 = vmatprep.subr.bf16.mxu0 %v3038
        %3146 = vmatpush2.bf16.msra.mxu0 %v3037
        %3147 = vmatprep.subr.bf16.mxu0 %v3034
        %3148 = vmatpush2.bf16.msra.mxu0 %v3033
        %3149 = vmatprep.subr.bf16.mxu0 %v3030
        %3150 = vmatpush2.bf16.msra.mxu0 %v3029
        %3151 = vmatprep.subr.bf16.mxu0 %v3026
        %3152 = vmatpush2.bf16.msra.mxu0 %v3025
        %3153 = vmatprep.mubr.bf16.mxu0 %v2800
        %3154 = vmatmul.mubr.bf16.gmra.mxu0 %v2799
        %v3155 = vpop.f32.mrf.mxu0
        %v3156 = vadd.f32 0.0, %v3155
        %v3157 = vpop.f32.mrf.mxu0
        %v3158 = vadd.f32 0.0, %v3157
        %v3159 = vpop.f32.mrf.mxu0
        %v3160 = vpop.f32.mrf.mxu0
        %3161 = vdwg.mxu0
        %3162 = vmatprep.subr.bf16.mxu0 %v3024
        %3163 = vmatpush1.bf16.msra.mxu0 %v3023
        %3164 = vmatprep.subr.bf16.mxu0 %v3020
        %3165 = vmatpush1.bf16.msra.mxu0 %v3019
        %3166 = vmatprep.subr.bf16.mxu0 %v3016
        %3167 = vmatpush1.bf16.msra.mxu0 %v3015
        %3168 = vmatprep.subr.bf16.mxu0 %v3012
        %3169 = vmatpush1.bf16.msra.mxu0 %v3011
        %3170 = vmatprep.subr.bf16.mxu0 %v3008
        %3171 = vmatpush1.bf16.msra.mxu0 %v3007
        %3172 = vmatprep.subr.bf16.mxu0 %v3004
        %3173 = vmatpush1.bf16.msra.mxu0 %v3003
        %3174 = vmatprep.subr.bf16.mxu0 %v3000
        %3175 = vmatpush1.bf16.msra.mxu0 %v2999
        %3176 = vmatprep.subr.bf16.mxu0 %v2996
        %3177 = vmatpush1.bf16.msra.mxu0 %v2995
        %3178 = vmatprep.subr.bf16.mxu0 %v3056
        %3179 = vmatpush2.bf16.msra.mxu0 %v3055
        %3180 = vmatprep.subr.bf16.mxu0 %v3052
        %3181 = vmatpush2.bf16.msra.mxu0 %v3051
        %3182 = vmatprep.subr.bf16.mxu0 %v3048
        %3183 = vmatpush2.bf16.msra.mxu0 %v3047
        %3184 = vmatprep.subr.bf16.mxu0 %v3044
        %3185 = vmatpush2.bf16.msra.mxu0 %v3043
        %3186 = vmatprep.subr.bf16.mxu0 %v3040
        %3187 = vmatpush2.bf16.msra.mxu0 %v3039
        %3188 = vmatprep.subr.bf16.mxu0 %v3036
        %3189 = vmatpush2.bf16.msra.mxu0 %v3035
        %3190 = vmatprep.subr.bf16.mxu0 %v3032
        %3191 = vmatpush2.bf16.msra.mxu0 %v3031
        %3192 = vmatprep.subr.bf16.mxu0 %v3028
        %3193 = vmatpush2.bf16.msra.mxu0 %v3027
        %3194 = vmatprep.mubr.bf16.mxu0 %v2800
        %3195 = vmatmul.mubr.bf16.gmra.mxu0 %v2799
        %v3196 = vpop.f32.mrf.mxu0
        %v3197 = vadd.f32 0.0, %v3196
        %v3198 = vpop.f32.mrf.mxu0
        %v3199 = vadd.f32 0.0, %v3198
        %v3200 = vpop.f32.mrf.mxu0
        %v3201 = vpop.f32.mrf.mxu0
        %3202 = vdwg.mxu0
        %v3207 = vcombine.low %v3156, %v3158
        %v3208 = vcombine.low %v3197, %v3199
        %v3210 = vunpack.c.l.s4 1966171168
        %v3211 = vunpack.c.0.s8 %v3210
        %v3212 = vlaneseq
        %v3213 = vshrl.u32 %v3212, 7
        %v3214 = vsub.s32 %v3211, %v3213
        %v3215 = vrot.slane %v3207, %v3214
        %v3217 = vunpack.c.l.s4 1966171168
        %v3218 = vunpack.c.0.s8 %v3217
        %v3219 = vlaneseq
        %v3220 = vshrl.u32 %v3219, 7
        %v3221 = vsub.s32 %v3218, %v3220
        %v3222 = vrot.slane %v3208, %v3221
        %v3223 = vcombine.low %v3215, %v3222
        %v3225 = vunpack.c.l.s4 1966171168
        %v3226 = vunpack.c.0.s8 %v3225
        %v3227 = vlaneseq
        %v3228 = vshrl.u32 %v3227, 7
        %v3229 = vsub.s32 %v3226, %v3228
        %v3230 = vrot.slane %v3223, %v3229
        %v3232 = vadd.f32 %v2714, %v3230
        %s3233 = scalar_lea.vmem [#allocation3], 17
        %v3234 = vld [vmem:[%s3233] ss:$8 sm:$0x3]
        %s3235 = scalar_lea.vmem [#allocation3], 18
        %v3236 = vld [vmem:[%s3235] ss:$8 sm:$0x3]
        %v3237 = vmax.f32 %v3234, %v3236
        %s3238 = scalar_lea.vmem [#allocation3], 19
        %v3239 = vld [vmem:[%s3238] ss:$8 sm:$0x3]
        %v3240 = vmax.f32 %v3237, %v3239
        %s3241 = scalar_lea.vmem [#allocation5], 1536
        %v3242 = vld [vmem:[%s3241] sm:$0xff]
        %v3243 = vld [vmem:[%s3241 + $0x8] sm:$0xff]
        %v3244 = vld [vmem:[%s3241 + $0x10] sm:$0xff]
        %v3245 = vld [vmem:[%s3241 + $0x18] sm:$0xff]
        %v3246 = vld [vmem:[%s3241 + $0x20] sm:$0xff]
        %v3247 = vld [vmem:[%s3241 + $0x28] sm:$0xff]
        %v3248 = vld [vmem:[%s3241 + $0x30] sm:$0xff]
        %v3249 = vld [vmem:[%s3241 + $0x38] sm:$0xff]
        %v3250 = vld [vmem:[%s3241 + $0x40] sm:$0xff]
        %v3251 = vld [vmem:[%s3241 + $0x48] sm:$0xff]
        %v3252 = vld [vmem:[%s3241 + $0x50] sm:$0xff]
        %v3253 = vld [vmem:[%s3241 + $0x58] sm:$0xff]
        %v3254 = vld [vmem:[%s3241 + $0x60] sm:$0xff]
        %v3255 = vld [vmem:[%s3241 + $0x68] sm:$0xff]
        %v3256 = vld [vmem:[%s3241 + $0x70] sm:$0xff]
        %v3257 = vld [vmem:[%s3241 + $0x78] sm:$0xff]
        %v3258 = vld [vmem:[%s3241 + $0x80] sm:$0xff]
        %v3259 = vld [vmem:[%s3241 + $0x88] sm:$0xff]
        %v3260 = vld [vmem:[%s3241 + $0x90] sm:$0xff]
        %v3261 = vld [vmem:[%s3241 + $0x98] sm:$0xff]
        %v3262 = vld [vmem:[%s3241 + $0xa0] sm:$0xff]
        %v3263 = vld [vmem:[%s3241 + $0xa8] sm:$0xff]
        %v3264 = vld [vmem:[%s3241 + $0xb0] sm:$0xff]
        %v3265 = vld [vmem:[%s3241 + $0xb8] sm:$0xff]
        %v3266 = vld [vmem:[%s3241 + $0xc0] sm:$0xff]
        %v3267 = vld [vmem:[%s3241 + $0xc8] sm:$0xff]
        %v3268 = vld [vmem:[%s3241 + $0xd0] sm:$0xff]
        %v3269 = vld [vmem:[%s3241 + $0xd8] sm:$0xff]
        %v3270 = vld [vmem:[%s3241 + $0xe0] sm:$0xff]
        %v3271 = vld [vmem:[%s3241 + $0xe8] sm:$0xff]
        %v3272 = vld [vmem:[%s3241 + $0xf0] sm:$0xff]
        %v3273 = vld [vmem:[%s3241 + $0xf8] sm:$0xff]
        %v3274 = vld [vmem:[%s3241 + $0x100] sm:$0xff]
        %v3275 = vld [vmem:[%s3241 + $0x108] sm:$0xff]
        %v3276 = vld [vmem:[%s3241 + $0x110] sm:$0xff]
        %v3277 = vld [vmem:[%s3241 + $0x118] sm:$0xff]
        %v3278 = vld [vmem:[%s3241 + $0x120] sm:$0xff]
        %v3279 = vld [vmem:[%s3241 + $0x128] sm:$0xff]
        %v3280 = vld [vmem:[%s3241 + $0x130] sm:$0xff]
        %v3281 = vld [vmem:[%s3241 + $0x138] sm:$0xff]
        %v3282 = vld [vmem:[%s3241 + $0x140] sm:$0xff]
        %v3283 = vld [vmem:[%s3241 + $0x148] sm:$0xff]
        %v3284 = vld [vmem:[%s3241 + $0x150] sm:$0xff]
        %v3285 = vld [vmem:[%s3241 + $0x158] sm:$0xff]
        %v3286 = vld [vmem:[%s3241 + $0x160] sm:$0xff]
        %v3287 = vld [vmem:[%s3241 + $0x168] sm:$0xff]
        %v3288 = vld [vmem:[%s3241 + $0x170] sm:$0xff]
        %v3289 = vld [vmem:[%s3241 + $0x178] sm:$0xff]
        %v3290 = vld [vmem:[%s3241 + $0x180] sm:$0xff]
        %v3291 = vld [vmem:[%s3241 + $0x188] sm:$0xff]
        %v3292 = vld [vmem:[%s3241 + $0x190] sm:$0xff]
        %v3293 = vld [vmem:[%s3241 + $0x198] sm:$0xff]
        %v3294 = vld [vmem:[%s3241 + $0x1a0] sm:$0xff]
        %v3295 = vld [vmem:[%s3241 + $0x1a8] sm:$0xff]
        %v3296 = vld [vmem:[%s3241 + $0x1b0] sm:$0xff]
        %v3297 = vld [vmem:[%s3241 + $0x1b8] sm:$0xff]
        %v3298 = vld [vmem:[%s3241 + $0x1c0] sm:$0xff]
        %v3299 = vld [vmem:[%s3241 + $0x1c8] sm:$0xff]
        %v3300 = vld [vmem:[%s3241 + $0x1d0] sm:$0xff]
        %v3301 = vld [vmem:[%s3241 + $0x1d8] sm:$0xff]
        %v3302 = vld [vmem:[%s3241 + $0x1e0] sm:$0xff]
        %v3303 = vld [vmem:[%s3241 + $0x1e8] sm:$0xff]
        %v3304 = vld [vmem:[%s3241 + $0x1f0] sm:$0xff]
        %v3305 = vld [vmem:[%s3241 + $0x1f8] sm:$0xff]
        %v3307 = vlaneseq
        %v3308 = vshrl.u32 %v3307, 7
        %v3309 = vsub.s32 0, %v3308
        %v3310 = vrot.slane %v3240, %v3309
        %v3311 = vlaneseq
        %v3312 = vshrl.u32 %v3311, 7
        %v3313 = vsub.s32 1, %v3312
        %v3314 = vrot.slane %v3240, %v3313
        %v3317 = vpack.c.bf16 %v3310, %v3310
        %v3318 = vpack.c.bf16 %v3314, %v3314
        %v3383 = vunpack.c.l.b16 %v3242
        %v3384 = vunpack.c.h.b16 %v3242
        %v3385 = vunpack.c.l.b16 %v3243
        %v3386 = vunpack.c.h.b16 %v3243
        %v3387 = vunpack.c.l.b16 %v3244
        %v3388 = vunpack.c.h.b16 %v3244
        %v3389 = vunpack.c.l.b16 %v3245
        %v3390 = vunpack.c.h.b16 %v3245
        %v3391 = vunpack.c.l.b16 %v3246
        %v3392 = vunpack.c.h.b16 %v3246
        %v3393 = vunpack.c.l.b16 %v3247
        %v3394 = vunpack.c.h.b16 %v3247
        %v3395 = vunpack.c.l.b16 %v3248
        %v3396 = vunpack.c.h.b16 %v3248
        %v3397 = vunpack.c.l.b16 %v3249
        %v3398 = vunpack.c.h.b16 %v3249
        %v3399 = vunpack.c.l.b16 %v3250
        %v3400 = vunpack.c.h.b16 %v3250
        %v3401 = vunpack.c.l.b16 %v3251
        %v3402 = vunpack.c.h.b16 %v3251
        %v3403 = vunpack.c.l.b16 %v3252
        %v3404 = vunpack.c.h.b16 %v3252
        %v3405 = vunpack.c.l.b16 %v3253
        %v3406 = vunpack.c.h.b16 %v3253
        %v3407 = vunpack.c.l.b16 %v3254
        %v3408 = vunpack.c.h.b16 %v3254
        %v3409 = vunpack.c.l.b16 %v3255
        %v3410 = vunpack.c.h.b16 %v3255
        %v3411 = vunpack.c.l.b16 %v3256
        %v3412 = vunpack.c.h.b16 %v3256
        %v3413 = vunpack.c.l.b16 %v3257
        %v3414 = vunpack.c.h.b16 %v3257
        %v3415 = vunpack.c.l.b16 %v3258
        %v3416 = vunpack.c.h.b16 %v3258
        %v3417 = vunpack.c.l.b16 %v3259
        %v3418 = vunpack.c.h.b16 %v3259
        %v3419 = vunpack.c.l.b16 %v3260
        %v3420 = vunpack.c.h.b16 %v3260
        %v3421 = vunpack.c.l.b16 %v3261
        %v3422 = vunpack.c.h.b16 %v3261
        %v3423 = vunpack.c.l.b16 %v3262
        %v3424 = vunpack.c.h.b16 %v3262
        %v3425 = vunpack.c.l.b16 %v3263
        %v3426 = vunpack.c.h.b16 %v3263
        %v3427 = vunpack.c.l.b16 %v3264
        %v3428 = vunpack.c.h.b16 %v3264
        %v3429 = vunpack.c.l.b16 %v3265
        %v3430 = vunpack.c.h.b16 %v3265
        %v3431 = vunpack.c.l.b16 %v3266
        %v3432 = vunpack.c.h.b16 %v3266
        %v3433 = vunpack.c.l.b16 %v3267
        %v3434 = vunpack.c.h.b16 %v3267
        %v3435 = vunpack.c.l.b16 %v3268
        %v3436 = vunpack.c.h.b16 %v3268
        %v3437 = vunpack.c.l.b16 %v3269
        %v3438 = vunpack.c.h.b16 %v3269
        %v3439 = vunpack.c.l.b16 %v3270
        %v3440 = vunpack.c.h.b16 %v3270
        %v3441 = vunpack.c.l.b16 %v3271
        %v3442 = vunpack.c.h.b16 %v3271
        %v3443 = vunpack.c.l.b16 %v3272
        %v3444 = vunpack.c.h.b16 %v3272
        %v3445 = vunpack.c.l.b16 %v3273
        %v3446 = vunpack.c.h.b16 %v3273
        %v3447 = vunpack.c.l.b16 %v3274
        %v3448 = vunpack.c.h.b16 %v3274
        %v3449 = vunpack.c.l.b16 %v3275
        %v3450 = vunpack.c.h.b16 %v3275
        %v3451 = vunpack.c.l.b16 %v3276
        %v3452 = vunpack.c.h.b16 %v3276
        %v3453 = vunpack.c.l.b16 %v3277
        %v3454 = vunpack.c.h.b16 %v3277
        %v3455 = vunpack.c.l.b16 %v3278
        %v3456 = vunpack.c.h.b16 %v3278
        %v3457 = vunpack.c.l.b16 %v3279
        %v3458 = vunpack.c.h.b16 %v3279
        %v3459 = vunpack.c.l.b16 %v3280
        %v3460 = vunpack.c.h.b16 %v3280
        %v3461 = vunpack.c.l.b16 %v3281
        %v3462 = vunpack.c.h.b16 %v3281
        %v3463 = vunpack.c.l.b16 %v3282
        %v3464 = vunpack.c.h.b16 %v3282
        %v3465 = vunpack.c.l.b16 %v3283
        %v3466 = vunpack.c.h.b16 %v3283
        %v3467 = vunpack.c.l.b16 %v3284
        %v3468 = vunpack.c.h.b16 %v3284
        %v3469 = vunpack.c.l.b16 %v3285
        %v3470 = vunpack.c.h.b16 %v3285
        %v3471 = vunpack.c.l.b16 %v3286
        %v3472 = vunpack.c.h.b16 %v3286
        %v3473 = vunpack.c.l.b16 %v3287
        %v3474 = vunpack.c.h.b16 %v3287
        %v3475 = vunpack.c.l.b16 %v3288
        %v3476 = vunpack.c.h.b16 %v3288
        %v3477 = vunpack.c.l.b16 %v3289
        %v3478 = vunpack.c.h.b16 %v3289
        %v3479 = vunpack.c.l.b16 %v3290
        %v3480 = vunpack.c.h.b16 %v3290
        %v3481 = vunpack.c.l.b16 %v3291
        %v3482 = vunpack.c.h.b16 %v3291
        %v3483 = vunpack.c.l.b16 %v3292
        %v3484 = vunpack.c.h.b16 %v3292
        %v3485 = vunpack.c.l.b16 %v3293
        %v3486 = vunpack.c.h.b16 %v3293
        %v3487 = vunpack.c.l.b16 %v3294
        %v3488 = vunpack.c.h.b16 %v3294
        %v3489 = vunpack.c.l.b16 %v3295
        %v3490 = vunpack.c.h.b16 %v3295
        %v3491 = vunpack.c.l.b16 %v3296
        %v3492 = vunpack.c.h.b16 %v3296
        %v3493 = vunpack.c.l.b16 %v3297
        %v3494 = vunpack.c.h.b16 %v3297
        %v3495 = vunpack.c.l.b16 %v3298
        %v3496 = vunpack.c.h.b16 %v3298
        %v3497 = vunpack.c.l.b16 %v3299
        %v3498 = vunpack.c.h.b16 %v3299
        %v3499 = vunpack.c.l.b16 %v3300
        %v3500 = vunpack.c.h.b16 %v3300
        %v3501 = vunpack.c.l.b16 %v3301
        %v3502 = vunpack.c.h.b16 %v3301
        %v3503 = vunpack.c.l.b16 %v3302
        %v3504 = vunpack.c.h.b16 %v3302
        %v3505 = vunpack.c.l.b16 %v3303
        %v3506 = vunpack.c.h.b16 %v3303
        %v3507 = vunpack.c.l.b16 %v3304
        %v3508 = vunpack.c.h.b16 %v3304
        %v3509 = vunpack.c.l.b16 %v3305
        %v3510 = vunpack.c.h.b16 %v3305
        %v3511 = vpack.c.b16 %v3387, %v3383
        %v3512 = vpack.c.b16 %v3388, %v3384
        %v3513 = vpack.c.b16 %v3389, %v3385
        %v3514 = vpack.c.b16 %v3390, %v3386
        %v3515 = vpack.c.b16 %v3395, %v3391
        %v3516 = vpack.c.b16 %v3396, %v3392
        %v3517 = vpack.c.b16 %v3397, %v3393
        %v3518 = vpack.c.b16 %v3398, %v3394
        %v3519 = vpack.c.b16 %v3403, %v3399
        %v3520 = vpack.c.b16 %v3404, %v3400
        %v3521 = vpack.c.b16 %v3405, %v3401
        %v3522 = vpack.c.b16 %v3406, %v3402
        %v3523 = vpack.c.b16 %v3411, %v3407
        %v3524 = vpack.c.b16 %v3412, %v3408
        %v3525 = vpack.c.b16 %v3413, %v3409
        %v3526 = vpack.c.b16 %v3414, %v3410
        %v3527 = vpack.c.b16 %v3419, %v3415
        %v3528 = vpack.c.b16 %v3420, %v3416
        %v3529 = vpack.c.b16 %v3421, %v3417
        %v3530 = vpack.c.b16 %v3422, %v3418
        %v3531 = vpack.c.b16 %v3427, %v3423
        %v3532 = vpack.c.b16 %v3428, %v3424
        %v3533 = vpack.c.b16 %v3429, %v3425
        %v3534 = vpack.c.b16 %v3430, %v3426
        %v3535 = vpack.c.b16 %v3435, %v3431
        %v3536 = vpack.c.b16 %v3436, %v3432
        %v3537 = vpack.c.b16 %v3437, %v3433
        %v3538 = vpack.c.b16 %v3438, %v3434
        %v3539 = vpack.c.b16 %v3443, %v3439
        %v3540 = vpack.c.b16 %v3444, %v3440
        %v3541 = vpack.c.b16 %v3445, %v3441
        %v3542 = vpack.c.b16 %v3446, %v3442
        %v3543 = vpack.c.b16 %v3451, %v3447
        %v3544 = vpack.c.b16 %v3452, %v3448
        %v3545 = vpack.c.b16 %v3453, %v3449
        %v3546 = vpack.c.b16 %v3454, %v3450
        %v3547 = vpack.c.b16 %v3459, %v3455
        %v3548 = vpack.c.b16 %v3460, %v3456
        %v3549 = vpack.c.b16 %v3461, %v3457
        %v3550 = vpack.c.b16 %v3462, %v3458
        %v3551 = vpack.c.b16 %v3467, %v3463
        %v3552 = vpack.c.b16 %v3468, %v3464
        %v3553 = vpack.c.b16 %v3469, %v3465
        %v3554 = vpack.c.b16 %v3470, %v3466
        %v3555 = vpack.c.b16 %v3475, %v3471
        %v3556 = vpack.c.b16 %v3476, %v3472
        %v3557 = vpack.c.b16 %v3477, %v3473
        %v3558 = vpack.c.b16 %v3478, %v3474
        %v3559 = vpack.c.b16 %v3483, %v3479
        %v3560 = vpack.c.b16 %v3484, %v3480
        %v3561 = vpack.c.b16 %v3485, %v3481
        %v3562 = vpack.c.b16 %v3486, %v3482
        %v3563 = vpack.c.b16 %v3491, %v3487
        %v3564 = vpack.c.b16 %v3492, %v3488
        %v3565 = vpack.c.b16 %v3493, %v3489
        %v3566 = vpack.c.b16 %v3494, %v3490
        %v3567 = vpack.c.b16 %v3499, %v3495
        %v3568 = vpack.c.b16 %v3500, %v3496
        %v3569 = vpack.c.b16 %v3501, %v3497
        %v3570 = vpack.c.b16 %v3502, %v3498
        %v3571 = vpack.c.b16 %v3507, %v3503
        %v3572 = vpack.c.b16 %v3508, %v3504
        %v3573 = vpack.c.b16 %v3509, %v3505
        %v3574 = vpack.c.b16 %v3510, %v3506
        %3639 = vmatprep.subr.bf16.mxu0 %v3540
        %3640 = vmatpush1.bf16.msra.mxu0 %v3539
        %3641 = vmatprep.subr.bf16.mxu0 %v3536
        %3642 = vmatpush1.bf16.msra.mxu0 %v3535
        %3643 = vmatprep.subr.bf16.mxu0 %v3532
        %3644 = vmatpush1.bf16.msra.mxu0 %v3531
        %3645 = vmatprep.subr.bf16.mxu0 %v3528
        %3646 = vmatpush1.bf16.msra.mxu0 %v3527
        %3647 = vmatprep.subr.bf16.mxu0 %v3524
        %3648 = vmatpush1.bf16.msra.mxu0 %v3523
        %3649 = vmatprep.subr.bf16.mxu0 %v3520
        %3650 = vmatpush1.bf16.msra.mxu0 %v3519
        %3651 = vmatprep.subr.bf16.mxu0 %v3516
        %3652 = vmatpush1.bf16.msra.mxu0 %v3515
        %3653 = vmatprep.subr.bf16.mxu0 %v3512
        %3654 = vmatpush1.bf16.msra.mxu0 %v3511
        %3655 = vmatprep.subr.bf16.mxu0 %v3572
        %3656 = vmatpush2.bf16.msra.mxu0 %v3571
        %3657 = vmatprep.subr.bf16.mxu0 %v3568
        %3658 = vmatpush2.bf16.msra.mxu0 %v3567
        %3659 = vmatprep.subr.bf16.mxu0 %v3564
        %3660 = vmatpush2.bf16.msra.mxu0 %v3563
        %3661 = vmatprep.subr.bf16.mxu0 %v3560
        %3662 = vmatpush2.bf16.msra.mxu0 %v3559
        %3663 = vmatprep.subr.bf16.mxu0 %v3556
        %3664 = vmatpush2.bf16.msra.mxu0 %v3555
        %3665 = vmatprep.subr.bf16.mxu0 %v3552
        %3666 = vmatpush2.bf16.msra.mxu0 %v3551
        %3667 = vmatprep.subr.bf16.mxu0 %v3548
        %3668 = vmatpush2.bf16.msra.mxu0 %v3547
        %3669 = vmatprep.subr.bf16.mxu0 %v3544
        %3670 = vmatpush2.bf16.msra.mxu0 %v3543
        %3671 = vmatprep.mubr.bf16.mxu0 %v3318
        %3672 = vmatmul.mubr.bf16.gmra.mxu0 %v3317
        %v3673 = vpop.f32.mrf.mxu0
        %v3674 = vadd.f32 0.0, %v3673
        %v3675 = vpop.f32.mrf.mxu0
        %v3676 = vadd.f32 0.0, %v3675
        %v3677 = vpop.f32.mrf.mxu0
        %v3678 = vpop.f32.mrf.mxu0
        %3679 = vdwg.mxu0
        %3680 = vmatprep.subr.bf16.mxu0 %v3542
        %3681 = vmatpush1.bf16.msra.mxu0 %v3541
        %3682 = vmatprep.subr.bf16.mxu0 %v3538
        %3683 = vmatpush1.bf16.msra.mxu0 %v3537
        %3684 = vmatprep.subr.bf16.mxu0 %v3534
        %3685 = vmatpush1.bf16.msra.mxu0 %v3533
        %3686 = vmatprep.subr.bf16.mxu0 %v3530
        %3687 = vmatpush1.bf16.msra.mxu0 %v3529
        %3688 = vmatprep.subr.bf16.mxu0 %v3526
        %3689 = vmatpush1.bf16.msra.mxu0 %v3525
        %3690 = vmatprep.subr.bf16.mxu0 %v3522
        %3691 = vmatpush1.bf16.msra.mxu0 %v3521
        %3692 = vmatprep.subr.bf16.mxu0 %v3518
        %3693 = vmatpush1.bf16.msra.mxu0 %v3517
        %3694 = vmatprep.subr.bf16.mxu0 %v3514
        %3695 = vmatpush1.bf16.msra.mxu0 %v3513
        %3696 = vmatprep.subr.bf16.mxu0 %v3574
        %3697 = vmatpush2.bf16.msra.mxu0 %v3573
        %3698 = vmatprep.subr.bf16.mxu0 %v3570
        %3699 = vmatpush2.bf16.msra.mxu0 %v3569
        %3700 = vmatprep.subr.bf16.mxu0 %v3566
        %3701 = vmatpush2.bf16.msra.mxu0 %v3565
        %3702 = vmatprep.subr.bf16.mxu0 %v3562
        %3703 = vmatpush2.bf16.msra.mxu0 %v3561
        %3704 = vmatprep.subr.bf16.mxu0 %v3558
        %3705 = vmatpush2.bf16.msra.mxu0 %v3557
        %3706 = vmatprep.subr.bf16.mxu0 %v3554
        %3707 = vmatpush2.bf16.msra.mxu0 %v3553
        %3708 = vmatprep.subr.bf16.mxu0 %v3550
        %3709 = vmatpush2.bf16.msra.mxu0 %v3549
        %3710 = vmatprep.subr.bf16.mxu0 %v3546
        %3711 = vmatpush2.bf16.msra.mxu0 %v3545
        %3712 = vmatprep.mubr.bf16.mxu0 %v3318
        %3713 = vmatmul.mubr.bf16.gmra.mxu0 %v3317
        %v3714 = vpop.f32.mrf.mxu0
        %v3715 = vadd.f32 0.0, %v3714
        %v3716 = vpop.f32.mrf.mxu0
        %v3717 = vadd.f32 0.0, %v3716
        %v3718 = vpop.f32.mrf.mxu0
        %v3719 = vpop.f32.mrf.mxu0
        %3720 = vdwg.mxu0
        %v3725 = vcombine.low %v3674, %v3676
        %v3726 = vcombine.low %v3715, %v3717
        %v3728 = vunpack.c.l.s4 1966171168
        %v3729 = vunpack.c.0.s8 %v3728
        %v3730 = vlaneseq
        %v3731 = vshrl.u32 %v3730, 7
        %v3732 = vsub.s32 %v3729, %v3731
        %v3733 = vrot.slane %v3725, %v3732
        %v3735 = vunpack.c.l.s4 1966171168
        %v3736 = vunpack.c.0.s8 %v3735
        %v3737 = vlaneseq
        %v3738 = vshrl.u32 %v3737, 7
        %v3739 = vsub.s32 %v3736, %v3738
        %v3740 = vrot.slane %v3726, %v3739
        %v3741 = vcombine.low %v3733, %v3740
        %v3743 = vunpack.c.l.s4 1966171168
        %v3744 = vunpack.c.0.s8 %v3743
        %v3745 = vlaneseq
        %v3746 = vshrl.u32 %v3745, 7
        %v3747 = vsub.s32 %v3744, %v3746
        %v3748 = vrot.slane %v3741, %v3747
        %v3750 = vadd.f32 %v3232, %v3748
        %vm3751 = vcmp.ge.f32.partialorder %v3750, 0.0
        %v3752 = vmul.f32 %v572, %v3750
        %v3753 = vsel %vm3751, %v3750, %v3752
        %v3754 = vld [vmem:[%s7] sm:$0xf]
        %v3755 = vld [vmem:[%s7 + $0x4] sm:$0xf]
        %v3756 = vld [vmem:[%s7 + $0x8] sm:$0xf]
        %v3757 = vld [vmem:[%s7 + $0xc] sm:$0xf]
        %v3758 = vld [vmem:[%s7 + $0x10] sm:$0xf]
        %v3759 = vld [vmem:[%s7 + $0x14] sm:$0xf]
        %v3760 = vld [vmem:[%s7 + $0x18] sm:$0xf]
        %v3761 = vld [vmem:[%s7 + $0x1c] sm:$0xf]
        %v3762 = vld [vmem:[%s7 + $0x20] sm:$0xf]
        %v3763 = vld [vmem:[%s7 + $0x24] sm:$0xf]
        %v3764 = vld [vmem:[%s7 + $0x28] sm:$0xf]
        %v3765 = vld [vmem:[%s7 + $0x2c] sm:$0xf]
        %v3766 = vld [vmem:[%s7 + $0x30] sm:$0xf]
        %v3767 = vld [vmem:[%s7 + $0x34] sm:$0xf]
        %v3768 = vld [vmem:[%s7 + $0x38] sm:$0xf]
        %v3769 = vld [vmem:[%s7 + $0x3c] sm:$0xf]
        %v3770 = vld [vmem:[%s7 + $0x40] sm:$0xf]
        %v3771 = vld [vmem:[%s7 + $0x44] sm:$0xf]
        %v3772 = vld [vmem:[%s7 + $0x48] sm:$0xf]
        %v3773 = vld [vmem:[%s7 + $0x4c] sm:$0xf]
        %v3774 = vld [vmem:[%s7 + $0x50] sm:$0xf]
        %v3775 = vld [vmem:[%s7 + $0x54] sm:$0xf]
        %v3776 = vld [vmem:[%s7 + $0x58] sm:$0xf]
        %v3777 = vld [vmem:[%s7 + $0x5c] sm:$0xf]
        %v3778 = vld [vmem:[%s7 + $0x60] sm:$0xf]
        %v3779 = vld [vmem:[%s7 + $0x64] sm:$0xf]
        %v3780 = vld [vmem:[%s7 + $0x68] sm:$0xf]
        %v3781 = vld [vmem:[%s7 + $0x6c] sm:$0xf]
        %v3782 = vld [vmem:[%s7 + $0x70] sm:$0xf]
        %v3783 = vld [vmem:[%s7 + $0x74] sm:$0xf]
        %v3784 = vld [vmem:[%s7 + $0x78] sm:$0xf]
        %v3785 = vld [vmem:[%s7 + $0x7c] sm:$0xf]
        %v3786 = vld [vmem:[%s7 + $0x80] sm:$0xf]
        %v3787 = vld [vmem:[%s7 + $0x84] sm:$0xf]
        %v3788 = vld [vmem:[%s7 + $0x88] sm:$0xf]
        %v3789 = vld [vmem:[%s7 + $0x8c] sm:$0xf]
        %v3790 = vld [vmem:[%s7 + $0x90] sm:$0xf]
        %v3791 = vld [vmem:[%s7 + $0x94] sm:$0xf]
        %v3792 = vld [vmem:[%s7 + $0x98] sm:$0xf]
        %v3793 = vld [vmem:[%s7 + $0x9c] sm:$0xf]
        %v3794 = vld [vmem:[%s7 + $0xa0] sm:$0xf]
        %v3795 = vld [vmem:[%s7 + $0xa4] sm:$0xf]
        %v3796 = vld [vmem:[%s7 + $0xa8] sm:$0xf]
        %v3797 = vld [vmem:[%s7 + $0xac] sm:$0xf]
        %v3798 = vld [vmem:[%s7 + $0xb0] sm:$0xf]
        %v3799 = vld [vmem:[%s7 + $0xb4] sm:$0xf]
        %v3800 = vld [vmem:[%s7 + $0xb8] sm:$0xf]
        %v3801 = vld [vmem:[%s7 + $0xbc] sm:$0xf]
        %v3802 = vld [vmem:[%s7 + $0xc0] sm:$0xf]
        %v3803 = vld [vmem:[%s7 + $0xc4] sm:$0xf]
        %v3804 = vld [vmem:[%s7 + $0xc8] sm:$0xf]
        %v3805 = vld [vmem:[%s7 + $0xcc] sm:$0xf]
        %v3806 = vld [vmem:[%s7 + $0xd0] sm:$0xf]
        %v3807 = vld [vmem:[%s7 + $0xd4] sm:$0xf]
        %v3808 = vld [vmem:[%s7 + $0xd8] sm:$0xf]
        %v3809 = vld [vmem:[%s7 + $0xdc] sm:$0xf]
        %v3810 = vld [vmem:[%s7 + $0xe0] sm:$0xf]
        %v3811 = vld [vmem:[%s7 + $0xe4] sm:$0xf]
        %v3812 = vld [vmem:[%s7 + $0xe8] sm:$0xf]
        %v3813 = vld [vmem:[%s7 + $0xec] sm:$0xf]
        %v3814 = vld [vmem:[%s7 + $0xf0] sm:$0xf]
        %v3815 = vld [vmem:[%s7 + $0xf4] sm:$0xf]
        %v3816 = vld [vmem:[%s7 + $0xf8] sm:$0xf]
        %v3817 = vld [vmem:[%s7 + $0xfc] sm:$0xf]
        %v3819 = vlaneseq
        %v3820 = vshrl.u32 %v3819, 7
        %v3821 = vsub.s32 0, %v3820
        %v3822 = vrot.slane %v3753, %v3821
        %v3823 = vlaneseq
        %v3824 = vshrl.u32 %v3823, 7
        %v3825 = vsub.s32 1, %v3824
        %v3826 = vrot.slane %v3753, %v3825
        %v3827 = vlaneseq
        %v3828 = vshrl.u32 %v3827, 7
        %v3829 = vsub.s32 2, %v3828
        %v3830 = vrot.slane %v3753, %v3829
        %v3831 = vlaneseq
        %v3832 = vshrl.u32 %v3831, 7
        %v3833 = vsub.s32 3, %v3832
        %v3834 = vrot.slane %v3753, %v3833
        %v3839 = vpack.c.bf16 %v3822, %v3822
        %v3840 = vpack.c.bf16 %v3826, %v3826
        %v3841 = vpack.c.bf16 %v3830, %v3830
        %v3842 = vpack.c.bf16 %v3834, %v3834
        %v3843 = vld [vmem:[%s8] sm:$0x1]
        %v3908 = vunpack.c.l.b16 %v3754
        %v3909 = vunpack.c.l.b16 %v3755
        %v3910 = vunpack.c.l.b16 %v3756
        %v3911 = vunpack.c.l.b16 %v3757
        %v3912 = vunpack.c.l.b16 %v3758
        %v3913 = vunpack.c.l.b16 %v3759
        %v3914 = vunpack.c.l.b16 %v3760
        %v3915 = vunpack.c.l.b16 %v3761
        %v3916 = vunpack.c.l.b16 %v3762
        %v3917 = vunpack.c.l.b16 %v3763
        %v3918 = vunpack.c.l.b16 %v3764
        %v3919 = vunpack.c.l.b16 %v3765
        %v3920 = vunpack.c.l.b16 %v3766
        %v3921 = vunpack.c.l.b16 %v3767
        %v3922 = vunpack.c.l.b16 %v3768
        %v3923 = vunpack.c.l.b16 %v3769
        %v3924 = vunpack.c.l.b16 %v3770
        %v3925 = vunpack.c.l.b16 %v3771
        %v3926 = vunpack.c.l.b16 %v3772
        %v3927 = vunpack.c.l.b16 %v3773
        %v3928 = vunpack.c.l.b16 %v3774
        %v3929 = vunpack.c.l.b16 %v3775
        %v3930 = vunpack.c.l.b16 %v3776
        %v3931 = vunpack.c.l.b16 %v3777
        %v3932 = vunpack.c.l.b16 %v3778
        %v3933 = vunpack.c.l.b16 %v3779
        %v3934 = vunpack.c.l.b16 %v3780
        %v3935 = vunpack.c.l.b16 %v3781
        %v3936 = vunpack.c.l.b16 %v3782
        %v3937 = vunpack.c.l.b16 %v3783
        %v3938 = vunpack.c.l.b16 %v3784
        %v3939 = vunpack.c.l.b16 %v3785
        %v3940 = vunpack.c.l.b16 %v3786
        %v3941 = vunpack.c.l.b16 %v3787
        %v3942 = vunpack.c.l.b16 %v3788
        %v3943 = vunpack.c.l.b16 %v3789
        %v3944 = vunpack.c.l.b16 %v3790
        %v3945 = vunpack.c.l.b16 %v3791
        %v3946 = vunpack.c.l.b16 %v3792
        %v3947 = vunpack.c.l.b16 %v3793
        %v3948 = vunpack.c.l.b16 %v3794
        %v3949 = vunpack.c.l.b16 %v3795
        %v3950 = vunpack.c.l.b16 %v3796
        %v3951 = vunpack.c.l.b16 %v3797
        %v3952 = vunpack.c.l.b16 %v3798
        %v3953 = vunpack.c.l.b16 %v3799
        %v3954 = vunpack.c.l.b16 %v3800
        %v3955 = vunpack.c.l.b16 %v3801
        %v3956 = vunpack.c.l.b16 %v3802
        %v3957 = vunpack.c.l.b16 %v3803
        %v3958 = vunpack.c.l.b16 %v3804
        %v3959 = vunpack.c.l.b16 %v3805
        %v3960 = vunpack.c.l.b16 %v3806
        %v3961 = vunpack.c.l.b16 %v3807
        %v3962 = vunpack.c.l.b16 %v3808
        %v3963 = vunpack.c.l.b16 %v3809
        %v3964 = vunpack.c.l.b16 %v3810
        %v3965 = vunpack.c.l.b16 %v3811
        %v3966 = vunpack.c.l.b16 %v3812
        %v3967 = vunpack.c.l.b16 %v3813
        %v3968 = vunpack.c.l.b16 %v3814
        %v3969 = vunpack.c.l.b16 %v3815
        %v3970 = vunpack.c.l.b16 %v3816
        %v3971 = vunpack.c.l.b16 %v3817
        %v3972 = vpack.c.b16 %v3909, %v3908
        %v3973 = vpack.c.b16 %v3911, %v3910
        %v3974 = vpack.c.b16 %v3913, %v3912
        %v3975 = vpack.c.b16 %v3915, %v3914
        %v3976 = vpack.c.b16 %v3917, %v3916
        %v3977 = vpack.c.b16 %v3919, %v3918
        %v3978 = vpack.c.b16 %v3921, %v3920
        %v3979 = vpack.c.b16 %v3923, %v3922
        %v3980 = vpack.c.b16 %v3925, %v3924
        %v3981 = vpack.c.b16 %v3927, %v3926
        %v3982 = vpack.c.b16 %v3929, %v3928
        %v3983 = vpack.c.b16 %v3931, %v3930
        %v3984 = vpack.c.b16 %v3933, %v3932
        %v3985 = vpack.c.b16 %v3935, %v3934
        %v3986 = vpack.c.b16 %v3937, %v3936
        %v3987 = vpack.c.b16 %v3939, %v3938
        %v3988 = vpack.c.b16 %v3941, %v3940
        %v3989 = vpack.c.b16 %v3943, %v3942
        %v3990 = vpack.c.b16 %v3945, %v3944
        %v3991 = vpack.c.b16 %v3947, %v3946
        %v3992 = vpack.c.b16 %v3949, %v3948
        %v3993 = vpack.c.b16 %v3951, %v3950
        %v3994 = vpack.c.b16 %v3953, %v3952
        %v3995 = vpack.c.b16 %v3955, %v3954
        %v3996 = vpack.c.b16 %v3957, %v3956
        %v3997 = vpack.c.b16 %v3959, %v3958
        %v3998 = vpack.c.b16 %v3961, %v3960
        %v3999 = vpack.c.b16 %v3963, %v3962
        %v4000 = vpack.c.b16 %v3965, %v3964
        %v4001 = vpack.c.b16 %v3967, %v3966
        %v4002 = vpack.c.b16 %v3969, %v3968
        %v4003 = vpack.c.b16 %v3971, %v3970
        %4036 = vmatprep.subr.bf16.mxu0 0
        %4037 = vmatpush1.bf16.msra.mxu0 %v3979
        %4038 = vmatprep.subr.bf16.mxu0 0
        %4039 = vmatpush1.bf16.msra.mxu0 %v3978
        %4040 = vmatprep.subr.bf16.mxu0 0
        %4041 = vmatpush1.bf16.msra.mxu0 %v3977
        %4042 = vmatprep.subr.bf16.mxu0 0
        %4043 = vmatpush1.bf16.msra.mxu0 %v3976
        %4044 = vmatprep.subr.bf16.mxu0 0
        %4045 = vmatpush1.bf16.msra.mxu0 %v3975
        %4046 = vmatprep.subr.bf16.mxu0 0
        %4047 = vmatpush1.bf16.msra.mxu0 %v3974
        %4048 = vmatprep.subr.bf16.mxu0 0
        %4049 = vmatpush1.bf16.msra.mxu0 %v3973
        %4050 = vmatprep.subr.bf16.mxu0 0
        %4051 = vmatpush1.bf16.msra.mxu0 %v3972
        %4052 = vmatprep.subr.bf16.mxu0 0
        %4053 = vmatpush2.bf16.msra.mxu0 %v3987
        %4054 = vmatprep.subr.bf16.mxu0 0
        %4055 = vmatpush2.bf16.msra.mxu0 %v3986
        %4056 = vmatprep.subr.bf16.mxu0 0
        %4057 = vmatpush2.bf16.msra.mxu0 %v3985
        %4058 = vmatprep.subr.bf16.mxu0 0
        %4059 = vmatpush2.bf16.msra.mxu0 %v3984
        %4060 = vmatprep.subr.bf16.mxu0 0
        %4061 = vmatpush2.bf16.msra.mxu0 %v3983
        %4062 = vmatprep.subr.bf16.mxu0 0
        %4063 = vmatpush2.bf16.msra.mxu0 %v3982
        %4064 = vmatprep.subr.bf16.mxu0 0
        %4065 = vmatpush2.bf16.msra.mxu0 %v3981
        %4066 = vmatprep.subr.bf16.mxu0 0
        %4067 = vmatpush2.bf16.msra.mxu0 %v3980
        %4068 = vmatprep.mubr.bf16.mxu0 %v3840
        %4069 = vmatmul.mubr.bf16.gmra.mxu0 %v3839
        %v4070 = vpop.f32.mrf.mxu0
        %v4071 = vadd.f32 %v3843, %v4070
        %v4072 = vpop.f32.mrf.mxu0
        %v4073 = vpop.f32.mrf.mxu0
        %v4074 = vpop.f32.mrf.mxu0
        %4075 = vdwg.mxu0
        %4076 = vmatprep.subr.bf16.mxu0 0
        %4077 = vmatpush1.bf16.msra.mxu0 %v3995
        %4078 = vmatprep.subr.bf16.mxu0 0
        %4079 = vmatpush1.bf16.msra.mxu0 %v3994
        %4080 = vmatprep.subr.bf16.mxu0 0
        %4081 = vmatpush1.bf16.msra.mxu0 %v3993
        %4082 = vmatprep.subr.bf16.mxu0 0
        %4083 = vmatpush1.bf16.msra.mxu0 %v3992
        %4084 = vmatprep.subr.bf16.mxu0 0
        %4085 = vmatpush1.bf16.msra.mxu0 %v3991
        %4086 = vmatprep.subr.bf16.mxu0 0
        %4087 = vmatpush1.bf16.msra.mxu0 %v3990
        %4088 = vmatprep.subr.bf16.mxu0 0
        %4089 = vmatpush1.bf16.msra.mxu0 %v3989
        %4090 = vmatprep.subr.bf16.mxu0 0
        %4091 = vmatpush1.bf16.msra.mxu0 %v3988
        %4092 = vmatprep.subr.bf16.mxu0 0
        %4093 = vmatpush2.bf16.msra.mxu0 %v4003
        %4094 = vmatprep.subr.bf16.mxu0 0
        %4095 = vmatpush2.bf16.msra.mxu0 %v4002
        %4096 = vmatprep.subr.bf16.mxu0 0
        %4097 = vmatpush2.bf16.msra.mxu0 %v4001
        %4098 = vmatprep.subr.bf16.mxu0 0
        %4099 = vmatpush2.bf16.msra.mxu0 %v4000
        %4100 = vmatprep.subr.bf16.mxu0 0
        %4101 = vmatpush2.bf16.msra.mxu0 %v3999
        %4102 = vmatprep.subr.bf16.mxu0 0
        %4103 = vmatpush2.bf16.msra.mxu0 %v3998
        %4104 = vmatprep.subr.bf16.mxu0 0
        %4105 = vmatpush2.bf16.msra.mxu0 %v3997
        %4106 = vmatprep.subr.bf16.mxu0 0
        %4107 = vmatpush2.bf16.msra.mxu0 %v3996
        %4108 = vmatprep.mubr.bf16.mxu0 %v3842
        %4109 = vmatmul.mubr.bf16.gmra.mxu0 %v3841
        %v4110 = vpop.f32.mrf.mxu0
        %v4111 = vadd.f32 %v4071, %v4110
        %v4112 = vpop.f32.mrf.mxu0
        %v4113 = vpop.f32.mrf.mxu0
        %v4114 = vpop.f32.mrf.mxu0
        %4115 = vdwg.mxu0
        %vm4116 = vcmp.ge.f32.partialorder %v4111, 0.0
        %v4117 = vmul.f32 %v572, %v4111
        %v4118 = vsel %vm4116, %v4111, %v4117
        %v4119 = vld [vmem:[%s9] sm:$0xf]
        %v4120 = vld [vmem:[%s9 + $0x4] sm:$0xf]
        %v4121 = vld [vmem:[%s9 + $0x8] sm:$0xf]
        %v4122 = vld [vmem:[%s9 + $0xc] sm:$0xf]
        %v4123 = vld [vmem:[%s9 + $0x10] sm:$0xf]
        %v4124 = vld [vmem:[%s9 + $0x14] sm:$0xf]
        %v4125 = vld [vmem:[%s9 + $0x18] sm:$0xf]
        %v4126 = vld [vmem:[%s9 + $0x1c] sm:$0xf]
        %v4127 = vld [vmem:[%s9 + $0x20] sm:$0xf]
        %v4128 = vld [vmem:[%s9 + $0x24] sm:$0xf]
        %v4129 = vld [vmem:[%s9 + $0x28] sm:$0xf]
        %v4130 = vld [vmem:[%s9 + $0x2c] sm:$0xf]
        %v4131 = vld [vmem:[%s9 + $0x30] sm:$0xf]
        %v4132 = vld [vmem:[%s9 + $0x34] sm:$0xf]
        %v4133 = vld [vmem:[%s9 + $0x38] sm:$0xf]
        %v4134 = vld [vmem:[%s9 + $0x3c] sm:$0xf]
        %v4135 = vpack.c.bf16 %v4118, %v4118
        %v4136 = vld [vmem:[%s10] sm:$0x1]
        %v4153 = vunpack.c.l.b16 %v4119
        %v4154 = vunpack.c.l.b16 %v4120
        %v4155 = vunpack.c.l.b16 %v4121
        %v4156 = vunpack.c.l.b16 %v4122
        %v4157 = vunpack.c.l.b16 %v4123
        %v4158 = vunpack.c.l.b16 %v4124
        %v4159 = vunpack.c.l.b16 %v4125
        %v4160 = vunpack.c.l.b16 %v4126
        %v4161 = vunpack.c.l.b16 %v4127
        %v4162 = vunpack.c.l.b16 %v4128
        %v4163 = vunpack.c.l.b16 %v4129
        %v4164 = vunpack.c.l.b16 %v4130
        %v4165 = vunpack.c.l.b16 %v4131
        %v4166 = vunpack.c.l.b16 %v4132
        %v4167 = vunpack.c.l.b16 %v4133
        %v4168 = vunpack.c.l.b16 %v4134
        %v4169 = vpack.c.b16 %v4154, %v4153
        %v4170 = vpack.c.b16 %v4156, %v4155
        %v4171 = vpack.c.b16 %v4158, %v4157
        %v4172 = vpack.c.b16 %v4160, %v4159
        %v4173 = vpack.c.b16 %v4162, %v4161
        %v4174 = vpack.c.b16 %v4164, %v4163
        %v4175 = vpack.c.b16 %v4166, %v4165
        %v4176 = vpack.c.b16 %v4168, %v4167
        %4185 = vmatprep.subr.bf16.mxu0 0
        %4186 = vmatpush1.bf16.msra.mxu0 %v4176
        %4187 = vmatprep.subr.bf16.mxu0 0
        %4188 = vmatpush1.bf16.msra.mxu0 %v4175
        %4189 = vmatprep.subr.bf16.mxu0 0
        %4190 = vmatpush1.bf16.msra.mxu0 %v4174
        %4191 = vmatprep.subr.bf16.mxu0 0
        %4192 = vmatpush1.bf16.msra.mxu0 %v4173
        %4193 = vmatprep.subr.bf16.mxu0 0
        %4194 = vmatpush1.bf16.msra.mxu0 %v4172
        %4195 = vmatprep.subr.bf16.mxu0 0
        %4196 = vmatpush1.bf16.msra.mxu0 %v4171
        %4197 = vmatprep.subr.bf16.mxu0 0
        %4198 = vmatpush1.bf16.msra.mxu0 %v4170
        %4199 = vmatprep.subr.bf16.mxu0 0
        %4200 = vmatpush1.bf16.msra.mxu0 %v4169
        %4201 = vmatprep.subr.bf16.mxu0 0
        %4202 = vmatpush2.bf16.msra.mxu0 0
        %4203 = vmatprep.subr.bf16.mxu0 0
        %4204 = vmatpush2.bf16.msra.mxu0 0
        %4205 = vmatprep.subr.bf16.mxu0 0
        %4206 = vmatpush2.bf16.msra.mxu0 0
        %4207 = vmatprep.subr.bf16.mxu0 0
        %4208 = vmatpush2.bf16.msra.mxu0 0
        %4209 = vmatprep.subr.bf16.mxu0 0
        %4210 = vmatpush2.bf16.msra.mxu0 0
        %4211 = vmatprep.subr.bf16.mxu0 0
        %4212 = vmatpush2.bf16.msra.mxu0 0
        %4213 = vmatprep.subr.bf16.mxu0 0
        %4214 = vmatpush2.bf16.msra.mxu0 0
        %4215 = vmatprep.subr.bf16.mxu0 0
        %4216 = vmatpush2.bf16.msra.mxu0 0
        %4217 = vmatprep.mubr.bf16.mxu0 0
        %4218 = vmatmul.mubr.bf16.gmra.mxu0 %v4135
        %v4219 = vpop.f32.mrf.mxu0
        %v4220 = vadd.f32 %v4136, %v4219
        %v4221 = vpop.f32.mrf.mxu0
        %v4222 = vpop.f32.mrf.mxu0
        %v4223 = vpop.f32.mrf.mxu0
        %4224 = vdwg.mxu0
        %vm4225 = vcmp.ge.f32.partialorder %v4220, 0.0
        %v4226 = vmul.f32 %v572, %v4220
        %v4227 = vsel %vm4225, %v4220, %v4226
        %vm4228 = vcmask 49152
        %v4229 = vsel %vm4228, %v4227, -inf
        %4230 = vmax.xlane.f32.xlu0 %v4229
        %v4231 = vpop.xlane.xlu0 %4230
        %v4232 = vsub.f32 %v4227, %v4231
        %v4233 = vmul.f32 %v4232, 1.442695
        %v4234 = vpow.pop %v4233
        %v4235 = vsel %vm4228, %v4234, 0.0
        %4236 = vadd.xlane.f32.xlu0 %v4235
        %v4237 = vpop.xlane.xlu0 %4236
        %v4238 = vrcp.pop %v4237
        %v4239 = vmul.f32 %v4234, %v4238
        %4240 = vst.msk [vmem:[%s421] sm:$0x1] %vm4228, %v4239
        %s4241 = sand.u32 %s293, 1
        %s4242 = scalar_lea.sflag [#allocation7], %s4241
        %s4243 = sand.u32 %s293, 1
        %s4244 = scalar_lea.vmem [#allocation8], %s4243
        // Predicated region
        $region73: #{forward.1} parent=67 // pred_check
          %p4245 = pneg %p303
        $region74: #{forward.1} parent=67 // pred_check_branch
          %4247 = sbr.rel (%p4245) target = $region76
        $region75: #{forward.1} parent=67 // pred_region
          %s4249 = ssub.s32 16, 16
          %4250 = vsyncadd %s4242, %s4249
          %s4251 = smul.addr %s28, 16
          %s4252 = scalar_lea.hbm %s12, %s4251
          %s4254 = sshll.u32 %s4244, 4
          %s4255 = int_to_ptr.vmem [resolvable:$true] %s4254
          %4257 = dma.vmem_to_hbm [thread:$0]  %s4255, 16, %s4252, %s4242
        $region76: #{forward.1} parent=67 // pred_fallthru
          _
      $region68: #{forward.1} parent=5 // pred_fallthru
        _
      %p4258 = scmp.le.s32.totalorder 2, %s23
      // Predicated region
      $region77: #{forward.1} parent=5 // pred_check
        %p4259 = pneg %p4258
      $region78: #{forward.1} parent=5 // pred_check_branch
        %4261 = sbr.rel (%p4259) target = $region80
      $region79: #{forward.1} parent=5 // pred_region
        %s4262 = ssub.s32 %s23, 2
        // Predicated region
        $region81: #{forward.1} parent=79 // pred_check
          %p4263 = pneg %p309
        $region82: #{forward.1} parent=79 // pred_check_branch
          %4265 = sbr.rel (%p4263) target = $region84
        $region83: #{forward.1} parent=79 // pred_region
          %s4266 = sand.u32 %s294, 1
          %s4267 = scalar_lea.sflag [#allocation7], %s4266
          %s4268 = sand.u32 %s294, 1
          %s4269 = scalar_lea.vmem [#allocation8], %s4268
          %4270 = dma.done %s4267, 16
        $region84: #{forward.1} parent=79 // pred_fallthru
          _
      $region80: #{forward.1} parent=5 // pred_fallthru
        _
    $region6: #{forward.1} parent=1 // loop_footer
      %s27 = sadd.s32 1, %s23
    $region7: #{forward.1} parent=1 // loop_footer_branch
      %22 = sbr.rel target = $region3
    $region8: #{forward.1} parent=1 // loop_exit
      _
    %4271 = vsyncpa [#allocation6], 1
    %s4272 = scalar_lea.sflag [#allocation6], 1
    %4273 = vsyncpa %s4272, 1
    %4274 = vsyncpa [#allocation7], 1
    %s4275 = scalar_lea.sflag [#allocation7], 1
    %4276 = vsyncpa %s4275, 1

</llo_original>
